<compile_context>
chip_gen: v6e
topology: v6e:2x2x1
jax: 0.10.0
libtpu: 0.0.40
codegen_flags: <defaults>
</compile_context>

<pallas_src>
import jax
import jax.numpy as jnp
from jax.experimental import pallas as pl
from jax.experimental.pallas import tpu as pltpu

SPIN = 4
COLOR = 3


# -----------------------------------------------------------------------------
# Tile selection: big lane tiles (pipelining efficiency + wide unmasked stores),
# VMEM-budgeted for v7x (64 MiB), vreg-pressure-budgeted (64 x 4 KiB vregs),
# and grid >= 2 when possible so both v7x TensorCores / megacore get work.
# -----------------------------------------------------------------------------
def _choose_tile_v(V, rows_total, n_feature_out, max_tile=1024):
    # VMEM per tile ~= rows_total * tile * 4B * 2(re+im arrays) * 2(double buffer)
    vmem_budget = 40 * 1024 * 1024  # safe under v7x's 64 MiB physical VMEM
    max_by_vmem = vmem_budget // max(1, rows_total * 4 * 2 * 2)
    # vreg pressure (colour-outer loop): live rows ~= acc(2*FO*4) + w slabs(2*FO*4) + t(2) + slack
    live_rows = 4 * n_feature_out * SPIN + 4
    max_by_vreg = (48 * 1024) // max(1, live_rows)   # use <=48 of 64 vregs (f32: 1024 elem/vreg)
    cap = min(max_tile, max_by_vmem, max_by_vreg)
    cap = max(128, (cap // 128) * 128)
    cands = [t for t in range(cap, 127, -128) if V % t == 0]
    if not cands:
        return V  # tiny / odd lattice: one full-width block (full-dim block is legal)
    for t in cands:
        if V // t >= 2:  # keep >= 2 grid points for megacore ("parallel" axis)
            return t
    return cands[0]


# -----------------------------------------------------------------------------
# Pallas kernel
# -----------------------------------------------------------------------------
def _make_lptc_kernel(G, FO):
    """G = FI * P (combined input-feature x path index), FO = output features."""
    WB = FO * SPIN  # rows per (sp, g) weight slab == rows per colour block of the output

    def kernel(wr_ref, wi_ref, tr_ref, ti_ref, or_ref, oi_ref):
        tile_v = or_ref.shape[-1]
        for c in range(COLOR):
            # one colour's accumulator lives in vregs; written once at the end
            acc_re = jnp.zeros((WB, tile_v), jnp.float32)
            acc_im = jnp.zeros((WB, tile_v), jnp.float32)
            for g in range(G):
                for sp in range(SPIN):
                    w_row = (sp * G + g) * WB
                    t_row = g * (SPIN * COLOR) + sp * COLOR + c
                    # per-step ref slices (static starts; no full-block value load)
                    w_re = wr_ref[pl.ds(w_row, WB), :].astype(jnp.float32)  # (FO*4, tile_v)
                    w_im = wi_ref[pl.ds(w_row, WB), :].astype(jnp.float32)
                    t_re = tr_ref[pl.ds(t_row, 1), :].astype(jnp.float32)   # (1, tile_v)
                    t_im = ti_ref[pl.ds(t_row, 1), :].astype(jnp.float32)
                    # complex MAC, accumulate in place (no 5-D intermediate)
                    acc_re = acc_re + (w_re * t_re - w_im * t_im)
                    acc_im = acc_im + (w_re * t_im + w_im * t_re)
            # lane-dense, sublane-aligned (WB is a multiple of 8 when FO is even; full
            # block otherwise) unmasked stores
            or_ref[pl.ds(c * WB, WB), :] = acc_re
            oi_ref[pl.ds(c * WB, WB), :] = acc_im

    return kernel


def lptc_pallas(wr, wi, tr, ti, n_feature_out, *, max_tile=1024):
    """wr/wi: [4*G*FO*4, V]; tr/ti: [G*12, V] -> (out_re, out_im): [3*FO*4, V] f32."""
    w_rows, V = wr.shape
    t_rows, Vt = tr.shape
    assert V == Vt
    FO = n_feature_out
    G = t_rows // (SPIN * COLOR)
    o_rows = COLOR * FO * SPIN
    assert w_rows == SPIN * G * FO * SPIN, (w_rows, G, FO)

    rows_total = w_rows + t_rows + o_rows
    tile_v = _choose_tile_v(V, rows_total, FO, max_tile=max_tile)
    grid = (V // tile_v,)

    needed = rows_total * 2 * 4 * tile_v * 2  # re+im, double-buffered
    vmem_limit = int(min(max(needed + (8 << 20), 32 << 20), 56 << 20))

    kernel = _make_lptc_kernel(G, FO)

    w_spec = pl.BlockSpec((w_rows, tile_v), lambda i: (0, i))
    t_spec = pl.BlockSpec((t_rows, tile_v), lambda i: (0, i))
    o_spec = pl.BlockSpec((o_rows, tile_v), lambda i: (0, i))

    return pl.pallas_call(
        kernel,
        out_shape=(jax.ShapeDtypeStruct((o_rows, V), jnp.float32),
                   jax.ShapeDtypeStruct((o_rows, V), jnp.float32)),
        grid=grid,
        in_specs=[w_spec, w_spec, t_spec, t_spec],
        out_specs=(o_spec, o_spec),
        compiler_params=pltpu.CompilerParams(
            dimension_semantics=("parallel",),
            vmem_limit_bytes=vmem_limit),
    )(wr, wi, tr, ti)


# -----------------------------------------------------------------------------
# Weight repack: do this ONCE at parameter-load time (weights are parameters;
# the V-to-lanes transpose of the largest tensor should not be paid every forward).
# -----------------------------------------------------------------------------
def prepare_lptc_weights(weights, stream_dtype=jnp.float32):
    """weights: [FI, FO, P, X, Y, Z, T, 4, 4] complex -> (wr, wi): [4*FI*P*FO*4, V]."""
    FI, FO, P = weights.shape[:3]
    X, Y, Z, T = weights.shape[3:7]
    V = X * Y * Z * T
    wk = weights.reshape(FI, FO, P, V, SPIN, SPIN)          # (fi, fo, p, V, s, sp)
    wk = wk.transpose(5, 0, 2, 1, 4, 3)                      # (sp, fi, p, fo, s, V)
    wk = wk.reshape(SPIN * FI * P * FO * SPIN, V)
    return (jnp.real(wk).astype(stream_dtype), jnp.imag(wk).astype(stream_dtype))


# -----------------------------------------------------------------------------
# PathBuffer-equivalent glue (gauge-covariant transport) in plain JAX
# -----------------------------------------------------------------------------
def v_hop(U, mu, sign, v):
    """One gauge-covariant hop of v: [X,Y,Z,T,4,3]; U: [4,X,Y,Z,T,3,3]."""
    if sign > 0:
        v_sh = jnp.roll(v, -1, axis=mu)
        return jnp.einsum('...ab,...sb->...sa', U[mu], v_sh)
    else:
        U_sh = jnp.roll(U[mu], 1, axis=mu)
        v_sh = jnp.roll(v, 1, axis=mu)
        return jnp.einsum('...ba,...sb->...sa', jnp.conj(U_sh), v_sh)


def path_transport(U, path, v):
    """PathBuffer(U, path).v_transport(v). Empty path = identity."""
    for mu, nhops in path:
        sign = 1 if nhops > 0 else -1
        for _ in range(abs(nhops)):
            v = v_hop(U, mu, sign, v)
    return v


# -----------------------------------------------------------------------------
# v_LPTC forward
# -----------------------------------------------------------------------------
def v_lptc_forward(weights, U, paths, features_in, prepared=None,
                   stream_dtype=jnp.float32):
    """
    weights:     [FI, FO, P, X, Y, Z, T, 4, 4] complex64
    U:           [4, X, Y, Z, T, 3, 3]          complex64
    features_in: [FI, X, Y, Z, T, 4, 3]         complex64
    returns:     [FO, X, Y, Z, T, 4, 3]         complex64
    """
    FI, FO, P = weights.shape[:3]
    X, Y, Z, T = features_in.shape[1:5]
    V = X * Y * Z * T

    if features_in.shape[0] != FI:
        raise ValueError(f"shape mismatch: got {features_in.shape[0]} but expected {FI}")

    if prepared is None:
        prepared = prepare_lptc_weights(weights, stream_dtype)
    wr, wi = prepared

    # PathBuffer transport for every (input feature, path) pair (JAX glue).
    transported = jnp.stack([
        jnp.stack([path_transport(U, path, features_in[fi]) for path in paths])
        for fi in range(FI)
    ])  # [FI, P, X, Y, Z, T, 4, 3]

    # Repack activations to the kernel layout: rows = (g=(fi,p), sp, c), lanes = sites.
    tk = transported.reshape(FI * P, V, SPIN, COLOR).transpose(0, 2, 3, 1)
    tk = tk.reshape(FI * P * SPIN * COLOR, V)
    tr = jnp.real(tk).astype(stream_dtype)
    ti = jnp.imag(tk).astype(stream_dtype)

    out_re, out_im = lptc_pallas(wr, wi, tr, ti, FO)

    out = jax.lax.complex(out_re, out_im)                        # [3*FO*4, V], rows = (c, fo, s)
    out = out.reshape(COLOR, FO, SPIN, V).transpose(1, 3, 2, 0)  # [FO, V, s, c]
    return out.reshape(FO, X, Y, Z, T, SPIN, COLOR)


# -----------------------------------------------------------------------------
# Pure-JAX reference (mirrors the torch forward loop structure)
# -----------------------------------------------------------------------------
def v_lptc_reference(weights, U, paths, features_in):
    FI, FO, P = weights.shape[:3]
    out = jnp.zeros((FO,) + features_in.shape[1:], dtype=features_in.dtype)
    for fi in range(FI):
        for fo in range(FO):
            for p, path in enumerate(paths):
                t = path_transport(U, path, features_in[fi])
                out = out.at[fo].add(jnp.einsum('...ij,...jc->...ic', weights[fi, fo, p], t))
    return out


if __name__ == "__main__":
    key = jax.random.PRNGKey(0)

    # Small shapes consistent with the module
    FI, FO = 2, 2
    X, Y, Z, T = 4, 4, 4, 4            # lattice -> V = 256 sites
    paths = [[], [(0, 1)], [(1, -1)]]  # identity path, +x hop, -y hop
    P = len(paths)

    ks = jax.random.split(key, 6)

    def crandn(k1, k2, shape):
        return (jax.random.normal(k1, shape, dtype=jnp.float32)
                + 1j * jax.random.normal(k2, shape, dtype=jnp.float32)).astype(jnp.complex64)

    # Gauge field U: 4 directions of per-site 3x3 matrices
    U = crandn(ks[0], ks[1], (4, X, Y, Z, T, 3, 3))
    # Weights: [feature_in, feature_out, path, X, Y, Z, T, 4, 4]
    weights = crandn(ks[2], ks[3], (FI, FO, P, X, Y, Z, T, 4, 4))
    # Input features: [feature_in, X, Y, Z, T, 4(spin), 3(color)]
    features_in = crandn(ks[4], ks[5], (FI, X, Y, Z, T, 4, 3))

    # Weight repack done once (parameter-load time), reused by forward.
    prepared = prepare_lptc_weights(weights)

    out = v_lptc_forward(weights, U, paths, features_in, prepared=prepared)
    out = jax.block_until_ready(out)

    ref = jax.block_until_ready(v_lptc_reference(weights, U, paths, features_in))

    assert out.shape == (FO, X, Y, Z, T, 4, 3), out.shape
    assert jnp.allclose(out, ref, rtol=2e-3, atol=2e-3), float(jnp.max(jnp.abs(out - ref)))

    print("KERNEL_OK")
</pallas_src>

<mosaic_0001>
module attributes {stable_mosaic.version = 11 : i64} {
  func.func @kernel(%arg0: i32, %arg1: memref<192x128xf32, #tpu.memory_space<vmem>>, %arg2: memref<192x128xf32, #tpu.memory_space<vmem>>, %arg3: memref<72x128xf32, #tpu.memory_space<vmem>>, %arg4: memref<72x128xf32, #tpu.memory_space<vmem>>, %arg5: memref<24x128xf32, #tpu.memory_space<vmem>>, %arg6: memref<24x128xf32, #tpu.memory_space<vmem>>) attributes {dimension_semantics = [#tpu.dimension_semantics<parallel>], iteration_bounds = array<i64: 2>, scalar_prefetch = 0 : i64, scratch_operands = 0 : i64, tpu.core_type = #tpu.core_type<tc>, window_params = [{transform_indices = @transform_0, window_bounds = array<i64: 192, 128>}, {transform_indices = @transform_1, window_bounds = array<i64: 192, 128>}, {transform_indices = @transform_2, window_bounds = array<i64: 72, 128>}, {transform_indices = @transform_3, window_bounds = array<i64: 72, 128>}, {transform_indices = @transform_4, window_bounds = array<i64: 24, 128>}, {transform_indices = @transform_5, window_bounds = array<i64: 24, 128>}]} {
    %cst = arith.constant 0.000000e+00 : f32
    %0 = vector.broadcast %cst : f32 to vector<8x128xf32>
    %cst_0 = arith.constant 0.000000e+00 : f32
    %1 = vector.broadcast %cst_0 : f32 to vector<8x128xf32>
    %c0 = arith.constant 0 : index
    %c0_1 = arith.constant 0 : index
    %2 = vector.load %arg1[%c0, %c0_1] : memref<192x128xf32, #tpu.memory_space<vmem>>, vector<8x128xf32>
    %c0_2 = arith.constant 0 : index
    %c0_3 = arith.constant 0 : index
    %3 = vector.load %arg2[%c0_2, %c0_3] : memref<192x128xf32, #tpu.memory_space<vmem>>, vector<8x128xf32>
    %c0_4 = arith.constant 0 : index
    %c0_5 = arith.constant 0 : index
    %4 = vector.load %arg3[%c0_4, %c0_5] : memref<72x128xf32, #tpu.memory_space<vmem>>, vector<1x128xf32>
    %c0_6 = arith.constant 0 : index
    %c0_7 = arith.constant 0 : index
    %5 = vector.load %arg4[%c0_6, %c0_7] : memref<72x128xf32, #tpu.memory_space<vmem>>, vector<1x128xf32>
    %6 = vector.broadcast %4 : vector<1x128xf32> to vector<8x128xf32>
    %7 = arith.mulf %2, %6 : vector<8x128xf32>
    %8 = vector.broadcast %5 : vector<1x128xf32> to vector<8x128xf32>
    %9 = arith.mulf %3, %8 : vector<8x128xf32>
    %10 = arith.subf %7, %9 : vector<8x128xf32>
    %11 = arith.addf %0, %10 : vector<8x128xf32>
    %12 = vector.broadcast %5 : vector<1x128xf32> to vector<8x128xf32>
    %13 = arith.mulf %2, %12 : vector<8x128xf32>
    %14 = vector.broadcast %4 : vector<1x128xf32> to vector<8x128xf32>
    %15 = arith.mulf %3, %14 : vector<8x128xf32>
    %16 = arith.addf %13, %15 : vector<8x128xf32>
    %17 = arith.addf %1, %16 : vector<8x128xf32>
    %c48 = arith.constant 48 : index
    %c0_8 = arith.constant 0 : index
    %18 = vector.load %arg1[%c48, %c0_8] : memref<192x128xf32, #tpu.memory_space<vmem>>, vector<8x128xf32>
    %c48_9 = arith.constant 48 : index
    %c0_10 = arith.constant 0 : index
    %19 = vector.load %arg2[%c48_9, %c0_10] : memref<192x128xf32, #tpu.memory_space<vmem>>, vector<8x128xf32>
    %c3 = arith.constant 3 : index
    %c0_11 = arith.constant 0 : index
    %20 = vector.load %arg3[%c3, %c0_11] : memref<72x128xf32, #tpu.memory_space<vmem>>, vector<1x128xf32>
    %c3_12 = arith.constant 3 : index
    %c0_13 = arith.constant 0 : index
    %21 = vector.load %arg4[%c3_12, %c0_13] : memref<72x128xf32, #tpu.memory_space<vmem>>, vector<1x128xf32>
    %22 = vector.broadcast %20 : vector<1x128xf32> to vector<8x128xf32>
    %23 = arith.mulf %18, %22 : vector<8x128xf32>
    %24 = vector.broadcast %21 : vector<1x128xf32> to vector<8x128xf32>
    %25 = arith.mulf %19, %24 : vector<8x128xf32>
    %26 = arith.subf %23, %25 : vector<8x128xf32>
    %27 = arith.addf %11, %26 : vector<8x128xf32>
    %28 = vector.broadcast %21 : vector<1x128xf32> to vector<8x128xf32>
    %29 = arith.mulf %18, %28 : vector<8x128xf32>
    %30 = vector.broadcast %20 : vector<1x128xf32> to vector<8x128xf32>
    %31 = arith.mulf %19, %30 : vector<8x128xf32>
    %32 = arith.addf %29, %31 : vector<8x128xf32>
    %33 = arith.addf %17, %32 : vector<8x128xf32>
    %c96 = arith.constant 96 : index
    %c0_14 = arith.constant 0 : index
    %34 = vector.load %arg1[%c96, %c0_14] : memref<192x128xf32, #tpu.memory_space<vmem>>, vector<8x128xf32>
    %c96_15 = arith.constant 96 : index
    %c0_16 = arith.constant 0 : index
    %35 = vector.load %arg2[%c96_15, %c0_16] : memref<192x128xf32, #tpu.memory_space<vmem>>, vector<8x128xf32>
    %c6 = arith.constant 6 : index
    %c0_17 = arith.constant 0 : index
    %36 = vector.load %arg3[%c6, %c0_17] : memref<72x128xf32, #tpu.memory_space<vmem>>, vector<1x128xf32>
    %c6_18 = arith.constant 6 : index
    %c0_19 = arith.constant 0 : index
    %37 = vector.load %arg4[%c6_18, %c0_19] : memref<72x128xf32, #tpu.memory_space<vmem>>, vector<1x128xf32>
    %38 = vector.broadcast %36 : vector<1x128xf32> to vector<8x128xf32>
    %39 = arith.mulf %34, %38 : vector<8x128xf32>
    %40 = vector.broadcast %37 : vector<1x128xf32> to vector<8x128xf32>
    %41 = arith.mulf %35, %40 : vector<8x128xf32>
    %42 = arith.subf %39, %41 : vector<8x128xf32>
    %43 = arith.addf %27, %42 : vector<8x128xf32>
    %44 = vector.broadcast %37 : vector<1x128xf32> to vector<8x128xf32>
    %45 = arith.mulf %34, %44 : vector<8x128xf32>
    %46 = vector.broadcast %36 : vector<1x128xf32> to vector<8x128xf32>
    %47 = arith.mulf %35, %46 : vector<8x128xf32>
    %48 = arith.addf %45, %47 : vector<8x128xf32>
    %49 = arith.addf %33, %48 : vector<8x128xf32>
    %c144 = arith.constant 144 : index
    %c0_20 = arith.constant 0 : index
    %50 = vector.load %arg1[%c144, %c0_20] : memref<192x128xf32, #tpu.memory_space<vmem>>, vector<8x128xf32>
    %c144_21 = arith.constant 144 : index
    %c0_22 = arith.constant 0 : index
    %51 = vector.load %arg2[%c144_21, %c0_22] : memref<192x128xf32, #tpu.memory_space<vmem>>, vector<8x128xf32>
    %c9 = arith.constant 9 : index
    %c0_23 = arith.constant 0 : index
    %52 = vector.load %arg3[%c9, %c0_23] : memref<72x128xf32, #tpu.memory_space<vmem>>, vector<1x128xf32>
    %c9_24 = arith.constant 9 : index
    %c0_25 = arith.constant 0 : index
    %53 = vector.load %arg4[%c9_24, %c0_25] : memref<72x128xf32, #tpu.memory_space<vmem>>, vector<1x128xf32>
    %54 = vector.broadcast %52 : vector<1x128xf32> to vector<8x128xf32>
    %55 = arith.mulf %50, %54 : vector<8x128xf32>
    %56 = vector.broadcast %53 : vector<1x128xf32> to vector<8x128xf32>
    %57 = arith.mulf %51, %56 : vector<8x128xf32>
    %58 = arith.subf %55, %57 : vector<8x128xf32>
    %59 = arith.addf %43, %58 : vector<8x128xf32>
    %60 = vector.broadcast %53 : vector<1x128xf32> to vector<8x128xf32>
    %61 = arith.mulf %50, %60 : vector<8x128xf32>
    %62 = vector.broadcast %52 : vector<1x128xf32> to vector<8x128xf32>
    %63 = arith.mulf %51, %62 : vector<8x128xf32>
    %64 = arith.addf %61, %63 : vector<8x128xf32>
    %65 = arith.addf %49, %64 : vector<8x128xf32>
    %c8 = arith.constant 8 : index
    %c0_26 = arith.constant 0 : index
    %66 = vector.load %arg1[%c8, %c0_26] : memref<192x128xf32, #tpu.memory_space<vmem>>, vector<8x128xf32>
    %c8_27 = arith.constant 8 : index
    %c0_28 = arith.constant 0 : index
    %67 = vector.load %arg2[%c8_27, %c0_28] : memref<192x128xf32, #tpu.memory_space<vmem>>, vector<8x128xf32>
    %c12 = arith.constant 12 : index
    %c0_29 = arith.constant 0 : index
    %68 = vector.load %arg3[%c12, %c0_29] : memref<72x128xf32, #tpu.memory_space<vmem>>, vector<1x128xf32>
    %c12_30 = arith.constant 12 : index
    %c0_31 = arith.constant 0 : index
    %69 = vector.load %arg4[%c12_30, %c0_31] : memref<72x128xf32, #tpu.memory_space<vmem>>, vector<1x128xf32>
    %70 = vector.broadcast %68 : vector<1x128xf32> to vector<8x128xf32>
    %71 = arith.mulf %66, %70 : vector<8x128xf32>
    %72 = vector.broadcast %69 : vector<1x128xf32> to vector<8x128xf32>
    %73 = arith.mulf %67, %72 : vector<8x128xf32>
    %74 = arith.subf %71, %73 : vector<8x128xf32>
    %75 = arith.addf %59, %74 : vector<8x128xf32>
    %76 = vector.broadcast %69 : vector<1x128xf32> to vector<8x128xf32>
    %77 = arith.mulf %66, %76 : vector<8x128xf32>
    %78 = vector.broadcast %68 : vector<1x128xf32> to vector<8x128xf32>
    %79 = arith.mulf %67, %78 : vector<8x128xf32>
    %80 = arith.addf %77, %79 : vector<8x128xf32>
    %81 = arith.addf %65, %80 : vector<8x128xf32>
    %c56 = arith.constant 56 : index
    %c0_32 = arith.constant 0 : index
    %82 = vector.load %arg1[%c56, %c0_32] : memref<192x128xf32, #tpu.memory_space<vmem>>, vector<8x128xf32>
    %c56_33 = arith.constant 56 : index
    %c0_34 = arith.constant 0 : index
    %83 = vector.load %arg2[%c56_33, %c0_34] : memref<192x128xf32, #tpu.memory_space<vmem>>, vector<8x128xf32>
    %c15 = arith.constant 15 : index
    %c0_35 = arith.constant 0 : index
    %84 = vector.load %arg3[%c15, %c0_35] : memref<72x128xf32, #tpu.memory_space<vmem>>, vector<1x128xf32>
    %c15_36 = arith.constant 15 : index
    %c0_37 = arith.constant 0 : index
    %85 = vector.load %arg4[%c15_36, %c0_37] : memref<72x128xf32, #tpu.memory_space<vmem>>, vector<1x128xf32>
    %86 = vector.broadcast %84 : vector<1x128xf32> to vector<8x128xf32>
    %87 = arith.mulf %82, %86 : vector<8x128xf32>
    %88 = vector.broadcast %85 : vector<1x128xf32> to vector<8x128xf32>
    %89 = arith.mulf %83, %88 : vector<8x128xf32>
    %90 = arith.subf %87, %89 : vector<8x128xf32>
    %91 = arith.addf %75, %90 : vector<8x128xf32>
    %92 = vector.broadcast %85 : vector<1x128xf32> to vector<8x128xf32>
    %93 = arith.mulf %82, %92 : vector<8x128xf32>
    %94 = vector.broadcast %84 : vector<1x128xf32> to vector<8x128xf32>
    %95 = arith.mulf %83, %94 : vector<8x128xf32>
    %96 = arith.addf %93, %95 : vector<8x128xf32>
    %97 = arith.addf %81, %96 : vector<8x128xf32>
    %c104 = arith.constant 104 : index
    %c0_38 = arith.constant 0 : index
    %98 = vector.load %arg1[%c104, %c0_38] : memref<192x128xf32, #tpu.memory_space<vmem>>, vector<8x128xf32>
    %c104_39 = arith.constant 104 : index
    %c0_40 = arith.constant 0 : index
    %99 = vector.load %arg2[%c104_39, %c0_40] : memref<192x128xf32, #tpu.memory_space<vmem>>, vector<8x128xf32>
    %c18 = arith.constant 18 : index
    %c0_41 = arith.constant 0 : index
    %100 = vector.load %arg3[%c18, %c0_41] : memref<72x128xf32, #tpu.memory_space<vmem>>, vector<1x128xf32>
    %c18_42 = arith.constant 18 : index
    %c0_43 = arith.constant 0 : index
    %101 = vector.load %arg4[%c18_42, %c0_43] : memref<72x128xf32, #tpu.memory_space<vmem>>, vector<1x128xf32>
    %102 = vector.broadcast %100 : vector<1x128xf32> to vector<8x128xf32>
    %103 = arith.mulf %98, %102 : vector<8x128xf32>
    %104 = vector.broadcast %101 : vector<1x128xf32> to vector<8x128xf32>
    %105 = arith.mulf %99, %104 : vector<8x128xf32>
    %106 = arith.subf %103, %105 : vector<8x128xf32>
    %107 = arith.addf %91, %106 : vector<8x128xf32>
    %108 = vector.broadcast %101 : vector<1x128xf32> to vector<8x128xf32>
    %109 = arith.mulf %98, %108 : vector<8x128xf32>
    %110 = vector.broadcast %100 : vector<1x128xf32> to vector<8x128xf32>
    %111 = arith.mulf %99, %110 : vector<8x128xf32>
    %112 = arith.addf %109, %111 : vector<8x128xf32>
    %113 = arith.addf %97, %112 : vector<8x128xf32>
    %c152 = arith.constant 152 : index
    %c0_44 = arith.constant 0 : index
    %114 = vector.load %arg1[%c152, %c0_44] : memref<192x128xf32, #tpu.memory_space<vmem>>, vector<8x128xf32>
    %c152_45 = arith.constant 152 : index
    %c0_46 = arith.constant 0 : index
    %115 = vector.load %arg2[%c152_45, %c0_46] : memref<192x128xf32, #tpu.memory_space<vmem>>, vector<8x128xf32>
    %c21 = arith.constant 21 : index
    %c0_47 = arith.constant 0 : index
    %116 = vector.load %arg3[%c21, %c0_47] : memref<72x128xf32, #tpu.memory_space<vmem>>, vector<1x128xf32>
    %c21_48 = arith.constant 21 : index
    %c0_49 = arith.constant 0 : index
    %117 = vector.load %arg4[%c21_48, %c0_49] : memref<72x128xf32, #tpu.memory_space<vmem>>, vector<1x128xf32>
    %118 = vector.broadcast %116 : vector<1x128xf32> to vector<8x128xf32>
    %119 = arith.mulf %114, %118 : vector<8x128xf32>
    %120 = vector.broadcast %117 : vector<1x128xf32> to vector<8x128xf32>
    %121 = arith.mulf %115, %120 : vector<8x128xf32>
    %122 = arith.subf %119, %121 : vector<8x128xf32>
    %123 = arith.addf %107, %122 : vector<8x128xf32>
    %124 = vector.broadcast %117 : vector<1x128xf32> to vector<8x128xf32>
    %125 = arith.mulf %114, %124 : vector<8x128xf32>
    %126 = vector.broadcast %116 : vector<1x128xf32> to vector<8x128xf32>
    %127 = arith.mulf %115, %126 : vector<8x128xf32>
    %128 = arith.addf %125, %127 : vector<8x128xf32>
    %129 = arith.addf %113, %128 : vector<8x128xf32>
    %c16 = arith.constant 16 : index
    %c0_50 = arith.constant 0 : index
    %130 = vector.load %arg1[%c16, %c0_50] : memref<192x128xf32, #tpu.memory_space<vmem>>, vector<8x128xf32>
    %c16_51 = arith.constant 16 : index
    %c0_52 = arith.constant 0 : index
    %131 = vector.load %arg2[%c16_51, %c0_52] : memref<192x128xf32, #tpu.memory_space<vmem>>, vector<8x128xf32>
    %c24 = arith.constant 24 : index
    %c0_53 = arith.constant 0 : index
    %132 = vector.load %arg3[%c24, %c0_53] : memref<72x128xf32, #tpu.memory_space<vmem>>, vector<1x128xf32>
    %c24_54 = arith.constant 24 : index
    %c0_55 = arith.constant 0 : index
    %133 = vector.load %arg4[%c24_54, %c0_55] : memref<72x128xf32, #tpu.memory_space<vmem>>, vector<1x128xf32>
    %134 = vector.broadcast %132 : vector<1x128xf32> to vector<8x128xf32>
    %135 = arith.mulf %130, %134 : vector<8x128xf32>
    %136 = vector.broadcast %133 : vector<1x128xf32> to vector<8x128xf32>
    %137 = arith.mulf %131, %136 : vector<8x128xf32>
    %138 = arith.subf %135, %137 : vector<8x128xf32>
    %139 = arith.addf %123, %138 : vector<8x128xf32>
    %140 = vector.broadcast %133 : vector<1x128xf32> to vector<8x128xf32>
    %141 = arith.mulf %130, %140 : vector<8x128xf32>
    %142 = vector.broadcast %132 : vector<1x128xf32> to vector<8x128xf32>
    %143 = arith.mulf %131, %142 : vector<8x128xf32>
    %144 = arith.addf %141, %143 : vector<8x128xf32>
    %145 = arith.addf %129, %144 : vector<8x128xf32>
    %c64 = arith.constant 64 : index
    %c0_56 = arith.constant 0 : index
    %146 = vector.load %arg1[%c64, %c0_56] : memref<192x128xf32, #tpu.memory_space<vmem>>, vector<8x128xf32>
    %c64_57 = arith.constant 64 : index
    %c0_58 = arith.constant 0 : index
    %147 = vector.load %arg2[%c64_57, %c0_58] : memref<192x128xf32, #tpu.memory_space<vmem>>, vector<8x128xf32>
    %c27 = arith.constant 27 : index
    %c0_59 = arith.constant 0 : index
    %148 = vector.load %arg3[%c27, %c0_59] : memref<72x128xf32, #tpu.memory_space<vmem>>, vector<1x128xf32>
    %c27_60 = arith.constant 27 : index
    %c0_61 = arith.constant 0 : index
    %149 = vector.load %arg4[%c27_60, %c0_61] : memref<72x128xf32, #tpu.memory_space<vmem>>, vector<1x128xf32>
    %150 = vector.broadcast %148 : vector<1x128xf32> to vector<8x128xf32>
    %151 = arith.mulf %146, %150 : vector<8x128xf32>
    %152 = vector.broadcast %149 : vector<1x128xf32> to vector<8x128xf32>
    %153 = arith.mulf %147, %152 : vector<8x128xf32>
    %154 = arith.subf %151, %153 : vector<8x128xf32>
    %155 = arith.addf %139, %154 : vector<8x128xf32>
    %156 = vector.broadcast %149 : vector<1x128xf32> to vector<8x128xf32>
    %157 = arith.mulf %146, %156 : vector<8x128xf32>
    %158 = vector.broadcast %148 : vector<1x128xf32> to vector<8x128xf32>
    %159 = arith.mulf %147, %158 : vector<8x128xf32>
    %160 = arith.addf %157, %159 : vector<8x128xf32>
    %161 = arith.addf %145, %160 : vector<8x128xf32>
    %c112 = arith.constant 112 : index
    %c0_62 = arith.constant 0 : index
    %162 = vector.load %arg1[%c112, %c0_62] : memref<192x128xf32, #tpu.memory_space<vmem>>, vector<8x128xf32>
    %c112_63 = arith.constant 112 : index
    %c0_64 = arith.constant 0 : index
    %163 = vector.load %arg2[%c112_63, %c0_64] : memref<192x128xf32, #tpu.memory_space<vmem>>, vector<8x128xf32>
    %c30 = arith.constant 30 : index
    %c0_65 = arith.constant 0 : index
    %164 = vector.load %arg3[%c30, %c0_65] : memref<72x128xf32, #tpu.memory_space<vmem>>, vector<1x128xf32>
    %c30_66 = arith.constant 30 : index
    %c0_67 = arith.constant 0 : index
    %165 = vector.load %arg4[%c30_66, %c0_67] : memref<72x128xf32, #tpu.memory_space<vmem>>, vector<1x128xf32>
    %166 = vector.broadcast %164 : vector<1x128xf32> to vector<8x128xf32>
    %167 = arith.mulf %162, %166 : vector<8x128xf32>
    %168 = vector.broadcast %165 : vector<1x128xf32> to vector<8x128xf32>
    %169 = arith.mulf %163, %168 : vector<8x128xf32>
    %170 = arith.subf %167, %169 : vector<8x128xf32>
    %171 = arith.addf %155, %170 : vector<8x128xf32>
    %172 = vector.broadcast %165 : vector<1x128xf32> to vector<8x128xf32>
    %173 = arith.mulf %162, %172 : vector<8x128xf32>
    %174 = vector.broadcast %164 : vector<1x128xf32> to vector<8x128xf32>
    %175 = arith.mulf %163, %174 : vector<8x128xf32>
    %176 = arith.addf %173, %175 : vector<8x128xf32>
    %177 = arith.addf %161, %176 : vector<8x128xf32>
    %c160 = arith.constant 160 : index
    %c0_68 = arith.constant 0 : index
    %178 = vector.load %arg1[%c160, %c0_68] : memref<192x128xf32, #tpu.memory_space<vmem>>, vector<8x128xf32>
    %c160_69 = arith.constant 160 : index
    %c0_70 = arith.constant 0 : index
    %179 = vector.load %arg2[%c160_69, %c0_70] : memref<192x128xf32, #tpu.memory_space<vmem>>, vector<8x128xf32>
    %c33 = arith.constant 33 : index
    %c0_71 = arith.constant 0 : index
    %180 = vector.load %arg3[%c33, %c0_71] : memref<72x128xf32, #tpu.memory_space<vmem>>, vector<1x128xf32>
    %c33_72 = arith.constant 33 : index
    %c0_73 = arith.constant 0 : index
    %181 = vector.load %arg4[%c33_72, %c0_73] : memref<72x128xf32, #tpu.memory_space<vmem>>, vector<1x128xf32>
    %182 = vector.broadcast %180 : vector<1x128xf32> to vector<8x128xf32>
    %183 = arith.mulf %178, %182 : vector<8x128xf32>
    %184 = vector.broadcast %181 : vector<1x128xf32> to vector<8x128xf32>
    %185 = arith.mulf %179, %184 : vector<8x128xf32>
    %186 = arith.subf %183, %185 : vector<8x128xf32>
    %187 = arith.addf %171, %186 : vector<8x128xf32>
    %188 = vector.broadcast %181 : vector<1x128xf32> to vector<8x128xf32>
    %189 = arith.mulf %178, %188 : vector<8x128xf32>
    %190 = vector.broadcast %180 : vector<1x128xf32> to vector<8x128xf32>
    %191 = arith.mulf %179, %190 : vector<8x128xf32>
    %192 = arith.addf %189, %191 : vector<8x128xf32>
    %193 = arith.addf %177, %192 : vector<8x128xf32>
    %c24_74 = arith.constant 24 : index
    %c0_75 = arith.constant 0 : index
    %194 = vector.load %arg1[%c24_74, %c0_75] : memref<192x128xf32, #tpu.memory_space<vmem>>, vector<8x128xf32>
    %c24_76 = arith.constant 24 : index
    %c0_77 = arith.constant 0 : index
    %195 = vector.load %arg2[%c24_76, %c0_77] : memref<192x128xf32, #tpu.memory_space<vmem>>, vector<8x128xf32>
    %c36 = arith.constant 36 : index
    %c0_78 = arith.constant 0 : index
    %196 = vector.load %arg3[%c36, %c0_78] : memref<72x128xf32, #tpu.memory_space<vmem>>, vector<1x128xf32>
    %c36_79 = arith.constant 36 : index
    %c0_80 = arith.constant 0 : index
    %197 = vector.load %arg4[%c36_79, %c0_80] : memref<72x128xf32, #tpu.memory_space<vmem>>, vector<1x128xf32>
    %198 = vector.broadcast %196 : vector<1x128xf32> to vector<8x128xf32>
    %199 = arith.mulf %194, %198 : vector<8x128xf32>
    %200 = vector.broadcast %197 : vector<1x128xf32> to vector<8x128xf32>
    %201 = arith.mulf %195, %200 : vector<8x128xf32>
    %202 = arith.subf %199, %201 : vector<8x128xf32>
    %203 = arith.addf %187, %202 : vector<8x128xf32>
    %204 = vector.broadcast %197 : vector<1x128xf32> to vector<8x128xf32>
    %205 = arith.mulf %194, %204 : vector<8x128xf32>
    %206 = vector.broadcast %196 : vector<1x128xf32> to vector<8x128xf32>
    %207 = arith.mulf %195, %206 : vector<8x128xf32>
    %208 = arith.addf %205, %207 : vector<8x128xf32>
    %209 = arith.addf %193, %208 : vector<8x128xf32>
    %c72 = arith.constant 72 : index
    %c0_81 = arith.constant 0 : index
    %210 = vector.load %arg1[%c72, %c0_81] : memref<192x128xf32, #tpu.memory_space<vmem>>, vector<8x128xf32>
    %c72_82 = arith.constant 72 : index
    %c0_83 = arith.constant 0 : index
    %211 = vector.load %arg2[%c72_82, %c0_83] : memref<192x128xf32, #tpu.memory_space<vmem>>, vector<8x128xf32>
    %c39 = arith.constant 39 : index
    %c0_84 = arith.constant 0 : index
    %212 = vector.load %arg3[%c39, %c0_84] : memref<72x128xf32, #tpu.memory_space<vmem>>, vector<1x128xf32>
    %c39_85 = arith.constant 39 : index
    %c0_86 = arith.constant 0 : index
    %213 = vector.load %arg4[%c39_85, %c0_86] : memref<72x128xf32, #tpu.memory_space<vmem>>, vector<1x128xf32>
    %214 = vector.broadcast %212 : vector<1x128xf32> to vector<8x128xf32>
    %215 = arith.mulf %210, %214 : vector<8x128xf32>
    %216 = vector.broadcast %213 : vector<1x128xf32> to vector<8x128xf32>
    %217 = arith.mulf %211, %216 : vector<8x128xf32>
    %218 = arith.subf %215, %217 : vector<8x128xf32>
    %219 = arith.addf %203, %218 : vector<8x128xf32>
    %220 = vector.broadcast %213 : vector<1x128xf32> to vector<8x128xf32>
    %221 = arith.mulf %210, %220 : vector<8x128xf32>
    %222 = vector.broadcast %212 : vector<1x128xf32> to vector<8x128xf32>
    %223 = arith.mulf %211, %222 : vector<8x128xf32>
    %224 = arith.addf %221, %223 : vector<8x128xf32>
    %225 = arith.addf %209, %224 : vector<8x128xf32>
    %c120 = arith.constant 120 : index
    %c0_87 = arith.constant 0 : index
    %226 = vector.load %arg1[%c120, %c0_87] : memref<192x128xf32, #tpu.memory_space<vmem>>, vector<8x128xf32>
    %c120_88 = arith.constant 120 : index
    %c0_89 = arith.constant 0 : index
    %227 = vector.load %arg2[%c120_88, %c0_89] : memref<192x128xf32, #tpu.memory_space<vmem>>, vector<8x128xf32>
    %c42 = arith.constant 42 : index
    %c0_90 = arith.constant 0 : index
    %228 = vector.load %arg3[%c42, %c0_90] : memref<72x128xf32, #tpu.memory_space<vmem>>, vector<1x128xf32>
    %c42_91 = arith.constant 42 : index
    %c0_92 = arith.constant 0 : index
    %229 = vector.load %arg4[%c42_91, %c0_92] : memref<72x128xf32, #tpu.memory_space<vmem>>, vector<1x128xf32>
    %230 = vector.broadcast %228 : vector<1x128xf32> to vector<8x128xf32>
    %231 = arith.mulf %226, %230 : vector<8x128xf32>
    %232 = vector.broadcast %229 : vector<1x128xf32> to vector<8x128xf32>
    %233 = arith.mulf %227, %232 : vector<8x128xf32>
    %234 = arith.subf %231, %233 : vector<8x128xf32>
    %235 = arith.addf %219, %234 : vector<8x128xf32>
    %236 = vector.broadcast %229 : vector<1x128xf32> to vector<8x128xf32>
    %237 = arith.mulf %226, %236 : vector<8x128xf32>
    %238 = vector.broadcast %228 : vector<1x128xf32> to vector<8x128xf32>
    %239 = arith.mulf %227, %238 : vector<8x128xf32>
    %240 = arith.addf %237, %239 : vector<8x128xf32>
    %241 = arith.addf %225, %240 : vector<8x128xf32>
    %c168 = arith.constant 168 : index
    %c0_93 = arith.constant 0 : index
    %242 = vector.load %arg1[%c168, %c0_93] : memref<192x128xf32, #tpu.memory_space<vmem>>, vector<8x128xf32>
    %c168_94 = arith.constant 168 : index
    %c0_95 = arith.constant 0 : index
    %243 = vector.load %arg2[%c168_94, %c0_95] : memref<192x128xf32, #tpu.memory_space<vmem>>, vector<8x128xf32>
    %c45 = arith.constant 45 : index
    %c0_96 = arith.constant 0 : index
    %244 = vector.load %arg3[%c45, %c0_96] : memref<72x128xf32, #tpu.memory_space<vmem>>, vector<1x128xf32>
    %c45_97 = arith.constant 45 : index
    %c0_98 = arith.constant 0 : index
    %245 = vector.load %arg4[%c45_97, %c0_98] : memref<72x128xf32, #tpu.memory_space<vmem>>, vector<1x128xf32>
    %246 = vector.broadcast %244 : vector<1x128xf32> to vector<8x128xf32>
    %247 = arith.mulf %242, %246 : vector<8x128xf32>
    %248 = vector.broadcast %245 : vector<1x128xf32> to vector<8x128xf32>
    %249 = arith.mulf %243, %248 : vector<8x128xf32>
    %250 = arith.subf %247, %249 : vector<8x128xf32>
    %251 = arith.addf %235, %250 : vector<8x128xf32>
    %252 = vector.broadcast %245 : vector<1x128xf32> to vector<8x128xf32>
    %253 = arith.mulf %242, %252 : vector<8x128xf32>
    %254 = vector.broadcast %244 : vector<1x128xf32> to vector<8x128xf32>
    %255 = arith.mulf %243, %254 : vector<8x128xf32>
    %256 = arith.addf %253, %255 : vector<8x128xf32>
    %257 = arith.addf %241, %256 : vector<8x128xf32>
    %c32 = arith.constant 32 : index
    %c0_99 = arith.constant 0 : index
    %258 = vector.load %arg1[%c32, %c0_99] : memref<192x128xf32, #tpu.memory_space<vmem>>, vector<8x128xf32>
    %c32_100 = arith.constant 32 : index
    %c0_101 = arith.constant 0 : index
    %259 = vector.load %arg2[%c32_100, %c0_101] : memref<192x128xf32, #tpu.memory_space<vmem>>, vector<8x128xf32>
    %c48_102 = arith.constant 48 : index
    %c0_103 = arith.constant 0 : index
    %260 = vector.load %arg3[%c48_102, %c0_103] : memref<72x128xf32, #tpu.memory_space<vmem>>, vector<1x128xf32>
    %c48_104 = arith.constant 48 : index
    %c0_105 = arith.constant 0 : index
    %261 = vector.load %arg4[%c48_104, %c0_105] : memref<72x128xf32, #tpu.memory_space<vmem>>, vector<1x128xf32>
    %262 = vector.broadcast %260 : vector<1x128xf32> to vector<8x128xf32>
    %263 = arith.mulf %258, %262 : vector<8x128xf32>
    %264 = vector.broadcast %261 : vector<1x128xf32> to vector<8x128xf32>
    %265 = arith.mulf %259, %264 : vector<8x128xf32>
    %266 = arith.subf %263, %265 : vector<8x128xf32>
    %267 = arith.addf %251, %266 : vector<8x128xf32>
    %268 = vector.broadcast %261 : vector<1x128xf32> to vector<8x128xf32>
    %269 = arith.mulf %258, %268 : vector<8x128xf32>
    %270 = vector.broadcast %260 : vector<1x128xf32> to vector<8x128xf32>
    %271 = arith.mulf %259, %270 : vector<8x128xf32>
    %272 = arith.addf %269, %271 : vector<8x128xf32>
    %273 = arith.addf %257, %272 : vector<8x128xf32>
    %c80 = arith.constant 80 : index
    %c0_106 = arith.constant 0 : index
    %274 = vector.load %arg1[%c80, %c0_106] : memref<192x128xf32, #tpu.memory_space<vmem>>, vector<8x128xf32>
    %c80_107 = arith.constant 80 : index
    %c0_108 = arith.constant 0 : index
    %275 = vector.load %arg2[%c80_107, %c0_108] : memref<192x128xf32, #tpu.memory_space<vmem>>, vector<8x128xf32>
    %c51 = arith.constant 51 : index
    %c0_109 = arith.constant 0 : index
    %276 = vector.load %arg3[%c51, %c0_109] : memref<72x128xf32, #tpu.memory_space<vmem>>, vector<1x128xf32>
    %c51_110 = arith.constant 51 : index
    %c0_111 = arith.constant 0 : index
    %277 = vector.load %arg4[%c51_110, %c0_111] : memref<72x128xf32, #tpu.memory_space<vmem>>, vector<1x128xf32>
    %278 = vector.broadcast %276 : vector<1x128xf32> to vector<8x128xf32>
    %279 = arith.mulf %274, %278 : vector<8x128xf32>
    %280 = vector.broadcast %277 : vector<1x128xf32> to vector<8x128xf32>
    %281 = arith.mulf %275, %280 : vector<8x128xf32>
    %282 = arith.subf %279, %281 : vector<8x128xf32>
    %283 = arith.addf %267, %282 : vector<8x128xf32>
    %284 = vector.broadcast %277 : vector<1x128xf32> to vector<8x128xf32>
    %285 = arith.mulf %274, %284 : vector<8x128xf32>
    %286 = vector.broadcast %276 : vector<1x128xf32> to vector<8x128xf32>
    %287 = arith.mulf %275, %286 : vector<8x128xf32>
    %288 = arith.addf %285, %287 : vector<8x128xf32>
    %289 = arith.addf %273, %288 : vector<8x128xf32>
    %c128 = arith.constant 128 : index
    %c0_112 = arith.constant 0 : index
    %290 = vector.load %arg1[%c128, %c0_112] : memref<192x128xf32, #tpu.memory_space<vmem>>, vector<8x128xf32>
    %c128_113 = arith.constant 128 : index
    %c0_114 = arith.constant 0 : index
    %291 = vector.load %arg2[%c128_113, %c0_114] : memref<192x128xf32, #tpu.memory_space<vmem>>, vector<8x128xf32>
    %c54 = arith.constant 54 : index
    %c0_115 = arith.constant 0 : index
    %292 = vector.load %arg3[%c54, %c0_115] : memref<72x128xf32, #tpu.memory_space<vmem>>, vector<1x128xf32>
    %c54_116 = arith.constant 54 : index
    %c0_117 = arith.constant 0 : index
    %293 = vector.load %arg4[%c54_116, %c0_117] : memref<72x128xf32, #tpu.memory_space<vmem>>, vector<1x128xf32>
    %294 = vector.broadcast %292 : vector<1x128xf32> to vector<8x128xf32>
    %295 = arith.mulf %290, %294 : vector<8x128xf32>
    %296 = vector.broadcast %293 : vector<1x128xf32> to vector<8x128xf32>
    %297 = arith.mulf %291, %296 : vector<8x128xf32>
    %298 = arith.subf %295, %297 : vector<8x128xf32>
    %299 = arith.addf %283, %298 : vector<8x128xf32>
    %300 = vector.broadcast %293 : vector<1x128xf32> to vector<8x128xf32>
    %301 = arith.mulf %290, %300 : vector<8x128xf32>
    %302 = vector.broadcast %292 : vector<1x128xf32> to vector<8x128xf32>
    %303 = arith.mulf %291, %302 : vector<8x128xf32>
    %304 = arith.addf %301, %303 : vector<8x128xf32>
    %305 = arith.addf %289, %304 : vector<8x128xf32>
    %c176 = arith.constant 176 : index
    %c0_118 = arith.constant 0 : index
    %306 = vector.load %arg1[%c176, %c0_118] : memref<192x128xf32, #tpu.memory_space<vmem>>, vector<8x128xf32>
    %c176_119 = arith.constant 176 : index
    %c0_120 = arith.constant 0 : index
    %307 = vector.load %arg2[%c176_119, %c0_120] : memref<192x128xf32, #tpu.memory_space<vmem>>, vector<8x128xf32>
    %c57 = arith.constant 57 : index
    %c0_121 = arith.constant 0 : index
    %308 = vector.load %arg3[%c57, %c0_121] : memref<72x128xf32, #tpu.memory_space<vmem>>, vector<1x128xf32>
    %c57_122 = arith.constant 57 : index
    %c0_123 = arith.constant 0 : index
    %309 = vector.load %arg4[%c57_122, %c0_123] : memref<72x128xf32, #tpu.memory_space<vmem>>, vector<1x128xf32>
    %310 = vector.broadcast %308 : vector<1x128xf32> to vector<8x128xf32>
    %311 = arith.mulf %306, %310 : vector<8x128xf32>
    %312 = vector.broadcast %309 : vector<1x128xf32> to vector<8x128xf32>
    %313 = arith.mulf %307, %312 : vector<8x128xf32>
    %314 = arith.subf %311, %313 : vector<8x128xf32>
    %315 = arith.addf %299, %314 : vector<8x128xf32>
    %316 = vector.broadcast %309 : vector<1x128xf32> to vector<8x128xf32>
    %317 = arith.mulf %306, %316 : vector<8x128xf32>
    %318 = vector.broadcast %308 : vector<1x128xf32> to vector<8x128xf32>
    %319 = arith.mulf %307, %318 : vector<8x128xf32>
    %320 = arith.addf %317, %319 : vector<8x128xf32>
    %321 = arith.addf %305, %320 : vector<8x128xf32>
    %c40 = arith.constant 40 : index
    %c0_124 = arith.constant 0 : index
    %322 = vector.load %arg1[%c40, %c0_124] : memref<192x128xf32, #tpu.memory_space<vmem>>, vector<8x128xf32>
    %c40_125 = arith.constant 40 : index
    %c0_126 = arith.constant 0 : index
    %323 = vector.load %arg2[%c40_125, %c0_126] : memref<192x128xf32, #tpu.memory_space<vmem>>, vector<8x128xf32>
    %c60 = arith.constant 60 : index
    %c0_127 = arith.constant 0 : index
    %324 = vector.load %arg3[%c60, %c0_127] : memref<72x128xf32, #tpu.memory_space<vmem>>, vector<1x128xf32>
    %c60_128 = arith.constant 60 : index
    %c0_129 = arith.constant 0 : index
    %325 = vector.load %arg4[%c60_128, %c0_129] : memref<72x128xf32, #tpu.memory_space<vmem>>, vector<1x128xf32>
    %326 = vector.broadcast %324 : vector<1x128xf32> to vector<8x128xf32>
    %327 = arith.mulf %322, %326 : vector<8x128xf32>
    %328 = vector.broadcast %325 : vector<1x128xf32> to vector<8x128xf32>
    %329 = arith.mulf %323, %328 : vector<8x128xf32>
    %330 = arith.subf %327, %329 : vector<8x128xf32>
    %331 = arith.addf %315, %330 : vector<8x128xf32>
    %332 = vector.broadcast %325 : vector<1x128xf32> to vector<8x128xf32>
    %333 = arith.mulf %322, %332 : vector<8x128xf32>
    %334 = vector.broadcast %324 : vector<1x128xf32> to vector<8x128xf32>
    %335 = arith.mulf %323, %334 : vector<8x128xf32>
    %336 = arith.addf %333, %335 : vector<8x128xf32>
    %337 = arith.addf %321, %336 : vector<8x128xf32>
    %c88 = arith.constant 88 : index
    %c0_130 = arith.constant 0 : index
    %338 = vector.load %arg1[%c88, %c0_130] : memref<192x128xf32, #tpu.memory_space<vmem>>, vector<8x128xf32>
    %c88_131 = arith.constant 88 : index
    %c0_132 = arith.constant 0 : index
    %339 = vector.load %arg2[%c88_131, %c0_132] : memref<192x128xf32, #tpu.memory_space<vmem>>, vector<8x128xf32>
    %c63 = arith.constant 63 : index
    %c0_133 = arith.constant 0 : index
    %340 = vector.load %arg3[%c63, %c0_133] : memref<72x128xf32, #tpu.memory_space<vmem>>, vector<1x128xf32>
    %c63_134 = arith.constant 63 : index
    %c0_135 = arith.constant 0 : index
    %341 = vector.load %arg4[%c63_134, %c0_135] : memref<72x128xf32, #tpu.memory_space<vmem>>, vector<1x128xf32>
    %342 = vector.broadcast %340 : vector<1x128xf32> to vector<8x128xf32>
    %343 = arith.mulf %338, %342 : vector<8x128xf32>
    %344 = vector.broadcast %341 : vector<1x128xf32> to vector<8x128xf32>
    %345 = arith.mulf %339, %344 : vector<8x128xf32>
    %346 = arith.subf %343, %345 : vector<8x128xf32>
    %347 = arith.addf %331, %346 : vector<8x128xf32>
    %348 = vector.broadcast %341 : vector<1x128xf32> to vector<8x128xf32>
    %349 = arith.mulf %338, %348 : vector<8x128xf32>
    %350 = vector.broadcast %340 : vector<1x128xf32> to vector<8x128xf32>
    %351 = arith.mulf %339, %350 : vector<8x128xf32>
    %352 = arith.addf %349, %351 : vector<8x128xf32>
    %353 = arith.addf %337, %352 : vector<8x128xf32>
    %c136 = arith.constant 136 : index
    %c0_136 = arith.constant 0 : index
    %354 = vector.load %arg1[%c136, %c0_136] : memref<192x128xf32, #tpu.memory_space<vmem>>, vector<8x128xf32>
    %c136_137 = arith.constant 136 : index
    %c0_138 = arith.constant 0 : index
    %355 = vector.load %arg2[%c136_137, %c0_138] : memref<192x128xf32, #tpu.memory_space<vmem>>, vector<8x128xf32>
    %c66 = arith.constant 66 : index
    %c0_139 = arith.constant 0 : index
    %356 = vector.load %arg3[%c66, %c0_139] : memref<72x128xf32, #tpu.memory_space<vmem>>, vector<1x128xf32>
    %c66_140 = arith.constant 66 : index
    %c0_141 = arith.constant 0 : index
    %357 = vector.load %arg4[%c66_140, %c0_141] : memref<72x128xf32, #tpu.memory_space<vmem>>, vector<1x128xf32>
    %358 = vector.broadcast %356 : vector<1x128xf32> to vector<8x128xf32>
    %359 = arith.mulf %354, %358 : vector<8x128xf32>
    %360 = vector.broadcast %357 : vector<1x128xf32> to vector<8x128xf32>
    %361 = arith.mulf %355, %360 : vector<8x128xf32>
    %362 = arith.subf %359, %361 : vector<8x128xf32>
    %363 = arith.addf %347, %362 : vector<8x128xf32>
    %364 = vector.broadcast %357 : vector<1x128xf32> to vector<8x128xf32>
    %365 = arith.mulf %354, %364 : vector<8x128xf32>
    %366 = vector.broadcast %356 : vector<1x128xf32> to vector<8x128xf32>
    %367 = arith.mulf %355, %366 : vector<8x128xf32>
    %368 = arith.addf %365, %367 : vector<8x128xf32>
    %369 = arith.addf %353, %368 : vector<8x128xf32>
    %c184 = arith.constant 184 : index
    %c0_142 = arith.constant 0 : index
    %370 = vector.load %arg1[%c184, %c0_142] : memref<192x128xf32, #tpu.memory_space<vmem>>, vector<8x128xf32>
    %c184_143 = arith.constant 184 : index
    %c0_144 = arith.constant 0 : index
    %371 = vector.load %arg2[%c184_143, %c0_144] : memref<192x128xf32, #tpu.memory_space<vmem>>, vector<8x128xf32>
    %c69 = arith.constant 69 : index
    %c0_145 = arith.constant 0 : index
    %372 = vector.load %arg3[%c69, %c0_145] : memref<72x128xf32, #tpu.memory_space<vmem>>, vector<1x128xf32>
    %c69_146 = arith.constant 69 : index
    %c0_147 = arith.constant 0 : index
    %373 = vector.load %arg4[%c69_146, %c0_147] : memref<72x128xf32, #tpu.memory_space<vmem>>, vector<1x128xf32>
    %374 = vector.broadcast %372 : vector<1x128xf32> to vector<8x128xf32>
    %375 = arith.mulf %370, %374 : vector<8x128xf32>
    %376 = vector.broadcast %373 : vector<1x128xf32> to vector<8x128xf32>
    %377 = arith.mulf %371, %376 : vector<8x128xf32>
    %378 = arith.subf %375, %377 : vector<8x128xf32>
    %379 = arith.addf %363, %378 : vector<8x128xf32>
    %380 = vector.broadcast %373 : vector<1x128xf32> to vector<8x128xf32>
    %381 = arith.mulf %370, %380 : vector<8x128xf32>
    %382 = vector.broadcast %372 : vector<1x128xf32> to vector<8x128xf32>
    %383 = arith.mulf %371, %382 : vector<8x128xf32>
    %384 = arith.addf %381, %383 : vector<8x128xf32>
    %385 = arith.addf %369, %384 : vector<8x128xf32>
    %c0_148 = arith.constant 0 : index
    %c0_149 = arith.constant 0 : index
    %386 = vector.load %arg5[%c0_148, %c0_149] : memref<24x128xf32, #tpu.memory_space<vmem>>, vector<8x128xf32>
    tpu.vector_store %arg5[%c0_148, %c0_149], %379 {strides = array<i32>} : memref<24x128xf32, #tpu.memory_space<vmem>>, vector<8x128xf32>,
    %c0_150 = arith.constant 0 : index
    %c0_151 = arith.constant 0 : index
    %387 = vector.load %arg6[%c0_150, %c0_151] : memref<24x128xf32, #tpu.memory_space<vmem>>, vector<8x128xf32>
    tpu.vector_store %arg6[%c0_150, %c0_151], %385 {strides = array<i32>} : memref<24x128xf32, #tpu.memory_space<vmem>>, vector<8x128xf32>,
    %cst_152 = arith.constant 0.000000e+00 : f32
    %388 = vector.broadcast %cst_152 : f32 to vector<8x128xf32>
    %cst_153 = arith.constant 0.000000e+00 : f32
    %389 = vector.broadcast %cst_153 : f32 to vector<8x128xf32>
    %c0_154 = arith.constant 0 : index
    %c0_155 = arith.constant 0 : index
    %390 = vector.load %arg1[%c0_154, %c0_155] : memref<192x128xf32, #tpu.memory_space<vmem>>, vector<8x128xf32>
    %c0_156 = arith.constant 0 : index
    %c0_157 = arith.constant 0 : index
    %391 = vector.load %arg2[%c0_156, %c0_157] : memref<192x128xf32, #tpu.memory_space<vmem>>, vector<8x128xf32>
    %c1 = arith.constant 1 : index
    %c0_158 = arith.constant 0 : index
    %392 = vector.load %arg3[%c1, %c0_158] : memref<72x128xf32, #tpu.memory_space<vmem>>, vector<1x128xf32>
    %c1_159 = arith.constant 1 : index
    %c0_160 = arith.constant 0 : index
    %393 = vector.load %arg4[%c1_159, %c0_160] : memref<72x128xf32, #tpu.memory_space<vmem>>, vector<1x128xf32>
    %394 = vector.broadcast %392 : vector<1x128xf32> to vector<8x128xf32>
    %395 = arith.mulf %390, %394 : vector<8x128xf32>
    %396 = vector.broadcast %393 : vector<1x128xf32> to vector<8x128xf32>
    %397 = arith.mulf %391, %396 : vector<8x128xf32>
    %398 = arith.subf %395, %397 : vector<8x128xf32>
    %399 = arith.addf %388, %398 : vector<8x128xf32>
    %400 = vector.broadcast %393 : vector<1x128xf32> to vector<8x128xf32>
    %401 = arith.mulf %390, %400 : vector<8x128xf32>
    %402 = vector.broadcast %392 : vector<1x128xf32> to vector<8x128xf32>
    %403 = arith.mulf %391, %402 : vector<8x128xf32>
    %404 = arith.addf %401, %403 : vector<8x128xf32>
    %405 = arith.addf %389, %404 : vector<8x128xf32>
    %c48_161 = arith.constant 48 : index
    %c0_162 = arith.constant 0 : index
    %406 = vector.load %arg1[%c48_161, %c0_162] : memref<192x128xf32, #tpu.memory_space<vmem>>, vector<8x128xf32>
    %c48_163 = arith.constant 48 : index
    %c0_164 = arith.constant 0 : index
    %407 = vector.load %arg2[%c48_163, %c0_164] : memref<192x128xf32, #tpu.memory_space<vmem>>, vector<8x128xf32>
    %c4 = arith.constant 4 : index
    %c0_165 = arith.constant 0 : index
    %408 = vector.load %arg3[%c4, %c0_165] : memref<72x128xf32, #tpu.memory_space<vmem>>, vector<1x128xf32>
    %c4_166 = arith.constant 4 : index
    %c0_167 = arith.constant 0 : index
    %409 = vector.load %arg4[%c4_166, %c0_167] : memref<72x128xf32, #tpu.memory_space<vmem>>, vector<1x128xf32>
    %410 = vector.broadcast %408 : vector<1x128xf32> to vector<8x128xf32>
    %411 = arith.mulf %406, %410 : vector<8x128xf32>
    %412 = vector.broadcast %409 : vector<1x128xf32> to vector<8x128xf32>
    %413 = arith.mulf %407, %412 : vector<8x128xf32>
    %414 = arith.subf %411, %413 : vector<8x128xf32>
    %415 = arith.addf %399, %414 : vector<8x128xf32>
    %416 = vector.broadcast %409 : vector<1x128xf32> to vector<8x128xf32>
    %417 = arith.mulf %406, %416 : vector<8x128xf32>
    %418 = vector.broadcast %408 : vector<1x128xf32> to vector<8x128xf32>
    %419 = arith.mulf %407, %418 : vector<8x128xf32>
    %420 = arith.addf %417, %419 : vector<8x128xf32>
    %421 = arith.addf %405, %420 : vector<8x128xf32>
    %c96_168 = arith.constant 96 : index
    %c0_169 = arith.constant 0 : index
    %422 = vector.load %arg1[%c96_168, %c0_169] : memref<192x128xf32, #tpu.memory_space<vmem>>, vector<8x128xf32>
    %c96_170 = arith.constant 96 : index
    %c0_171 = arith.constant 0 : index
    %423 = vector.load %arg2[%c96_170, %c0_171] : memref<192x128xf32, #tpu.memory_space<vmem>>, vector<8x128xf32>
    %c7 = arith.constant 7 : index
    %c0_172 = arith.constant 0 : index
    %424 = vector.load %arg3[%c7, %c0_172] : memref<72x128xf32, #tpu.memory_space<vmem>>, vector<1x128xf32>
    %c7_173 = arith.constant 7 : index
    %c0_174 = arith.constant 0 : index
    %425 = vector.load %arg4[%c7_173, %c0_174] : memref<72x128xf32, #tpu.memory_space<vmem>>, vector<1x128xf32>
    %426 = vector.broadcast %424 : vector<1x128xf32> to vector<8x128xf32>
    %427 = arith.mulf %422, %426 : vector<8x128xf32>
    %428 = vector.broadcast %425 : vector<1x128xf32> to vector<8x128xf32>
    %429 = arith.mulf %423, %428 : vector<8x128xf32>
    %430 = arith.subf %427, %429 : vector<8x128xf32>
    %431 = arith.addf %415, %430 : vector<8x128xf32>
    %432 = vector.broadcast %425 : vector<1x128xf32> to vector<8x128xf32>
    %433 = arith.mulf %422, %432 : vector<8x128xf32>
    %434 = vector.broadcast %424 : vector<1x128xf32> to vector<8x128xf32>
    %435 = arith.mulf %423, %434 : vector<8x128xf32>
    %436 = arith.addf %433, %435 : vector<8x128xf32>
    %437 = arith.addf %421, %436 : vector<8x128xf32>
    %c144_175 = arith.constant 144 : index
    %c0_176 = arith.constant 0 : index
    %438 = vector.load %arg1[%c144_175, %c0_176] : memref<192x128xf32, #tpu.memory_space<vmem>>, vector<8x128xf32>
    %c144_177 = arith.constant 144 : index
    %c0_178 = arith.constant 0 : index
    %439 = vector.load %arg2[%c144_177, %c0_178] : memref<192x128xf32, #tpu.memory_space<vmem>>, vector<8x128xf32>
    %c10 = arith.constant 10 : index
    %c0_179 = arith.constant 0 : index
    %440 = vector.load %arg3[%c10, %c0_179] : memref<72x128xf32, #tpu.memory_space<vmem>>, vector<1x128xf32>
    %c10_180 = arith.constant 10 : index
    %c0_181 = arith.constant 0 : index
    %441 = vector.load %arg4[%c10_180, %c0_181] : memref<72x128xf32, #tpu.memory_space<vmem>>, vector<1x128xf32>
    %442 = vector.broadcast %440 : vector<1x128xf32> to vector<8x128xf32>
    %443 = arith.mulf %438, %442 : vector<8x128xf32>
    %444 = vector.broadcast %441 : vector<1x128xf32> to vector<8x128xf32>
    %445 = arith.mulf %439, %444 : vector<8x128xf32>
    %446 = arith.subf %443, %445 : vector<8x128xf32>
    %447 = arith.addf %431, %446 : vector<8x128xf32>
    %448 = vector.broadcast %441 : vector<1x128xf32> to vector<8x128xf32>
    %449 = arith.mulf %438, %448 : vector<8x128xf32>
    %450 = vector.broadcast %440 : vector<1x128xf32> to vector<8x128xf32>
    %451 = arith.mulf %439, %450 : vector<8x128xf32>
    %452 = arith.addf %449, %451 : vector<8x128xf32>
    %453 = arith.addf %437, %452 : vector<8x128xf32>
    %c8_182 = arith.constant 8 : index
    %c0_183 = arith.constant 0 : index
    %454 = vector.load %arg1[%c8_182, %c0_183] : memref<192x128xf32, #tpu.memory_space<vmem>>, vector<8x128xf32>
    %c8_184 = arith.constant 8 : index
    %c0_185 = arith.constant 0 : index
    %455 = vector.load %arg2[%c8_184, %c0_185] : memref<192x128xf32, #tpu.memory_space<vmem>>, vector<8x128xf32>
    %c13 = arith.constant 13 : index
    %c0_186 = arith.constant 0 : index
    %456 = vector.load %arg3[%c13, %c0_186] : memref<72x128xf32, #tpu.memory_space<vmem>>, vector<1x128xf32>
    %c13_187 = arith.constant 13 : index
    %c0_188 = arith.constant 0 : index
    %457 = vector.load %arg4[%c13_187, %c0_188] : memref<72x128xf32, #tpu.memory_space<vmem>>, vector<1x128xf32>
    %458 = vector.broadcast %456 : vector<1x128xf32> to vector<8x128xf32>
    %459 = arith.mulf %454, %458 : vector<8x128xf32>
    %460 = vector.broadcast %457 : vector<1x128xf32> to vector<8x128xf32>
    %461 = arith.mulf %455, %460 : vector<8x128xf32>
    %462 = arith.subf %459, %461 : vector<8x128xf32>
    %463 = arith.addf %447, %462 : vector<8x128xf32>
    %464 = vector.broadcast %457 : vector<1x128xf32> to vector<8x128xf32>
    %465 = arith.mulf %454, %464 : vector<8x128xf32>
    %466 = vector.broadcast %456 : vector<1x128xf32> to vector<8x128xf32>
    %467 = arith.mulf %455, %466 : vector<8x128xf32>
    %468 = arith.addf %465, %467 : vector<8x128xf32>
    %469 = arith.addf %453, %468 : vector<8x128xf32>
    %c56_189 = arith.constant 56 : index
    %c0_190 = arith.constant 0 : index
    %470 = vector.load %arg1[%c56_189, %c0_190] : memref<192x128xf32, #tpu.memory_space<vmem>>, vector<8x128xf32>
    %c56_191 = arith.constant 56 : index
    %c0_192 = arith.constant 0 : index
    %471 = vector.load %arg2[%c56_191, %c0_192] : memref<192x128xf32, #tpu.memory_space<vmem>>, vector<8x128xf32>
    %c16_193 = arith.constant 16 : index
    %c0_194 = arith.constant 0 : index
    %472 = vector.load %arg3[%c16_193, %c0_194] : memref<72x128xf32, #tpu.memory_space<vmem>>, vector<1x128xf32>
    %c16_195 = arith.constant 16 : index
    %c0_196 = arith.constant 0 : index
    %473 = vector.load %arg4[%c16_195, %c0_196] : memref<72x128xf32, #tpu.memory_space<vmem>>, vector<1x128xf32>
    %474 = vector.broadcast %472 : vector<1x128xf32> to vector<8x128xf32>
    %475 = arith.mulf %470, %474 : vector<8x128xf32>
    %476 = vector.broadcast %473 : vector<1x128xf32> to vector<8x128xf32>
    %477 = arith.mulf %471, %476 : vector<8x128xf32>
    %478 = arith.subf %475, %477 : vector<8x128xf32>
    %479 = arith.addf %463, %478 : vector<8x128xf32>
    %480 = vector.broadcast %473 : vector<1x128xf32> to vector<8x128xf32>
    %481 = arith.mulf %470, %480 : vector<8x128xf32>
    %482 = vector.broadcast %472 : vector<1x128xf32> to vector<8x128xf32>
    %483 = arith.mulf %471, %482 : vector<8x128xf32>
    %484 = arith.addf %481, %483 : vector<8x128xf32>
    %485 = arith.addf %469, %484 : vector<8x128xf32>
    %c104_197 = arith.constant 104 : index
    %c0_198 = arith.constant 0 : index
    %486 = vector.load %arg1[%c104_197, %c0_198] : memref<192x128xf32, #tpu.memory_space<vmem>>, vector<8x128xf32>
    %c104_199 = arith.constant 104 : index
    %c0_200 = arith.constant 0 : index
    %487 = vector.load %arg2[%c104_199, %c0_200] : memref<192x128xf32, #tpu.memory_space<vmem>>, vector<8x128xf32>
    %c19 = arith.constant 19 : index
    %c0_201 = arith.constant 0 : index
    %488 = vector.load %arg3[%c19, %c0_201] : memref<72x128xf32, #tpu.memory_space<vmem>>, vector<1x128xf32>
    %c19_202 = arith.constant 19 : index
    %c0_203 = arith.constant 0 : index
    %489 = vector.load %arg4[%c19_202, %c0_203] : memref<72x128xf32, #tpu.memory_space<vmem>>, vector<1x128xf32>
    %490 = vector.broadcast %488 : vector<1x128xf32> to vector<8x128xf32>
    %491 = arith.mulf %486, %490 : vector<8x128xf32>
    %492 = vector.broadcast %489 : vector<1x128xf32> to vector<8x128xf32>
    %493 = arith.mulf %487, %492 : vector<8x128xf32>
    %494 = arith.subf %491, %493 : vector<8x128xf32>
    %495 = arith.addf %479, %494 : vector<8x128xf32>
    %496 = vector.broadcast %489 : vector<1x128xf32> to vector<8x128xf32>
    %497 = arith.mulf %486, %496 : vector<8x128xf32>
    %498 = vector.broadcast %488 : vector<1x128xf32> to vector<8x128xf32>
    %499 = arith.mulf %487, %498 : vector<8x128xf32>
    %500 = arith.addf %497, %499 : vector<8x128xf32>
    %501 = arith.addf %485, %500 : vector<8x128xf32>
    %c152_204 = arith.constant 152 : index
    %c0_205 = arith.constant 0 : index
    %502 = vector.load %arg1[%c152_204, %c0_205] : memref<192x128xf32, #tpu.memory_space<vmem>>, vector<8x128xf32>
    %c152_206 = arith.constant 152 : index
    %c0_207 = arith.constant 0 : index
    %503 = vector.load %arg2[%c152_206, %c0_207] : memref<192x128xf32, #tpu.memory_space<vmem>>, vector<8x128xf32>
    %c22 = arith.constant 22 : index
    %c0_208 = arith.constant 0 : index
    %504 = vector.load %arg3[%c22, %c0_208] : memref<72x128xf32, #tpu.memory_space<vmem>>, vector<1x128xf32>
    %c22_209 = arith.constant 22 : index
    %c0_210 = arith.constant 0 : index
    %505 = vector.load %arg4[%c22_209, %c0_210] : memref<72x128xf32, #tpu.memory_space<vmem>>, vector<1x128xf32>
    %506 = vector.broadcast %504 : vector<1x128xf32> to vector<8x128xf32>
    %507 = arith.mulf %502, %506 : vector<8x128xf32>
    %508 = vector.broadcast %505 : vector<1x128xf32> to vector<8x128xf32>
    %509 = arith.mulf %503, %508 : vector<8x128xf32>
    %510 = arith.subf %507, %509 : vector<8x128xf32>
    %511 = arith.addf %495, %510 : vector<8x128xf32>
    %512 = vector.broadcast %505 : vector<1x128xf32> to vector<8x128xf32>
    %513 = arith.mulf %502, %512 : vector<8x128xf32>
    %514 = vector.broadcast %504 : vector<1x128xf32> to vector<8x128xf32>
    %515 = arith.mulf %503, %514 : vector<8x128xf32>
    %516 = arith.addf %513, %515 : vector<8x128xf32>
    %517 = arith.addf %501, %516 : vector<8x128xf32>
    %c16_211 = arith.constant 16 : index
    %c0_212 = arith.constant 0 : index
    %518 = vector.load %arg1[%c16_211, %c0_212] : memref<192x128xf32, #tpu.memory_space<vmem>>, vector<8x128xf32>
    %c16_213 = arith.constant 16 : index
    %c0_214 = arith.constant 0 : index
    %519 = vector.load %arg2[%c16_213, %c0_214] : memref<192x128xf32, #tpu.memory_space<vmem>>, vector<8x128xf32>
    %c25 = arith.constant 25 : index
    %c0_215 = arith.constant 0 : index
    %520 = vector.load %arg3[%c25, %c0_215] : memref<72x128xf32, #tpu.memory_space<vmem>>, vector<1x128xf32>
    %c25_216 = arith.constant 25 : index
    %c0_217 = arith.constant 0 : index
    %521 = vector.load %arg4[%c25_216, %c0_217] : memref<72x128xf32, #tpu.memory_space<vmem>>, vector<1x128xf32>
    %522 = vector.broadcast %520 : vector<1x128xf32> to vector<8x128xf32>
    %523 = arith.mulf %518, %522 : vector<8x128xf32>
    %524 = vector.broadcast %521 : vector<1x128xf32> to vector<8x128xf32>
    %525 = arith.mulf %519, %524 : vector<8x128xf32>
    %526 = arith.subf %523, %525 : vector<8x128xf32>
    %527 = arith.addf %511, %526 : vector<8x128xf32>
    %528 = vector.broadcast %521 : vector<1x128xf32> to vector<8x128xf32>
    %529 = arith.mulf %518, %528 : vector<8x128xf32>
    %530 = vector.broadcast %520 : vector<1x128xf32> to vector<8x128xf32>
    %531 = arith.mulf %519, %530 : vector<8x128xf32>
    %532 = arith.addf %529, %531 : vector<8x128xf32>
    %533 = arith.addf %517, %532 : vector<8x128xf32>
    %c64_218 = arith.constant 64 : index
    %c0_219 = arith.constant 0 : index
    %534 = vector.load %arg1[%c64_218, %c0_219] : memref<192x128xf32, #tpu.memory_space<vmem>>, vector<8x128xf32>
    %c64_220 = arith.constant 64 : index
    %c0_221 = arith.constant 0 : index
    %535 = vector.load %arg2[%c64_220, %c0_221] : memref<192x128xf32, #tpu.memory_space<vmem>>, vector<8x128xf32>
    %c28 = arith.constant 28 : index
    %c0_222 = arith.constant 0 : index
    %536 = vector.load %arg3[%c28, %c0_222] : memref<72x128xf32, #tpu.memory_space<vmem>>, vector<1x128xf32>
    %c28_223 = arith.constant 28 : index
    %c0_224 = arith.constant 0 : index
    %537 = vector.load %arg4[%c28_223, %c0_224] : memref<72x128xf32, #tpu.memory_space<vmem>>, vector<1x128xf32>
    %538 = vector.broadcast %536 : vector<1x128xf32> to vector<8x128xf32>
    %539 = arith.mulf %534, %538 : vector<8x128xf32>
    %540 = vector.broadcast %537 : vector<1x128xf32> to vector<8x128xf32>
    %541 = arith.mulf %535, %540 : vector<8x128xf32>
    %542 = arith.subf %539, %541 : vector<8x128xf32>
    %543 = arith.addf %527, %542 : vector<8x128xf32>
    %544 = vector.broadcast %537 : vector<1x128xf32> to vector<8x128xf32>
    %545 = arith.mulf %534, %544 : vector<8x128xf32>
    %546 = vector.broadcast %536 : vector<1x128xf32> to vector<8x128xf32>
    %547 = arith.mulf %535, %546 : vector<8x128xf32>
    %548 = arith.addf %545, %547 : vector<8x128xf32>
    %549 = arith.addf %533, %548 : vector<8x128xf32>
    %c112_225 = arith.constant 112 : index
    %c0_226 = arith.constant 0 : index
    %550 = vector.load %arg1[%c112_225, %c0_226] : memref<192x128xf32, #tpu.memory_space<vmem>>, vector<8x128xf32>
    %c112_227 = arith.constant 112 : index
    %c0_228 = arith.constant 0 : index
    %551 = vector.load %arg2[%c112_227, %c0_228] : memref<192x128xf32, #tpu.memory_space<vmem>>, vector<8x128xf32>
    %c31 = arith.constant 31 : index
    %c0_229 = arith.constant 0 : index
    %552 = vector.load %arg3[%c31, %c0_229] : memref<72x128xf32, #tpu.memory_space<vmem>>, vector<1x128xf32>
    %c31_230 = arith.constant 31 : index
    %c0_231 = arith.constant 0 : index
    %553 = vector.load %arg4[%c31_230, %c0_231] : memref<72x128xf32, #tpu.memory_space<vmem>>, vector<1x128xf32>
    %554 = vector.broadcast %552 : vector<1x128xf32> to vector<8x128xf32>
    %555 = arith.mulf %550, %554 : vector<8x128xf32>
    %556 = vector.broadcast %553 : vector<1x128xf32> to vector<8x128xf32>
    %557 = arith.mulf %551, %556 : vector<8x128xf32>
    %558 = arith.subf %555, %557 : vector<8x128xf32>
    %559 = arith.addf %543, %558 : vector<8x128xf32>
    %560 = vector.broadcast %553 : vector<1x128xf32> to vector<8x128xf32>
    %561 = arith.mulf %550, %560 : vector<8x128xf32>
    %562 = vector.broadcast %552 : vector<1x128xf32> to vector<8x128xf32>
    %563 = arith.mulf %551, %562 : vector<8x128xf32>
    %564 = arith.addf %561, %563 : vector<8x128xf32>
    %565 = arith.addf %549, %564 : vector<8x128xf32>
    %c160_232 = arith.constant 160 : index
    %c0_233 = arith.constant 0 : index
    %566 = vector.load %arg1[%c160_232, %c0_233] : memref<192x128xf32, #tpu.memory_space<vmem>>, vector<8x128xf32>
    %c160_234 = arith.constant 160 : index
    %c0_235 = arith.constant 0 : index
    %567 = vector.load %arg2[%c160_234, %c0_235] : memref<192x128xf32, #tpu.memory_space<vmem>>, vector<8x128xf32>
    %c34 = arith.constant 34 : index
    %c0_236 = arith.constant 0 : index
    %568 = vector.load %arg3[%c34, %c0_236] : memref<72x128xf32, #tpu.memory_space<vmem>>, vector<1x128xf32>
    %c34_237 = arith.constant 34 : index
    %c0_238 = arith.constant 0 : index
    %569 = vector.load %arg4[%c34_237, %c0_238] : memref<72x128xf32, #tpu.memory_space<vmem>>, vector<1x128xf32>
    %570 = vector.broadcast %568 : vector<1x128xf32> to vector<8x128xf32>
    %571 = arith.mulf %566, %570 : vector<8x128xf32>
    %572 = vector.broadcast %569 : vector<1x128xf32> to vector<8x128xf32>
    %573 = arith.mulf %567, %572 : vector<8x128xf32>
    %574 = arith.subf %571, %573 : vector<8x128xf32>
    %575 = arith.addf %559, %574 : vector<8x128xf32>
    %576 = vector.broadcast %569 : vector<1x128xf32> to vector<8x128xf32>
    %577 = arith.mulf %566, %576 : vector<8x128xf32>
    %578 = vector.broadcast %568 : vector<1x128xf32> to vector<8x128xf32>
    %579 = arith.mulf %567, %578 : vector<8x128xf32>
    %580 = arith.addf %577, %579 : vector<8x128xf32>
    %581 = arith.addf %565, %580 : vector<8x128xf32>
    %c24_239 = arith.constant 24 : index
    %c0_240 = arith.constant 0 : index
    %582 = vector.load %arg1[%c24_239, %c0_240] : memref<192x128xf32, #tpu.memory_space<vmem>>, vector<8x128xf32>
    %c24_241 = arith.constant 24 : index
    %c0_242 = arith.constant 0 : index
    %583 = vector.load %arg2[%c24_241, %c0_242] : memref<192x128xf32, #tpu.memory_space<vmem>>, vector<8x128xf32>
    %c37 = arith.constant 37 : index
    %c0_243 = arith.constant 0 : index
    %584 = vector.load %arg3[%c37, %c0_243] : memref<72x128xf32, #tpu.memory_space<vmem>>, vector<1x128xf32>
    %c37_244 = arith.constant 37 : index
    %c0_245 = arith.constant 0 : index
    %585 = vector.load %arg4[%c37_244, %c0_245] : memref<72x128xf32, #tpu.memory_space<vmem>>, vector<1x128xf32>
    %586 = vector.broadcast %584 : vector<1x128xf32> to vector<8x128xf32>
    %587 = arith.mulf %582, %586 : vector<8x128xf32>
    %588 = vector.broadcast %585 : vector<1x128xf32> to vector<8x128xf32>
    %589 = arith.mulf %583, %588 : vector<8x128xf32>
    %590 = arith.subf %587, %589 : vector<8x128xf32>
    %591 = arith.addf %575, %590 : vector<8x128xf32>
    %592 = vector.broadcast %585 : vector<1x128xf32> to vector<8x128xf32>
    %593 = arith.mulf %582, %592 : vector<8x128xf32>
    %594 = vector.broadcast %584 : vector<1x128xf32> to vector<8x128xf32>
    %595 = arith.mulf %583, %594 : vector<8x128xf32>
    %596 = arith.addf %593, %595 : vector<8x128xf32>
    %597 = arith.addf %581, %596 : vector<8x128xf32>
    %c72_246 = arith.constant 72 : index
    %c0_247 = arith.constant 0 : index
    %598 = vector.load %arg1[%c72_246, %c0_247] : memref<192x128xf32, #tpu.memory_space<vmem>>, vector<8x128xf32>
    %c72_248 = arith.constant 72 : index
    %c0_249 = arith.constant 0 : index
    %599 = vector.load %arg2[%c72_248, %c0_249] : memref<192x128xf32, #tpu.memory_space<vmem>>, vector<8x128xf32>
    %c40_250 = arith.constant 40 : index
    %c0_251 = arith.constant 0 : index
    %600 = vector.load %arg3[%c40_250, %c0_251] : memref<72x128xf32, #tpu.memory_space<vmem>>, vector<1x128xf32>
    %c40_252 = arith.constant 40 : index
    %c0_253 = arith.constant 0 : index
    %601 = vector.load %arg4[%c40_252, %c0_253] : memref<72x128xf32, #tpu.memory_space<vmem>>, vector<1x128xf32>
    %602 = vector.broadcast %600 : vector<1x128xf32> to vector<8x128xf32>
    %603 = arith.mulf %598, %602 : vector<8x128xf32>
    %604 = vector.broadcast %601 : vector<1x128xf32> to vector<8x128xf32>
    %605 = arith.mulf %599, %604 : vector<8x128xf32>
    %606 = arith.subf %603, %605 : vector<8x128xf32>
    %607 = arith.addf %591, %606 : vector<8x128xf32>
    %608 = vector.broadcast %601 : vector<1x128xf32> to vector<8x128xf32>
    %609 = arith.mulf %598, %608 : vector<8x128xf32>
    %610 = vector.broadcast %600 : vector<1x128xf32> to vector<8x128xf32>
    %611 = arith.mulf %599, %610 : vector<8x128xf32>
    %612 = arith.addf %609, %611 : vector<8x128xf32>
    %613 = arith.addf %597, %612 : vector<8x128xf32>
    %c120_254 = arith.constant 120 : index
    %c0_255 = arith.constant 0 : index
    %614 = vector.load %arg1[%c120_254, %c0_255] : memref<192x128xf32, #tpu.memory_space<vmem>>, vector<8x128xf32>
    %c120_256 = arith.constant 120 : index
    %c0_257 = arith.constant 0 : index
    %615 = vector.load %arg2[%c120_256, %c0_257] : memref<192x128xf32, #tpu.memory_space<vmem>>, vector<8x128xf32>
    %c43 = arith.constant 43 : index
    %c0_258 = arith.constant 0 : index
    %616 = vector.load %arg3[%c43, %c0_258] : memref<72x128xf32, #tpu.memory_space<vmem>>, vector<1x128xf32>
    %c43_259 = arith.constant 43 : index
    %c0_260 = arith.constant 0 : index
    %617 = vector.load %arg4[%c43_259, %c0_260] : memref<72x128xf32, #tpu.memory_space<vmem>>, vector<1x128xf32>
    %618 = vector.broadcast %616 : vector<1x128xf32> to vector<8x128xf32>
    %619 = arith.mulf %614, %618 : vector<8x128xf32>
    %620 = vector.broadcast %617 : vector<1x128xf32> to vector<8x128xf32>
    %621 = arith.mulf %615, %620 : vector<8x128xf32>
    %622 = arith.subf %619, %621 : vector<8x128xf32>
    %623 = arith.addf %607, %622 : vector<8x128xf32>
    %624 = vector.broadcast %617 : vector<1x128xf32> to vector<8x128xf32>
    %625 = arith.mulf %614, %624 : vector<8x128xf32>
    %626 = vector.broadcast %616 : vector<1x128xf32> to vector<8x128xf32>
    %627 = arith.mulf %615, %626 : vector<8x128xf32>
    %628 = arith.addf %625, %627 : vector<8x128xf32>
    %629 = arith.addf %613, %628 : vector<8x128xf32>
    %c168_261 = arith.constant 168 : index
    %c0_262 = arith.constant 0 : index
    %630 = vector.load %arg1[%c168_261, %c0_262] : memref<192x128xf32, #tpu.memory_space<vmem>>, vector<8x128xf32>
    %c168_263 = arith.constant 168 : index
    %c0_264 = arith.constant 0 : index
    %631 = vector.load %arg2[%c168_263, %c0_264] : memref<192x128xf32, #tpu.memory_space<vmem>>, vector<8x128xf32>
    %c46 = arith.constant 46 : index
    %c0_265 = arith.constant 0 : index
    %632 = vector.load %arg3[%c46, %c0_265] : memref<72x128xf32, #tpu.memory_space<vmem>>, vector<1x128xf32>
    %c46_266 = arith.constant 46 : index
    %c0_267 = arith.constant 0 : index
    %633 = vector.load %arg4[%c46_266, %c0_267] : memref<72x128xf32, #tpu.memory_space<vmem>>, vector<1x128xf32>
    %634 = vector.broadcast %632 : vector<1x128xf32> to vector<8x128xf32>
    %635 = arith.mulf %630, %634 : vector<8x128xf32>
    %636 = vector.broadcast %633 : vector<1x128xf32> to vector<8x128xf32>
    %637 = arith.mulf %631, %636 : vector<8x128xf32>
    %638 = arith.subf %635, %637 : vector<8x128xf32>
    %639 = arith.addf %623, %638 : vector<8x128xf32>
    %640 = vector.broadcast %633 : vector<1x128xf32> to vector<8x128xf32>
    %641 = arith.mulf %630, %640 : vector<8x128xf32>
    %642 = vector.broadcast %632 : vector<1x128xf32> to vector<8x128xf32>
    %643 = arith.mulf %631, %642 : vector<8x128xf32>
    %644 = arith.addf %641, %643 : vector<8x128xf32>
    %645 = arith.addf %629, %644 : vector<8x128xf32>
    %c32_268 = arith.constant 32 : index
    %c0_269 = arith.constant 0 : index
    %646 = vector.load %arg1[%c32_268, %c0_269] : memref<192x128xf32, #tpu.memory_space<vmem>>, vector<8x128xf32>
    %c32_270 = arith.constant 32 : index
    %c0_271 = arith.constant 0 : index
    %647 = vector.load %arg2[%c32_270, %c0_271] : memref<192x128xf32, #tpu.memory_space<vmem>>, vector<8x128xf32>
    %c49 = arith.constant 49 : index
    %c0_272 = arith.constant 0 : index
    %648 = vector.load %arg3[%c49, %c0_272] : memref<72x128xf32, #tpu.memory_space<vmem>>, vector<1x128xf32>
    %c49_273 = arith.constant 49 : index
    %c0_274 = arith.constant 0 : index
    %649 = vector.load %arg4[%c49_273, %c0_274] : memref<72x128xf32, #tpu.memory_space<vmem>>, vector<1x128xf32>
    %650 = vector.broadcast %648 : vector<1x128xf32> to vector<8x128xf32>
    %651 = arith.mulf %646, %650 : vector<8x128xf32>
    %652 = vector.broadcast %649 : vector<1x128xf32> to vector<8x128xf32>
    %653 = arith.mulf %647, %652 : vector<8x128xf32>
    %654 = arith.subf %651, %653 : vector<8x128xf32>
    %655 = arith.addf %639, %654 : vector<8x128xf32>
    %656 = vector.broadcast %649 : vector<1x128xf32> to vector<8x128xf32>
    %657 = arith.mulf %646, %656 : vector<8x128xf32>
    %658 = vector.broadcast %648 : vector<1x128xf32> to vector<8x128xf32>
    %659 = arith.mulf %647, %658 : vector<8x128xf32>
    %660 = arith.addf %657, %659 : vector<8x128xf32>
    %661 = arith.addf %645, %660 : vector<8x128xf32>
    %c80_275 = arith.constant 80 : index
    %c0_276 = arith.constant 0 : index
    %662 = vector.load %arg1[%c80_275, %c0_276] : memref<192x128xf32, #tpu.memory_space<vmem>>, vector<8x128xf32>
    %c80_277 = arith.constant 80 : index
    %c0_278 = arith.constant 0 : index
    %663 = vector.load %arg2[%c80_277, %c0_278] : memref<192x128xf32, #tpu.memory_space<vmem>>, vector<8x128xf32>
    %c52 = arith.constant 52 : index
    %c0_279 = arith.constant 0 : index
    %664 = vector.load %arg3[%c52, %c0_279] : memref<72x128xf32, #tpu.memory_space<vmem>>, vector<1x128xf32>
    %c52_280 = arith.constant 52 : index
    %c0_281 = arith.constant 0 : index
    %665 = vector.load %arg4[%c52_280, %c0_281] : memref<72x128xf32, #tpu.memory_space<vmem>>, vector<1x128xf32>
    %666 = vector.broadcast %664 : vector<1x128xf32> to vector<8x128xf32>
    %667 = arith.mulf %662, %666 : vector<8x128xf32>
    %668 = vector.broadcast %665 : vector<1x128xf32> to vector<8x128xf32>
    %669 = arith.mulf %663, %668 : vector<8x128xf32>
    %670 = arith.subf %667, %669 : vector<8x128xf32>
    %671 = arith.addf %655, %670 : vector<8x128xf32>
    %672 = vector.broadcast %665 : vector<1x128xf32> to vector<8x128xf32>
    %673 = arith.mulf %662, %672 : vector<8x128xf32>
    %674 = vector.broadcast %664 : vector<1x128xf32> to vector<8x128xf32>
    %675 = arith.mulf %663, %674 : vector<8x128xf32>
    %676 = arith.addf %673, %675 : vector<8x128xf32>
    %677 = arith.addf %661, %676 : vector<8x128xf32>
    %c128_282 = arith.constant 128 : index
    %c0_283 = arith.constant 0 : index
    %678 = vector.load %arg1[%c128_282, %c0_283] : memref<192x128xf32, #tpu.memory_space<vmem>>, vector<8x128xf32>
    %c128_284 = arith.constant 128 : index
    %c0_285 = arith.constant 0 : index
    %679 = vector.load %arg2[%c128_284, %c0_285] : memref<192x128xf32, #tpu.memory_space<vmem>>, vector<8x128xf32>
    %c55 = arith.constant 55 : index
    %c0_286 = arith.constant 0 : index
    %680 = vector.load %arg3[%c55, %c0_286] : memref<72x128xf32, #tpu.memory_space<vmem>>, vector<1x128xf32>
    %c55_287 = arith.constant 55 : index
    %c0_288 = arith.constant 0 : index
    %681 = vector.load %arg4[%c55_287, %c0_288] : memref<72x128xf32, #tpu.memory_space<vmem>>, vector<1x128xf32>
    %682 = vector.broadcast %680 : vector<1x128xf32> to vector<8x128xf32>
    %683 = arith.mulf %678, %682 : vector<8x128xf32>
    %684 = vector.broadcast %681 : vector<1x128xf32> to vector<8x128xf32>
    %685 = arith.mulf %679, %684 : vector<8x128xf32>
    %686 = arith.subf %683, %685 : vector<8x128xf32>
    %687 = arith.addf %671, %686 : vector<8x128xf32>
    %688 = vector.broadcast %681 : vector<1x128xf32> to vector<8x128xf32>
    %689 = arith.mulf %678, %688 : vector<8x128xf32>
    %690 = vector.broadcast %680 : vector<1x128xf32> to vector<8x128xf32>
    %691 = arith.mulf %679, %690 : vector<8x128xf32>
    %692 = arith.addf %689, %691 : vector<8x128xf32>
    %693 = arith.addf %677, %692 : vector<8x128xf32>
    %c176_289 = arith.constant 176 : index
    %c0_290 = arith.constant 0 : index
    %694 = vector.load %arg1[%c176_289, %c0_290] : memref<192x128xf32, #tpu.memory_space<vmem>>, vector<8x128xf32>
    %c176_291 = arith.constant 176 : index
    %c0_292 = arith.constant 0 : index
    %695 = vector.load %arg2[%c176_291, %c0_292] : memref<192x128xf32, #tpu.memory_space<vmem>>, vector<8x128xf32>
    %c58 = arith.constant 58 : index
    %c0_293 = arith.constant 0 : index
    %696 = vector.load %arg3[%c58, %c0_293] : memref<72x128xf32, #tpu.memory_space<vmem>>, vector<1x128xf32>
    %c58_294 = arith.constant 58 : index
    %c0_295 = arith.constant 0 : index
    %697 = vector.load %arg4[%c58_294, %c0_295] : memref<72x128xf32, #tpu.memory_space<vmem>>, vector<1x128xf32>
    %698 = vector.broadcast %696 : vector<1x128xf32> to vector<8x128xf32>
    %699 = arith.mulf %694, %698 : vector<8x128xf32>
    %700 = vector.broadcast %697 : vector<1x128xf32> to vector<8x128xf32>
    %701 = arith.mulf %695, %700 : vector<8x128xf32>
    %702 = arith.subf %699, %701 : vector<8x128xf32>
    %703 = arith.addf %687, %702 : vector<8x128xf32>
    %704 = vector.broadcast %697 : vector<1x128xf32> to vector<8x128xf32>
    %705 = arith.mulf %694, %704 : vector<8x128xf32>
    %706 = vector.broadcast %696 : vector<1x128xf32> to vector<8x128xf32>
    %707 = arith.mulf %695, %706 : vector<8x128xf32>
    %708 = arith.addf %705, %707 : vector<8x128xf32>
    %709 = arith.addf %693, %708 : vector<8x128xf32>
    %c40_296 = arith.constant 40 : index
    %c0_297 = arith.constant 0 : index
    %710 = vector.load %arg1[%c40_296, %c0_297] : memref<192x128xf32, #tpu.memory_space<vmem>>, vector<8x128xf32>
    %c40_298 = arith.constant 40 : index
    %c0_299 = arith.constant 0 : index
    %711 = vector.load %arg2[%c40_298, %c0_299] : memref<192x128xf32, #tpu.memory_space<vmem>>, vector<8x128xf32>
    %c61 = arith.constant 61 : index
    %c0_300 = arith.constant 0 : index
    %712 = vector.load %arg3[%c61, %c0_300] : memref<72x128xf32, #tpu.memory_space<vmem>>, vector<1x128xf32>
    %c61_301 = arith.constant 61 : index
    %c0_302 = arith.constant 0 : index
    %713 = vector.load %arg4[%c61_301, %c0_302] : memref<72x128xf32, #tpu.memory_space<vmem>>, vector<1x128xf32>
    %714 = vector.broadcast %712 : vector<1x128xf32> to vector<8x128xf32>
    %715 = arith.mulf %710, %714 : vector<8x128xf32>
    %716 = vector.broadcast %713 : vector<1x128xf32> to vector<8x128xf32>
    %717 = arith.mulf %711, %716 : vector<8x128xf32>
    %718 = arith.subf %715, %717 : vector<8x128xf32>
    %719 = arith.addf %703, %718 : vector<8x128xf32>
    %720 = vector.broadcast %713 : vector<1x128xf32> to vector<8x128xf32>
    %721 = arith.mulf %710, %720 : vector<8x128xf32>
    %722 = vector.broadcast %712 : vector<1x128xf32> to vector<8x128xf32>
    %723 = arith.mulf %711, %722 : vector<8x128xf32>
    %724 = arith.addf %721, %723 : vector<8x128xf32>
    %725 = arith.addf %709, %724 : vector<8x128xf32>
    %c88_303 = arith.constant 88 : index
    %c0_304 = arith.constant 0 : index
    %726 = vector.load %arg1[%c88_303, %c0_304] : memref<192x128xf32, #tpu.memory_space<vmem>>, vector<8x128xf32>
    %c88_305 = arith.constant 88 : index
    %c0_306 = arith.constant 0 : index
    %727 = vector.load %arg2[%c88_305, %c0_306] : memref<192x128xf32, #tpu.memory_space<vmem>>, vector<8x128xf32>
    %c64_307 = arith.constant 64 : index
    %c0_308 = arith.constant 0 : index
    %728 = vector.load %arg3[%c64_307, %c0_308] : memref<72x128xf32, #tpu.memory_space<vmem>>, vector<1x128xf32>
    %c64_309 = arith.constant 64 : index
    %c0_310 = arith.constant 0 : index
    %729 = vector.load %arg4[%c64_309, %c0_310] : memref<72x128xf32, #tpu.memory_space<vmem>>, vector<1x128xf32>
    %730 = vector.broadcast %728 : vector<1x128xf32> to vector<8x128xf32>
    %731 = arith.mulf %726, %730 : vector<8x128xf32>
    %732 = vector.broadcast %729 : vector<1x128xf32> to vector<8x128xf32>
    %733 = arith.mulf %727, %732 : vector<8x128xf32>
    %734 = arith.subf %731, %733 : vector<8x128xf32>
    %735 = arith.addf %719, %734 : vector<8x128xf32>
    %736 = vector.broadcast %729 : vector<1x128xf32> to vector<8x128xf32>
    %737 = arith.mulf %726, %736 : vector<8x128xf32>
    %738 = vector.broadcast %728 : vector<1x128xf32> to vector<8x128xf32>
    %739 = arith.mulf %727, %738 : vector<8x128xf32>
    %740 = arith.addf %737, %739 : vector<8x128xf32>
    %741 = arith.addf %725, %740 : vector<8x128xf32>
    %c136_311 = arith.constant 136 : index
    %c0_312 = arith.constant 0 : index
    %742 = vector.load %arg1[%c136_311, %c0_312] : memref<192x128xf32, #tpu.memory_space<vmem>>, vector<8x128xf32>
    %c136_313 = arith.constant 136 : index
    %c0_314 = arith.constant 0 : index
    %743 = vector.load %arg2[%c136_313, %c0_314] : memref<192x128xf32, #tpu.memory_space<vmem>>, vector<8x128xf32>
    %c67 = arith.constant 67 : index
    %c0_315 = arith.constant 0 : index
    %744 = vector.load %arg3[%c67, %c0_315] : memref<72x128xf32, #tpu.memory_space<vmem>>, vector<1x128xf32>
    %c67_316 = arith.constant 67 : index
    %c0_317 = arith.constant 0 : index
    %745 = vector.load %arg4[%c67_316, %c0_317] : memref<72x128xf32, #tpu.memory_space<vmem>>, vector<1x128xf32>
    %746 = vector.broadcast %744 : vector<1x128xf32> to vector<8x128xf32>
    %747 = arith.mulf %742, %746 : vector<8x128xf32>
    %748 = vector.broadcast %745 : vector<1x128xf32> to vector<8x128xf32>
    %749 = arith.mulf %743, %748 : vector<8x128xf32>
    %750 = arith.subf %747, %749 : vector<8x128xf32>
    %751 = arith.addf %735, %750 : vector<8x128xf32>
    %752 = vector.broadcast %745 : vector<1x128xf32> to vector<8x128xf32>
    %753 = arith.mulf %742, %752 : vector<8x128xf32>
    %754 = vector.broadcast %744 : vector<1x128xf32> to vector<8x128xf32>
    %755 = arith.mulf %743, %754 : vector<8x128xf32>
    %756 = arith.addf %753, %755 : vector<8x128xf32>
    %757 = arith.addf %741, %756 : vector<8x128xf32>
    %c184_318 = arith.constant 184 : index
    %c0_319 = arith.constant 0 : index
    %758 = vector.load %arg1[%c184_318, %c0_319] : memref<192x128xf32, #tpu.memory_space<vmem>>, vector<8x128xf32>
    %c184_320 = arith.constant 184 : index
    %c0_321 = arith.constant 0 : index
    %759 = vector.load %arg2[%c184_320, %c0_321] : memref<192x128xf32, #tpu.memory_space<vmem>>, vector<8x128xf32>
    %c70 = arith.constant 70 : index
    %c0_322 = arith.constant 0 : index
    %760 = vector.load %arg3[%c70, %c0_322] : memref<72x128xf32, #tpu.memory_space<vmem>>, vector<1x128xf32>
    %c70_323 = arith.constant 70 : index
    %c0_324 = arith.constant 0 : index
    %761 = vector.load %arg4[%c70_323, %c0_324] : memref<72x128xf32, #tpu.memory_space<vmem>>, vector<1x128xf32>
    %762 = vector.broadcast %760 : vector<1x128xf32> to vector<8x128xf32>
    %763 = arith.mulf %758, %762 : vector<8x128xf32>
    %764 = vector.broadcast %761 : vector<1x128xf32> to vector<8x128xf32>
    %765 = arith.mulf %759, %764 : vector<8x128xf32>
    %766 = arith.subf %763, %765 : vector<8x128xf32>
    %767 = arith.addf %751, %766 : vector<8x128xf32>
    %768 = vector.broadcast %761 : vector<1x128xf32> to vector<8x128xf32>
    %769 = arith.mulf %758, %768 : vector<8x128xf32>
    %770 = vector.broadcast %760 : vector<1x128xf32> to vector<8x128xf32>
    %771 = arith.mulf %759, %770 : vector<8x128xf32>
    %772 = arith.addf %769, %771 : vector<8x128xf32>
    %773 = arith.addf %757, %772 : vector<8x128xf32>
    %c8_325 = arith.constant 8 : index
    %c0_326 = arith.constant 0 : index
    %774 = vector.load %arg5[%c8_325, %c0_326] : memref<24x128xf32, #tpu.memory_space<vmem>>, vector<8x128xf32>
    tpu.vector_store %arg5[%c8_325, %c0_326], %767 {strides = array<i32>} : memref<24x128xf32, #tpu.memory_space<vmem>>, vector<8x128xf32>,
    %c8_327 = arith.constant 8 : index
    %c0_328 = arith.constant 0 : index
    %775 = vector.load %arg6[%c8_327, %c0_328] : memref<24x128xf32, #tpu.memory_space<vmem>>, vector<8x128xf32>
    tpu.vector_store %arg6[%c8_327, %c0_328], %773 {strides = array<i32>} : memref<24x128xf32, #tpu.memory_space<vmem>>, vector<8x128xf32>,
    %cst_329 = arith.constant 0.000000e+00 : f32
    %776 = vector.broadcast %cst_329 : f32 to vector<8x128xf32>
    %cst_330 = arith.constant 0.000000e+00 : f32
    %777 = vector.broadcast %cst_330 : f32 to vector<8x128xf32>
    %c0_331 = arith.constant 0 : index
    %c0_332 = arith.constant 0 : index
    %778 = vector.load %arg1[%c0_331, %c0_332] : memref<192x128xf32, #tpu.memory_space<vmem>>, vector<8x128xf32>
    %c0_333 = arith.constant 0 : index
    %c0_334 = arith.constant 0 : index
    %779 = vector.load %arg2[%c0_333, %c0_334] : memref<192x128xf32, #tpu.memory_space<vmem>>, vector<8x128xf32>
    %c2 = arith.constant 2 : index
    %c0_335 = arith.constant 0 : index
    %780 = vector.load %arg3[%c2, %c0_335] : memref<72x128xf32, #tpu.memory_space<vmem>>, vector<1x128xf32>
    %c2_336 = arith.constant 2 : index
    %c0_337 = arith.constant 0 : index
    %781 = vector.load %arg4[%c2_336, %c0_337] : memref<72x128xf32, #tpu.memory_space<vmem>>, vector<1x128xf32>
    %782 = vector.broadcast %780 : vector<1x128xf32> to vector<8x128xf32>
    %783 = arith.mulf %778, %782 : vector<8x128xf32>
    %784 = vector.broadcast %781 : vector<1x128xf32> to vector<8x128xf32>
    %785 = arith.mulf %779, %784 : vector<8x128xf32>
    %786 = arith.subf %783, %785 : vector<8x128xf32>
    %787 = arith.addf %776, %786 : vector<8x128xf32>
    %788 = vector.broadcast %781 : vector<1x128xf32> to vector<8x128xf32>
    %789 = arith.mulf %778, %788 : vector<8x128xf32>
    %790 = vector.broadcast %780 : vector<1x128xf32> to vector<8x128xf32>
    %791 = arith.mulf %779, %790 : vector<8x128xf32>
    %792 = arith.addf %789, %791 : vector<8x128xf32>
    %793 = arith.addf %777, %792 : vector<8x128xf32>
    %c48_338 = arith.constant 48 : index
    %c0_339 = arith.constant 0 : index
    %794 = vector.load %arg1[%c48_338, %c0_339] : memref<192x128xf32, #tpu.memory_space<vmem>>, vector<8x128xf32>
    %c48_340 = arith.constant 48 : index
    %c0_341 = arith.constant 0 : index
    %795 = vector.load %arg2[%c48_340, %c0_341] : memref<192x128xf32, #tpu.memory_space<vmem>>, vector<8x128xf32>
    %c5 = arith.constant 5 : index
    %c0_342 = arith.constant 0 : index
    %796 = vector.load %arg3[%c5, %c0_342] : memref<72x128xf32, #tpu.memory_space<vmem>>, vector<1x128xf32>
    %c5_343 = arith.constant 5 : index
    %c0_344 = arith.constant 0 : index
    %797 = vector.load %arg4[%c5_343, %c0_344] : memref<72x128xf32, #tpu.memory_space<vmem>>, vector<1x128xf32>
    %798 = vector.broadcast %796 : vector<1x128xf32> to vector<8x128xf32>
    %799 = arith.mulf %794, %798 : vector<8x128xf32>
    %800 = vector.broadcast %797 : vector<1x128xf32> to vector<8x128xf32>
    %801 = arith.mulf %795, %800 : vector<8x128xf32>
    %802 = arith.subf %799, %801 : vector<8x128xf32>
    %803 = arith.addf %787, %802 : vector<8x128xf32>
    %804 = vector.broadcast %797 : vector<1x128xf32> to vector<8x128xf32>
    %805 = arith.mulf %794, %804 : vector<8x128xf32>
    %806 = vector.broadcast %796 : vector<1x128xf32> to vector<8x128xf32>
    %807 = arith.mulf %795, %806 : vector<8x128xf32>
    %808 = arith.addf %805, %807 : vector<8x128xf32>
    %809 = arith.addf %793, %808 : vector<8x128xf32>
    %c96_345 = arith.constant 96 : index
    %c0_346 = arith.constant 0 : index
    %810 = vector.load %arg1[%c96_345, %c0_346] : memref<192x128xf32, #tpu.memory_space<vmem>>, vector<8x128xf32>
    %c96_347 = arith.constant 96 : index
    %c0_348 = arith.constant 0 : index
    %811 = vector.load %arg2[%c96_347, %c0_348] : memref<192x128xf32, #tpu.memory_space<vmem>>, vector<8x128xf32>
    %c8_349 = arith.constant 8 : index
    %c0_350 = arith.constant 0 : index
    %812 = vector.load %arg3[%c8_349, %c0_350] : memref<72x128xf32, #tpu.memory_space<vmem>>, vector<1x128xf32>
    %c8_351 = arith.constant 8 : index
    %c0_352 = arith.constant 0 : index
    %813 = vector.load %arg4[%c8_351, %c0_352] : memref<72x128xf32, #tpu.memory_space<vmem>>, vector<1x128xf32>
    %814 = vector.broadcast %812 : vector<1x128xf32> to vector<8x128xf32>
    %815 = arith.mulf %810, %814 : vector<8x128xf32>
    %816 = vector.broadcast %813 : vector<1x128xf32> to vector<8x128xf32>
    %817 = arith.mulf %811, %816 : vector<8x128xf32>
    %818 = arith.subf %815, %817 : vector<8x128xf32>
    %819 = arith.addf %803, %818 : vector<8x128xf32>
    %820 = vector.broadcast %813 : vector<1x128xf32> to vector<8x128xf32>
    %821 = arith.mulf %810, %820 : vector<8x128xf32>
    %822 = vector.broadcast %812 : vector<1x128xf32> to vector<8x128xf32>
    %823 = arith.mulf %811, %822 : vector<8x128xf32>
    %824 = arith.addf %821, %823 : vector<8x128xf32>
    %825 = arith.addf %809, %824 : vector<8x128xf32>
    %c144_353 = arith.constant 144 : index
    %c0_354 = arith.constant 0 : index
    %826 = vector.load %arg1[%c144_353, %c0_354] : memref<192x128xf32, #tpu.memory_space<vmem>>, vector<8x128xf32>
    %c144_355 = arith.constant 144 : index
    %c0_356 = arith.constant 0 : index
    %827 = vector.load %arg2[%c144_355, %c0_356] : memref<192x128xf32, #tpu.memory_space<vmem>>, vector<8x128xf32>
    %c11 = arith.constant 11 : index
    %c0_357 = arith.constant 0 : index
    %828 = vector.load %arg3[%c11, %c0_357] : memref<72x128xf32, #tpu.memory_space<vmem>>, vector<1x128xf32>
    %c11_358 = arith.constant 11 : index
    %c0_359 = arith.constant 0 : index
    %829 = vector.load %arg4[%c11_358, %c0_359] : memref<72x128xf32, #tpu.memory_space<vmem>>, vector<1x128xf32>
    %830 = vector.broadcast %828 : vector<1x128xf32> to vector<8x128xf32>
    %831 = arith.mulf %826, %830 : vector<8x128xf32>
    %832 = vector.broadcast %829 : vector<1x128xf32> to vector<8x128xf32>
    %833 = arith.mulf %827, %832 : vector<8x128xf32>
    %834 = arith.subf %831, %833 : vector<8x128xf32>
    %835 = arith.addf %819, %834 : vector<8x128xf32>
    %836 = vector.broadcast %829 : vector<1x128xf32> to vector<8x128xf32>
    %837 = arith.mulf %826, %836 : vector<8x128xf32>
    %838 = vector.broadcast %828 : vector<1x128xf32> to vector<8x128xf32>
    %839 = arith.mulf %827, %838 : vector<8x128xf32>
    %840 = arith.addf %837, %839 : vector<8x128xf32>
    %841 = arith.addf %825, %840 : vector<8x128xf32>
    %c8_360 = arith.constant 8 : index
    %c0_361 = arith.constant 0 : index
    %842 = vector.load %arg1[%c8_360, %c0_361] : memref<192x128xf32, #tpu.memory_space<vmem>>, vector<8x128xf32>
    %c8_362 = arith.constant 8 : index
    %c0_363 = arith.constant 0 : index
    %843 = vector.load %arg2[%c8_362, %c0_363] : memref<192x128xf32, #tpu.memory_space<vmem>>, vector<8x128xf32>
    %c14 = arith.constant 14 : index
    %c0_364 = arith.constant 0 : index
    %844 = vector.load %arg3[%c14, %c0_364] : memref<72x128xf32, #tpu.memory_space<vmem>>, vector<1x128xf32>
    %c14_365 = arith.constant 14 : index
    %c0_366 = arith.constant 0 : index
    %845 = vector.load %arg4[%c14_365, %c0_366] : memref<72x128xf32, #tpu.memory_space<vmem>>, vector<1x128xf32>
    %846 = vector.broadcast %844 : vector<1x128xf32> to vector<8x128xf32>
    %847 = arith.mulf %842, %846 : vector<8x128xf32>
    %848 = vector.broadcast %845 : vector<1x128xf32> to vector<8x128xf32>
    %849 = arith.mulf %843, %848 : vector<8x128xf32>
    %850 = arith.subf %847, %849 : vector<8x128xf32>
    %851 = arith.addf %835, %850 : vector<8x128xf32>
    %852 = vector.broadcast %845 : vector<1x128xf32> to vector<8x128xf32>
    %853 = arith.mulf %842, %852 : vector<8x128xf32>
    %854 = vector.broadcast %844 : vector<1x128xf32> to vector<8x128xf32>
    %855 = arith.mulf %843, %854 : vector<8x128xf32>
    %856 = arith.addf %853, %855 : vector<8x128xf32>
    %857 = arith.addf %841, %856 : vector<8x128xf32>
    %c56_367 = arith.constant 56 : index
    %c0_368 = arith.constant 0 : index
    %858 = vector.load %arg1[%c56_367, %c0_368] : memref<192x128xf32, #tpu.memory_space<vmem>>, vector<8x128xf32>
    %c56_369 = arith.constant 56 : index
    %c0_370 = arith.constant 0 : index
    %859 = vector.load %arg2[%c56_369, %c0_370] : memref<192x128xf32, #tpu.memory_space<vmem>>, vector<8x128xf32>
    %c17 = arith.constant 17 : index
    %c0_371 = arith.constant 0 : index
    %860 = vector.load %arg3[%c17, %c0_371] : memref<72x128xf32, #tpu.memory_space<vmem>>, vector<1x128xf32>
    %c17_372 = arith.constant 17 : index
    %c0_373 = arith.constant 0 : index
    %861 = vector.load %arg4[%c17_372, %c0_373] : memref<72x128xf32, #tpu.memory_space<vmem>>, vector<1x128xf32>
    %862 = vector.broadcast %860 : vector<1x128xf32> to vector<8x128xf32>
    %863 = arith.mulf %858, %862 : vector<8x128xf32>
    %864 = vector.broadcast %861 : vector<1x128xf32> to vector<8x128xf32>
    %865 = arith.mulf %859, %864 : vector<8x128xf32>
    %866 = arith.subf %863, %865 : vector<8x128xf32>
    %867 = arith.addf %851, %866 : vector<8x128xf32>
    %868 = vector.broadcast %861 : vector<1x128xf32> to vector<8x128xf32>
    %869 = arith.mulf %858, %868 : vector<8x128xf32>
    %870 = vector.broadcast %860 : vector<1x128xf32> to vector<8x128xf32>
    %871 = arith.mulf %859, %870 : vector<8x128xf32>
    %872 = arith.addf %869, %871 : vector<8x128xf32>
    %873 = arith.addf %857, %872 : vector<8x128xf32>
    %c104_374 = arith.constant 104 : index
    %c0_375 = arith.constant 0 : index
    %874 = vector.load %arg1[%c104_374, %c0_375] : memref<192x128xf32, #tpu.memory_space<vmem>>, vector<8x128xf32>
    %c104_376 = arith.constant 104 : index
    %c0_377 = arith.constant 0 : index
    %875 = vector.load %arg2[%c104_376, %c0_377] : memref<192x128xf32, #tpu.memory_space<vmem>>, vector<8x128xf32>
    %c20 = arith.constant 20 : index
    %c0_378 = arith.constant 0 : index
    %876 = vector.load %arg3[%c20, %c0_378] : memref<72x128xf32, #tpu.memory_space<vmem>>, vector<1x128xf32>
    %c20_379 = arith.constant 20 : index
    %c0_380 = arith.constant 0 : index
    %877 = vector.load %arg4[%c20_379, %c0_380] : memref<72x128xf32, #tpu.memory_space<vmem>>, vector<1x128xf32>
    %878 = vector.broadcast %876 : vector<1x128xf32> to vector<8x128xf32>
    %879 = arith.mulf %874, %878 : vector<8x128xf32>
    %880 = vector.broadcast %877 : vector<1x128xf32> to vector<8x128xf32>
    %881 = arith.mulf %875, %880 : vector<8x128xf32>
    %882 = arith.subf %879, %881 : vector<8x128xf32>
    %883 = arith.addf %867, %882 : vector<8x128xf32>
    %884 = vector.broadcast %877 : vector<1x128xf32> to vector<8x128xf32>
    %885 = arith.mulf %874, %884 : vector<8x128xf32>
    %886 = vector.broadcast %876 : vector<1x128xf32> to vector<8x128xf32>
    %887 = arith.mulf %875, %886 : vector<8x128xf32>
    %888 = arith.addf %885, %887 : vector<8x128xf32>
    %889 = arith.addf %873, %888 : vector<8x128xf32>
    %c152_381 = arith.constant 152 : index
    %c0_382 = arith.constant 0 : index
    %890 = vector.load %arg1[%c152_381, %c0_382] : memref<192x128xf32, #tpu.memory_space<vmem>>, vector<8x128xf32>
    %c152_383 = arith.constant 152 : index
    %c0_384 = arith.constant 0 : index
    %891 = vector.load %arg2[%c152_383, %c0_384] : memref<192x128xf32, #tpu.memory_space<vmem>>, vector<8x128xf32>
    %c23 = arith.constant 23 : index
    %c0_385 = arith.constant 0 : index
    %892 = vector.load %arg3[%c23, %c0_385] : memref<72x128xf32, #tpu.memory_space<vmem>>, vector<1x128xf32>
    %c23_386 = arith.constant 23 : index
    %c0_387 = arith.constant 0 : index
    %893 = vector.load %arg4[%c23_386, %c0_387] : memref<72x128xf32, #tpu.memory_space<vmem>>, vector<1x128xf32>
    %894 = vector.broadcast %892 : vector<1x128xf32> to vector<8x128xf32>
    %895 = arith.mulf %890, %894 : vector<8x128xf32>
    %896 = vector.broadcast %893 : vector<1x128xf32> to vector<8x128xf32>
    %897 = arith.mulf %891, %896 : vector<8x128xf32>
    %898 = arith.subf %895, %897 : vector<8x128xf32>
    %899 = arith.addf %883, %898 : vector<8x128xf32>
    %900 = vector.broadcast %893 : vector<1x128xf32> to vector<8x128xf32>
    %901 = arith.mulf %890, %900 : vector<8x128xf32>
    %902 = vector.broadcast %892 : vector<1x128xf32> to vector<8x128xf32>
    %903 = arith.mulf %891, %902 : vector<8x128xf32>
    %904 = arith.addf %901, %903 : vector<8x128xf32>
    %905 = arith.addf %889, %904 : vector<8x128xf32>
    %c16_388 = arith.constant 16 : index
    %c0_389 = arith.constant 0 : index
    %906 = vector.load %arg1[%c16_388, %c0_389] : memref<192x128xf32, #tpu.memory_space<vmem>>, vector<8x128xf32>
    %c16_390 = arith.constant 16 : index
    %c0_391 = arith.constant 0 : index
    %907 = vector.load %arg2[%c16_390, %c0_391] : memref<192x128xf32, #tpu.memory_space<vmem>>, vector<8x128xf32>
    %c26 = arith.constant 26 : index
    %c0_392 = arith.constant 0 : index
    %908 = vector.load %arg3[%c26, %c0_392] : memref<72x128xf32, #tpu.memory_space<vmem>>, vector<1x128xf32>
    %c26_393 = arith.constant 26 : index
    %c0_394 = arith.constant 0 : index
    %909 = vector.load %arg4[%c26_393, %c0_394] : memref<72x128xf32, #tpu.memory_space<vmem>>, vector<1x128xf32>
    %910 = vector.broadcast %908 : vector<1x128xf32> to vector<8x128xf32>
    %911 = arith.mulf %906, %910 : vector<8x128xf32>
    %912 = vector.broadcast %909 : vector<1x128xf32> to vector<8x128xf32>
    %913 = arith.mulf %907, %912 : vector<8x128xf32>
    %914 = arith.subf %911, %913 : vector<8x128xf32>
    %915 = arith.addf %899, %914 : vector<8x128xf32>
    %916 = vector.broadcast %909 : vector<1x128xf32> to vector<8x128xf32>
    %917 = arith.mulf %906, %916 : vector<8x128xf32>
    %918 = vector.broadcast %908 : vector<1x128xf32> to vector<8x128xf32>
    %919 = arith.mulf %907, %918 : vector<8x128xf32>
    %920 = arith.addf %917, %919 : vector<8x128xf32>
    %921 = arith.addf %905, %920 : vector<8x128xf32>
    %c64_395 = arith.constant 64 : index
    %c0_396 = arith.constant 0 : index
    %922 = vector.load %arg1[%c64_395, %c0_396] : memref<192x128xf32, #tpu.memory_space<vmem>>, vector<8x128xf32>
    %c64_397 = arith.constant 64 : index
    %c0_398 = arith.constant 0 : index
    %923 = vector.load %arg2[%c64_397, %c0_398] : memref<192x128xf32, #tpu.memory_space<vmem>>, vector<8x128xf32>
    %c29 = arith.constant 29 : index
    %c0_399 = arith.constant 0 : index
    %924 = vector.load %arg3[%c29, %c0_399] : memref<72x128xf32, #tpu.memory_space<vmem>>, vector<1x128xf32>
    %c29_400 = arith.constant 29 : index
    %c0_401 = arith.constant 0 : index
    %925 = vector.load %arg4[%c29_400, %c0_401] : memref<72x128xf32, #tpu.memory_space<vmem>>, vector<1x128xf32>
    %926 = vector.broadcast %924 : vector<1x128xf32> to vector<8x128xf32>
    %927 = arith.mulf %922, %926 : vector<8x128xf32>
    %928 = vector.broadcast %925 : vector<1x128xf32> to vector<8x128xf32>
    %929 = arith.mulf %923, %928 : vector<8x128xf32>
    %930 = arith.subf %927, %929 : vector<8x128xf32>
    %931 = arith.addf %915, %930 : vector<8x128xf32>
    %932 = vector.broadcast %925 : vector<1x128xf32> to vector<8x128xf32>
    %933 = arith.mulf %922, %932 : vector<8x128xf32>
    %934 = vector.broadcast %924 : vector<1x128xf32> to vector<8x128xf32>
    %935 = arith.mulf %923, %934 : vector<8x128xf32>
    %936 = arith.addf %933, %935 : vector<8x128xf32>
    %937 = arith.addf %921, %936 : vector<8x128xf32>
    %c112_402 = arith.constant 112 : index
    %c0_403 = arith.constant 0 : index
    %938 = vector.load %arg1[%c112_402, %c0_403] : memref<192x128xf32, #tpu.memory_space<vmem>>, vector<8x128xf32>
    %c112_404 = arith.constant 112 : index
    %c0_405 = arith.constant 0 : index
    %939 = vector.load %arg2[%c112_404, %c0_405] : memref<192x128xf32, #tpu.memory_space<vmem>>, vector<8x128xf32>
    %c32_406 = arith.constant 32 : index
    %c0_407 = arith.constant 0 : index
    %940 = vector.load %arg3[%c32_406, %c0_407] : memref<72x128xf32, #tpu.memory_space<vmem>>, vector<1x128xf32>
    %c32_408 = arith.constant 32 : index
    %c0_409 = arith.constant 0 : index
    %941 = vector.load %arg4[%c32_408, %c0_409] : memref<72x128xf32, #tpu.memory_space<vmem>>, vector<1x128xf32>
    %942 = vector.broadcast %940 : vector<1x128xf32> to vector<8x128xf32>
    %943 = arith.mulf %938, %942 : vector<8x128xf32>
    %944 = vector.broadcast %941 : vector<1x128xf32> to vector<8x128xf32>
    %945 = arith.mulf %939, %944 : vector<8x128xf32>
    %946 = arith.subf %943, %945 : vector<8x128xf32>
    %947 = arith.addf %931, %946 : vector<8x128xf32>
    %948 = vector.broadcast %941 : vector<1x128xf32> to vector<8x128xf32>
    %949 = arith.mulf %938, %948 : vector<8x128xf32>
    %950 = vector.broadcast %940 : vector<1x128xf32> to vector<8x128xf32>
    %951 = arith.mulf %939, %950 : vector<8x128xf32>
    %952 = arith.addf %949, %951 : vector<8x128xf32>
    %953 = arith.addf %937, %952 : vector<8x128xf32>
    %c160_410 = arith.constant 160 : index
    %c0_411 = arith.constant 0 : index
    %954 = vector.load %arg1[%c160_410, %c0_411] : memref<192x128xf32, #tpu.memory_space<vmem>>, vector<8x128xf32>
    %c160_412 = arith.constant 160 : index
    %c0_413 = arith.constant 0 : index
    %955 = vector.load %arg2[%c160_412, %c0_413] : memref<192x128xf32, #tpu.memory_space<vmem>>, vector<8x128xf32>
    %c35 = arith.constant 35 : index
    %c0_414 = arith.constant 0 : index
    %956 = vector.load %arg3[%c35, %c0_414] : memref<72x128xf32, #tpu.memory_space<vmem>>, vector<1x128xf32>
    %c35_415 = arith.constant 35 : index
    %c0_416 = arith.constant 0 : index
    %957 = vector.load %arg4[%c35_415, %c0_416] : memref<72x128xf32, #tpu.memory_space<vmem>>, vector<1x128xf32>
    %958 = vector.broadcast %956 : vector<1x128xf32> to vector<8x128xf32>
    %959 = arith.mulf %954, %958 : vector<8x128xf32>
    %960 = vector.broadcast %957 : vector<1x128xf32> to vector<8x128xf32>
    %961 = arith.mulf %955, %960 : vector<8x128xf32>
    %962 = arith.subf %959, %961 : vector<8x128xf32>
    %963 = arith.addf %947, %962 : vector<8x128xf32>
    %964 = vector.broadcast %957 : vector<1x128xf32> to vector<8x128xf32>
    %965 = arith.mulf %954, %964 : vector<8x128xf32>
    %966 = vector.broadcast %956 : vector<1x128xf32> to vector<8x128xf32>
    %967 = arith.mulf %955, %966 : vector<8x128xf32>
    %968 = arith.addf %965, %967 : vector<8x128xf32>
    %969 = arith.addf %953, %968 : vector<8x128xf32>
    %c24_417 = arith.constant 24 : index
    %c0_418 = arith.constant 0 : index
    %970 = vector.load %arg1[%c24_417, %c0_418] : memref<192x128xf32, #tpu.memory_space<vmem>>, vector<8x128xf32>
    %c24_419 = arith.constant 24 : index
    %c0_420 = arith.constant 0 : index
    %971 = vector.load %arg2[%c24_419, %c0_420] : memref<192x128xf32, #tpu.memory_space<vmem>>, vector<8x128xf32>
    %c38 = arith.constant 38 : index
    %c0_421 = arith.constant 0 : index
    %972 = vector.load %arg3[%c38, %c0_421] : memref<72x128xf32, #tpu.memory_space<vmem>>, vector<1x128xf32>
    %c38_422 = arith.constant 38 : index
    %c0_423 = arith.constant 0 : index
    %973 = vector.load %arg4[%c38_422, %c0_423] : memref<72x128xf32, #tpu.memory_space<vmem>>, vector<1x128xf32>
    %974 = vector.broadcast %972 : vector<1x128xf32> to vector<8x128xf32>
    %975 = arith.mulf %970, %974 : vector<8x128xf32>
    %976 = vector.broadcast %973 : vector<1x128xf32> to vector<8x128xf32>
    %977 = arith.mulf %971, %976 : vector<8x128xf32>
    %978 = arith.subf %975, %977 : vector<8x128xf32>
    %979 = arith.addf %963, %978 : vector<8x128xf32>
    %980 = vector.broadcast %973 : vector<1x128xf32> to vector<8x128xf32>
    %981 = arith.mulf %970, %980 : vector<8x128xf32>
    %982 = vector.broadcast %972 : vector<1x128xf32> to vector<8x128xf32>
    %983 = arith.mulf %971, %982 : vector<8x128xf32>
    %984 = arith.addf %981, %983 : vector<8x128xf32>
    %985 = arith.addf %969, %984 : vector<8x128xf32>
    %c72_424 = arith.constant 72 : index
    %c0_425 = arith.constant 0 : index
    %986 = vector.load %arg1[%c72_424, %c0_425] : memref<192x128xf32, #tpu.memory_space<vmem>>, vector<8x128xf32>
    %c72_426 = arith.constant 72 : index
    %c0_427 = arith.constant 0 : index
    %987 = vector.load %arg2[%c72_426, %c0_427] : memref<192x128xf32, #tpu.memory_space<vmem>>, vector<8x128xf32>
    %c41 = arith.constant 41 : index
    %c0_428 = arith.constant 0 : index
    %988 = vector.load %arg3[%c41, %c0_428] : memref<72x128xf32, #tpu.memory_space<vmem>>, vector<1x128xf32>
    %c41_429 = arith.constant 41 : index
    %c0_430 = arith.constant 0 : index
    %989 = vector.load %arg4[%c41_429, %c0_430] : memref<72x128xf32, #tpu.memory_space<vmem>>, vector<1x128xf32>
    %990 = vector.broadcast %988 : vector<1x128xf32> to vector<8x128xf32>
    %991 = arith.mulf %986, %990 : vector<8x128xf32>
    %992 = vector.broadcast %989 : vector<1x128xf32> to vector<8x128xf32>
    %993 = arith.mulf %987, %992 : vector<8x128xf32>
    %994 = arith.subf %991, %993 : vector<8x128xf32>
    %995 = arith.addf %979, %994 : vector<8x128xf32>
    %996 = vector.broadcast %989 : vector<1x128xf32> to vector<8x128xf32>
    %997 = arith.mulf %986, %996 : vector<8x128xf32>
    %998 = vector.broadcast %988 : vector<1x128xf32> to vector<8x128xf32>
    %999 = arith.mulf %987, %998 : vector<8x128xf32>
    %1000 = arith.addf %997, %999 : vector<8x128xf32>
    %1001 = arith.addf %985, %1000 : vector<8x128xf32>
    %c120_431 = arith.constant 120 : index
    %c0_432 = arith.constant 0 : index
    %1002 = vector.load %arg1[%c120_431, %c0_432] : memref<192x128xf32, #tpu.memory_space<vmem>>, vector<8x128xf32>
    %c120_433 = arith.constant 120 : index
    %c0_434 = arith.constant 0 : index
    %1003 = vector.load %arg2[%c120_433, %c0_434] : memref<192x128xf32, #tpu.memory_space<vmem>>, vector<8x128xf32>
    %c44 = arith.constant 44 : index
    %c0_435 = arith.constant 0 : index
    %1004 = vector.load %arg3[%c44, %c0_435] : memref<72x128xf32, #tpu.memory_space<vmem>>, vector<1x128xf32>
    %c44_436 = arith.constant 44 : index
    %c0_437 = arith.constant 0 : index
    %1005 = vector.load %arg4[%c44_436, %c0_437] : memref<72x128xf32, #tpu.memory_space<vmem>>, vector<1x128xf32>
    %1006 = vector.broadcast %1004 : vector<1x128xf32> to vector<8x128xf32>
    %1007 = arith.mulf %1002, %1006 : vector<8x128xf32>
    %1008 = vector.broadcast %1005 : vector<1x128xf32> to vector<8x128xf32>
    %1009 = arith.mulf %1003, %1008 : vector<8x128xf32>
    %1010 = arith.subf %1007, %1009 : vector<8x128xf32>
    %1011 = arith.addf %995, %1010 : vector<8x128xf32>
    %1012 = vector.broadcast %1005 : vector<1x128xf32> to vector<8x128xf32>
    %1013 = arith.mulf %1002, %1012 : vector<8x128xf32>
    %1014 = vector.broadcast %1004 : vector<1x128xf32> to vector<8x128xf32>
    %1015 = arith.mulf %1003, %1014 : vector<8x128xf32>
    %1016 = arith.addf %1013, %1015 : vector<8x128xf32>
    %1017 = arith.addf %1001, %1016 : vector<8x128xf32>
    %c168_438 = arith.constant 168 : index
    %c0_439 = arith.constant 0 : index
    %1018 = vector.load %arg1[%c168_438, %c0_439] : memref<192x128xf32, #tpu.memory_space<vmem>>, vector<8x128xf32>
    %c168_440 = arith.constant 168 : index
    %c0_441 = arith.constant 0 : index
    %1019 = vector.load %arg2[%c168_440, %c0_441] : memref<192x128xf32, #tpu.memory_space<vmem>>, vector<8x128xf32>
    %c47 = arith.constant 47 : index
    %c0_442 = arith.constant 0 : index
    %1020 = vector.load %arg3[%c47, %c0_442] : memref<72x128xf32, #tpu.memory_space<vmem>>, vector<1x128xf32>
    %c47_443 = arith.constant 47 : index
    %c0_444 = arith.constant 0 : index
    %1021 = vector.load %arg4[%c47_443, %c0_444] : memref<72x128xf32, #tpu.memory_space<vmem>>, vector<1x128xf32>
    %1022 = vector.broadcast %1020 : vector<1x128xf32> to vector<8x128xf32>
    %1023 = arith.mulf %1018, %1022 : vector<8x128xf32>
    %1024 = vector.broadcast %1021 : vector<1x128xf32> to vector<8x128xf32>
    %1025 = arith.mulf %1019, %1024 : vector<8x128xf32>
    %1026 = arith.subf %1023, %1025 : vector<8x128xf32>
    %1027 = arith.addf %1011, %1026 : vector<8x128xf32>
    %1028 = vector.broadcast %1021 : vector<1x128xf32> to vector<8x128xf32>
    %1029 = arith.mulf %1018, %1028 : vector<8x128xf32>
    %1030 = vector.broadcast %1020 : vector<1x128xf32> to vector<8x128xf32>
    %1031 = arith.mulf %1019, %1030 : vector<8x128xf32>
    %1032 = arith.addf %1029, %1031 : vector<8x128xf32>
    %1033 = arith.addf %1017, %1032 : vector<8x128xf32>
    %c32_445 = arith.constant 32 : index
    %c0_446 = arith.constant 0 : index
    %1034 = vector.load %arg1[%c32_445, %c0_446] : memref<192x128xf32, #tpu.memory_space<vmem>>, vector<8x128xf32>
    %c32_447 = arith.constant 32 : index
    %c0_448 = arith.constant 0 : index
    %1035 = vector.load %arg2[%c32_447, %c0_448] : memref<192x128xf32, #tpu.memory_space<vmem>>, vector<8x128xf32>
    %c50 = arith.constant 50 : index
    %c0_449 = arith.constant 0 : index
    %1036 = vector.load %arg3[%c50, %c0_449] : memref<72x128xf32, #tpu.memory_space<vmem>>, vector<1x128xf32>
    %c50_450 = arith.constant 50 : index
    %c0_451 = arith.constant 0 : index
    %1037 = vector.load %arg4[%c50_450, %c0_451] : memref<72x128xf32, #tpu.memory_space<vmem>>, vector<1x128xf32>
    %1038 = vector.broadcast %1036 : vector<1x128xf32> to vector<8x128xf32>
    %1039 = arith.mulf %1034, %1038 : vector<8x128xf32>
    %1040 = vector.broadcast %1037 : vector<1x128xf32> to vector<8x128xf32>
    %1041 = arith.mulf %1035, %1040 : vector<8x128xf32>
    %1042 = arith.subf %1039, %1041 : vector<8x128xf32>
    %1043 = arith.addf %1027, %1042 : vector<8x128xf32>
    %1044 = vector.broadcast %1037 : vector<1x128xf32> to vector<8x128xf32>
    %1045 = arith.mulf %1034, %1044 : vector<8x128xf32>
    %1046 = vector.broadcast %1036 : vector<1x128xf32> to vector<8x128xf32>
    %1047 = arith.mulf %1035, %1046 : vector<8x128xf32>
    %1048 = arith.addf %1045, %1047 : vector<8x128xf32>
    %1049 = arith.addf %1033, %1048 : vector<8x128xf32>
    %c80_452 = arith.constant 80 : index
    %c0_453 = arith.constant 0 : index
    %1050 = vector.load %arg1[%c80_452, %c0_453] : memref<192x128xf32, #tpu.memory_space<vmem>>, vector<8x128xf32>
    %c80_454 = arith.constant 80 : index
    %c0_455 = arith.constant 0 : index
    %1051 = vector.load %arg2[%c80_454, %c0_455] : memref<192x128xf32, #tpu.memory_space<vmem>>, vector<8x128xf32>
    %c53 = arith.constant 53 : index
    %c0_456 = arith.constant 0 : index
    %1052 = vector.load %arg3[%c53, %c0_456] : memref<72x128xf32, #tpu.memory_space<vmem>>, vector<1x128xf32>
    %c53_457 = arith.constant 53 : index
    %c0_458 = arith.constant 0 : index
    %1053 = vector.load %arg4[%c53_457, %c0_458] : memref<72x128xf32, #tpu.memory_space<vmem>>, vector<1x128xf32>
    %1054 = vector.broadcast %1052 : vector<1x128xf32> to vector<8x128xf32>
    %1055 = arith.mulf %1050, %1054 : vector<8x128xf32>
    %1056 = vector.broadcast %1053 : vector<1x128xf32> to vector<8x128xf32>
    %1057 = arith.mulf %1051, %1056 : vector<8x128xf32>
    %1058 = arith.subf %1055, %1057 : vector<8x128xf32>
    %1059 = arith.addf %1043, %1058 : vector<8x128xf32>
    %1060 = vector.broadcast %1053 : vector<1x128xf32> to vector<8x128xf32>
    %1061 = arith.mulf %1050, %1060 : vector<8x128xf32>
    %1062 = vector.broadcast %1052 : vector<1x128xf32> to vector<8x128xf32>
    %1063 = arith.mulf %1051, %1062 : vector<8x128xf32>
    %1064 = arith.addf %1061, %1063 : vector<8x128xf32>
    %1065 = arith.addf %1049, %1064 : vector<8x128xf32>
    %c128_459 = arith.constant 128 : index
    %c0_460 = arith.constant 0 : index
    %1066 = vector.load %arg1[%c128_459, %c0_460] : memref<192x128xf32, #tpu.memory_space<vmem>>, vector<8x128xf32>
    %c128_461 = arith.constant 128 : index
    %c0_462 = arith.constant 0 : index
    %1067 = vector.load %arg2[%c128_461, %c0_462] : memref<192x128xf32, #tpu.memory_space<vmem>>, vector<8x128xf32>
    %c56_463 = arith.constant 56 : index
    %c0_464 = arith.constant 0 : index
    %1068 = vector.load %arg3[%c56_463, %c0_464] : memref<72x128xf32, #tpu.memory_space<vmem>>, vector<1x128xf32>
    %c56_465 = arith.constant 56 : index
    %c0_466 = arith.constant 0 : index
    %1069 = vector.load %arg4[%c56_465, %c0_466] : memref<72x128xf32, #tpu.memory_space<vmem>>, vector<1x128xf32>
    %1070 = vector.broadcast %1068 : vector<1x128xf32> to vector<8x128xf32>
    %1071 = arith.mulf %1066, %1070 : vector<8x128xf32>
    %1072 = vector.broadcast %1069 : vector<1x128xf32> to vector<8x128xf32>
    %1073 = arith.mulf %1067, %1072 : vector<8x128xf32>
    %1074 = arith.subf %1071, %1073 : vector<8x128xf32>
    %1075 = arith.addf %1059, %1074 : vector<8x128xf32>
    %1076 = vector.broadcast %1069 : vector<1x128xf32> to vector<8x128xf32>
    %1077 = arith.mulf %1066, %1076 : vector<8x128xf32>
    %1078 = vector.broadcast %1068 : vector<1x128xf32> to vector<8x128xf32>
    %1079 = arith.mulf %1067, %1078 : vector<8x128xf32>
    %1080 = arith.addf %1077, %1079 : vector<8x128xf32>
    %1081 = arith.addf %1065, %1080 : vector<8x128xf32>
    %c176_467 = arith.constant 176 : index
    %c0_468 = arith.constant 0 : index
    %1082 = vector.load %arg1[%c176_467, %c0_468] : memref<192x128xf32, #tpu.memory_space<vmem>>, vector<8x128xf32>
    %c176_469 = arith.constant 176 : index
    %c0_470 = arith.constant 0 : index
    %1083 = vector.load %arg2[%c176_469, %c0_470] : memref<192x128xf32, #tpu.memory_space<vmem>>, vector<8x128xf32>
    %c59 = arith.constant 59 : index
    %c0_471 = arith.constant 0 : index
    %1084 = vector.load %arg3[%c59, %c0_471] : memref<72x128xf32, #tpu.memory_space<vmem>>, vector<1x128xf32>
    %c59_472 = arith.constant 59 : index
    %c0_473 = arith.constant 0 : index
    %1085 = vector.load %arg4[%c59_472, %c0_473] : memref<72x128xf32, #tpu.memory_space<vmem>>, vector<1x128xf32>
    %1086 = vector.broadcast %1084 : vector<1x128xf32> to vector<8x128xf32>
    %1087 = arith.mulf %1082, %1086 : vector<8x128xf32>
    %1088 = vector.broadcast %1085 : vector<1x128xf32> to vector<8x128xf32>
    %1089 = arith.mulf %1083, %1088 : vector<8x128xf32>
    %1090 = arith.subf %1087, %1089 : vector<8x128xf32>
    %1091 = arith.addf %1075, %1090 : vector<8x128xf32>
    %1092 = vector.broadcast %1085 : vector<1x128xf32> to vector<8x128xf32>
    %1093 = arith.mulf %1082, %1092 : vector<8x128xf32>
    %1094 = vector.broadcast %1084 : vector<1x128xf32> to vector<8x128xf32>
    %1095 = arith.mulf %1083, %1094 : vector<8x128xf32>
    %1096 = arith.addf %1093, %1095 : vector<8x128xf32>
    %1097 = arith.addf %1081, %1096 : vector<8x128xf32>
    %c40_474 = arith.constant 40 : index
    %c0_475 = arith.constant 0 : index
    %1098 = vector.load %arg1[%c40_474, %c0_475] : memref<192x128xf32, #tpu.memory_space<vmem>>, vector<8x128xf32>
    %c40_476 = arith.constant 40 : index
    %c0_477 = arith.constant 0 : index
    %1099 = vector.load %arg2[%c40_476, %c0_477] : memref<192x128xf32, #tpu.memory_space<vmem>>, vector<8x128xf32>
    %c62 = arith.constant 62 : index
    %c0_478 = arith.constant 0 : index
    %1100 = vector.load %arg3[%c62, %c0_478] : memref<72x128xf32, #tpu.memory_space<vmem>>, vector<1x128xf32>
    %c62_479 = arith.constant 62 : index
    %c0_480 = arith.constant 0 : index
    %1101 = vector.load %arg4[%c62_479, %c0_480] : memref<72x128xf32, #tpu.memory_space<vmem>>, vector<1x128xf32>
    %1102 = vector.broadcast %1100 : vector<1x128xf32> to vector<8x128xf32>
    %1103 = arith.mulf %1098, %1102 : vector<8x128xf32>
    %1104 = vector.broadcast %1101 : vector<1x128xf32> to vector<8x128xf32>
    %1105 = arith.mulf %1099, %1104 : vector<8x128xf32>
    %1106 = arith.subf %1103, %1105 : vector<8x128xf32>
    %1107 = arith.addf %1091, %1106 : vector<8x128xf32>
    %1108 = vector.broadcast %1101 : vector<1x128xf32> to vector<8x128xf32>
    %1109 = arith.mulf %1098, %1108 : vector<8x128xf32>
    %1110 = vector.broadcast %1100 : vector<1x128xf32> to vector<8x128xf32>
    %1111 = arith.mulf %1099, %1110 : vector<8x128xf32>
    %1112 = arith.addf %1109, %1111 : vector<8x128xf32>
    %1113 = arith.addf %1097, %1112 : vector<8x128xf32>
    %c88_481 = arith.constant 88 : index
    %c0_482 = arith.constant 0 : index
    %1114 = vector.load %arg1[%c88_481, %c0_482] : memref<192x128xf32, #tpu.memory_space<vmem>>, vector<8x128xf32>
    %c88_483 = arith.constant 88 : index
    %c0_484 = arith.constant 0 : index
    %1115 = vector.load %arg2[%c88_483, %c0_484] : memref<192x128xf32, #tpu.memory_space<vmem>>, vector<8x128xf32>
    %c65 = arith.constant 65 : index
    %c0_485 = arith.constant 0 : index
    %1116 = vector.load %arg3[%c65, %c0_485] : memref<72x128xf32, #tpu.memory_space<vmem>>, vector<1x128xf32>
    %c65_486 = arith.constant 65 : index
    %c0_487 = arith.constant 0 : index
    %1117 = vector.load %arg4[%c65_486, %c0_487] : memref<72x128xf32, #tpu.memory_space<vmem>>, vector<1x128xf32>
    %1118 = vector.broadcast %1116 : vector<1x128xf32> to vector<8x128xf32>
    %1119 = arith.mulf %1114, %1118 : vector<8x128xf32>
    %1120 = vector.broadcast %1117 : vector<1x128xf32> to vector<8x128xf32>
    %1121 = arith.mulf %1115, %1120 : vector<8x128xf32>
    %1122 = arith.subf %1119, %1121 : vector<8x128xf32>
    %1123 = arith.addf %1107, %1122 : vector<8x128xf32>
    %1124 = vector.broadcast %1117 : vector<1x128xf32> to vector<8x128xf32>
    %1125 = arith.mulf %1114, %1124 : vector<8x128xf32>
    %1126 = vector.broadcast %1116 : vector<1x128xf32> to vector<8x128xf32>
    %1127 = arith.mulf %1115, %1126 : vector<8x128xf32>
    %1128 = arith.addf %1125, %1127 : vector<8x128xf32>
    %1129 = arith.addf %1113, %1128 : vector<8x128xf32>
    %c136_488 = arith.constant 136 : index
    %c0_489 = arith.constant 0 : index
    %1130 = vector.load %arg1[%c136_488, %c0_489] : memref<192x128xf32, #tpu.memory_space<vmem>>, vector<8x128xf32>
    %c136_490 = arith.constant 136 : index
    %c0_491 = arith.constant 0 : index
    %1131 = vector.load %arg2[%c136_490, %c0_491] : memref<192x128xf32, #tpu.memory_space<vmem>>, vector<8x128xf32>
    %c68 = arith.constant 68 : index
    %c0_492 = arith.constant 0 : index
    %1132 = vector.load %arg3[%c68, %c0_492] : memref<72x128xf32, #tpu.memory_space<vmem>>, vector<1x128xf32>
    %c68_493 = arith.constant 68 : index
    %c0_494 = arith.constant 0 : index
    %1133 = vector.load %arg4[%c68_493, %c0_494] : memref<72x128xf32, #tpu.memory_space<vmem>>, vector<1x128xf32>
    %1134 = vector.broadcast %1132 : vector<1x128xf32> to vector<8x128xf32>
    %1135 = arith.mulf %1130, %1134 : vector<8x128xf32>
    %1136 = vector.broadcast %1133 : vector<1x128xf32> to vector<8x128xf32>
    %1137 = arith.mulf %1131, %1136 : vector<8x128xf32>
    %1138 = arith.subf %1135, %1137 : vector<8x128xf32>
    %1139 = arith.addf %1123, %1138 : vector<8x128xf32>
    %1140 = vector.broadcast %1133 : vector<1x128xf32> to vector<8x128xf32>
    %1141 = arith.mulf %1130, %1140 : vector<8x128xf32>
    %1142 = vector.broadcast %1132 : vector<1x128xf32> to vector<8x128xf32>
    %1143 = arith.mulf %1131, %1142 : vector<8x128xf32>
    %1144 = arith.addf %1141, %1143 : vector<8x128xf32>
    %1145 = arith.addf %1129, %1144 : vector<8x128xf32>
    %c184_495 = arith.constant 184 : index
    %c0_496 = arith.constant 0 : index
    %1146 = vector.load %arg1[%c184_495, %c0_496] : memref<192x128xf32, #tpu.memory_space<vmem>>, vector<8x128xf32>
    %c184_497 = arith.constant 184 : index
    %c0_498 = arith.constant 0 : index
    %1147 = vector.load %arg2[%c184_497, %c0_498] : memref<192x128xf32, #tpu.memory_space<vmem>>, vector<8x128xf32>
    %c71 = arith.constant 71 : index
    %c0_499 = arith.constant 0 : index
    %1148 = vector.load %arg3[%c71, %c0_499] : memref<72x128xf32, #tpu.memory_space<vmem>>, vector<1x128xf32>
    %c71_500 = arith.constant 71 : index
    %c0_501 = arith.constant 0 : index
    %1149 = vector.load %arg4[%c71_500, %c0_501] : memref<72x128xf32, #tpu.memory_space<vmem>>, vector<1x128xf32>
    %1150 = vector.broadcast %1148 : vector<1x128xf32> to vector<8x128xf32>
    %1151 = arith.mulf %1146, %1150 : vector<8x128xf32>
    %1152 = vector.broadcast %1149 : vector<1x128xf32> to vector<8x128xf32>
    %1153 = arith.mulf %1147, %1152 : vector<8x128xf32>
    %1154 = arith.subf %1151, %1153 : vector<8x128xf32>
    %1155 = arith.addf %1139, %1154 : vector<8x128xf32>
    %1156 = vector.broadcast %1149 : vector<1x128xf32> to vector<8x128xf32>
    %1157 = arith.mulf %1146, %1156 : vector<8x128xf32>
    %1158 = vector.broadcast %1148 : vector<1x128xf32> to vector<8x128xf32>
    %1159 = arith.mulf %1147, %1158 : vector<8x128xf32>
    %1160 = arith.addf %1157, %1159 : vector<8x128xf32>
    %1161 = arith.addf %1145, %1160 : vector<8x128xf32>
    %c16_502 = arith.constant 16 : index
    %c0_503 = arith.constant 0 : index
    %1162 = vector.load %arg5[%c16_502, %c0_503] : memref<24x128xf32, #tpu.memory_space<vmem>>, vector<8x128xf32>
    tpu.vector_store %arg5[%c16_502, %c0_503], %1155 {strides = array<i32>} : memref<24x128xf32, #tpu.memory_space<vmem>>, vector<8x128xf32>,
    %c16_504 = arith.constant 16 : index
    %c0_505 = arith.constant 0 : index
    %1163 = vector.load %arg6[%c16_504, %c0_505] : memref<24x128xf32, #tpu.memory_space<vmem>>, vector<8x128xf32>
    tpu.vector_store %arg6[%c16_504, %c0_505], %1161 {strides = array<i32>} : memref<24x128xf32, #tpu.memory_space<vmem>>, vector<8x128xf32>,
    return
  }
  func.func @transform_0(%arg0: i32) -> (i32, i32) {
    %c0_i32 = arith.constant 0 : i32
    %c0_i32_0 = arith.constant 0 : i32
    return %c0_i32, %arg0 : i32, i32
  }
  func.func @transform_1(%arg0: i32) -> (i32, i32) {
    %c0_i32 = arith.constant 0 : i32
    %c0_i32_0 = arith.constant 0 : i32
    return %c0_i32, %arg0 : i32, i32
  }
  func.func @transform_2(%arg0: i32) -> (i32, i32) {
    %c0_i32 = arith.constant 0 : i32
    %c0_i32_0 = arith.constant 0 : i32
    return %c0_i32, %arg0 : i32, i32
  }
  func.func @transform_3(%arg0: i32) -> (i32, i32) {
    %c0_i32 = arith.constant 0 : i32
    %c0_i32_0 = arith.constant 0 : i32
    return %c0_i32, %arg0 : i32, i32
  }
  func.func @transform_4(%arg0: i32) -> (i32, i32) {
    %c0_i32 = arith.constant 0 : i32
    %c0_i32_0 = arith.constant 0 : i32
    return %c0_i32, %arg0 : i32, i32
  }
  func.func @transform_5(%arg0: i32) -> (i32, i32) {
    %c0_i32 = arith.constant 0 : i32
    %c0_i32_0 = arith.constant 0 : i32
    return %c0_i32, %arg0 : i32, i32
  }
}

</mosaic_0001>

<llo_original>
// kernel: tpu_custom_call.1
$region0: #{tpu_custom_call.1}
  #allocation0 [shape = 'u32[]', space=smem, size = 0x4, offset = 0x4, fixed_abs, tag = 'smem constant byte address 0x4 - core index']
  #allocation1 [shape = 'u32[144,128]{1,0:T(1,128)}', space=vmem, size = 0x12000, scoped, tag = 'internal scratch']
  %s0 = inlined_call_operand.hbm [shape: f32[192,256], index: 0, kind: input, shape index: {}]
  %s1 = inlined_call_operand.hbm [shape: f32[192,256], index: 1, kind: input, shape index: {}]
  %s2 = inlined_call_operand.hbm [shape: f32[72,256], index: 2, kind: input, shape index: {}]
  %s3 = inlined_call_operand.hbm [shape: f32[72,256], index: 3, kind: input, shape index: {}]
  %s4 = inlined_call_operand.hbm [shape: f32[24,256], index: 4, kind: output, shape index: {0}]
  %s5 = inlined_call_operand.hbm [shape: f32[24,256], index: 5, kind: output, shape index: {1}]
  %6 = xla_tuple %s4, %s5
  %s7 = sld [smem:[#allocation0]]
  $region73: #{tpu_custom_call.1} parent=0
    _
  %s9 = ssub.s32 1, %s7
  %s10 = scalar_select 0, %s9, %s7
  $region1: #{tpu_custom_call.1} parent=0
    #allocation2 [shape = 'u8[196608]{0}', space=vmem, size = 0x30000, scoped, tag = 'input window, operand 0']
    #allocation3 [shape = 's32[2]{0}', space=sflag, size = 0x8, scoped, tag = 'scoped memory for tpu_custom_call.1']
    #allocation4 [shape = 's32[2]{0}', space=sflag, size = 0x8, scoped, tag = 'scoped memory for tpu_custom_call.1']
    #allocation5 [shape = 'u8[196608]{0}', space=vmem, size = 0x30000, scoped, tag = 'input window, operand 1']
    #allocation6 [shape = 's32[2]{0}', space=sflag, size = 0x8, scoped, tag = 'scoped memory for tpu_custom_call.1']
    #allocation7 [shape = 'u8[73728]{0}', space=vmem, size = 0x12000, scoped, tag = 'input window, operand 2']
    #allocation8 [shape = 'u8[73728]{0}', space=vmem, size = 0x12000, scoped, tag = 'input window, operand 3']
    #allocation9 [shape = 's32[2]{0}', space=sflag, size = 0x8, scoped, tag = 'scoped memory for tpu_custom_call.1']
    #allocation10 [shape = 'u8[24576]{0}', space=vmem, size = 0x6000, scoped, tag = 'output window, operand 0']
    #allocation11 [shape = 'u8[24576]{0}', space=vmem, size = 0x6000, scoped, tag = 'output window, operand 1']
    #allocation12 [shape = 's32[2]{0}', space=sflag, size = 0x8, scoped, tag = 'scoped memory for tpu_custom_call.1']
    %11 = vsyncpa [#allocation3], 0
    %s12 = scalar_lea.sflag [#allocation3], 1
    %13 = vsyncpa %s12, 0
    %14 = vsyncpa [#allocation6], 0
    %s15 = scalar_lea.sflag [#allocation6], 1
    %16 = vsyncpa %s15, 0
    %17 = vsyncpa [#allocation9], 0
    %s18 = scalar_lea.sflag [#allocation9], 1
    %19 = vsyncpa %s18, 0
    %20 = vsyncpa [#allocation4], 0
    %s21 = scalar_lea.sflag [#allocation4], 1
    %22 = vsyncpa %s21, 0
    %23 = vsyncpa [#allocation12], 0
    %s24 = scalar_lea.sflag [#allocation12], 1
    %25 = vsyncpa %s24, 0
    loop: start=0, step=1, limit=4
    $region2: #{tpu_custom_call.1} parent=1 // loop_pre_header
      _
    $region3: #{tpu_custom_call.1} parent=1 // loop_header
      %s27 = sphi 0, %s31
      %p28 = scmp.ge.s32.totalorder %s27, 4
      %s37 = sphi 0, %s39
      %s40 = sphi 0, %s37
      %s41 = sphi 0, %s40
      %s57 = sphi 0, %s41
      %s63 = sphi 0, %s65
      %s66 = sphi 0, %s63
      %s67 = sphi 0, %s66
      %s83 = sphi 0, %s67
      %s89 = sphi 0, %s91
      %s92 = sphi 0, %s89
      %s93 = sphi 0, %s92
      %s109 = sphi 0, %s93
      %s115 = sphi 0, %s117
      %s118 = sphi 0, %s115
      %s119 = sphi 0, %s118
      %s135 = sphi 0, %s119
      %s141 = sphi 0, %s143
      %s144 = sphi 0, %s141
      %s145 = sphi 0, %s144
      %s161 = sphi 0, %s145
      %s167 = sphi 0, %s169
      %s170 = sphi 0, %s167
      %s171 = sphi 0, %s170
      %s187 = sphi 0, %s171
    $region4: #{tpu_custom_call.1} parent=1 // loop_header_branch
      %30 = sbr.rel (%p28) target = $region8
    $region5: #{tpu_custom_call.1} parent=1 // loop_body
      %s32 = ssub.s32 %s27, 1
      %s33 = ssub.s32 %s27, 2
      %s34 = sadd.s32 %s27, 1
      %s35 = ssub.s32 %s27, %s34
      %p36 = scmp.eq.s32.totalorder %s35, 0
      %s38 = sadd.s32 %s37, 1
      %s39 = scalar_select %p36, %s37, %s38
      %p42 = pneg %p36
      %p43 = scmp.eq.s32.totalorder %s27, 1
      %p44 = por %p42, %p43
      %p45 = scmp.ne.s32.totalorder %s37, %s40
      %p46 = scmp.eq.s32.totalorder %s27, 0
      %p47 = por %p45, %p46
      %p48 = scmp.ne.s32.totalorder %s37, %s40
      %p49 = scmp.eq.s32.totalorder %s32, 1
      %p50 = por %p48, %p49
      %p51 = scmp.ne.s32.totalorder %s40, %s41
      %p52 = scmp.eq.s32.totalorder %s32, 0
      %p53 = por %p51, %p52
      %p54 = scmp.ne.s32.totalorder %s40, %s41
      %p55 = scmp.eq.s32.totalorder %s33, 1
      %p56 = por %p54, %p55
      %p58 = scmp.ne.s32.totalorder %s41, %s57
      %p59 = scmp.eq.s32.totalorder %s33, 0
      %p60 = por %p58, %p59
      %s61 = ssub.s32 %s27, %s34
      %p62 = scmp.eq.s32.totalorder %s61, 0
      %s64 = sadd.s32 %s63, 1
      %s65 = scalar_select %p62, %s63, %s64
      %p68 = pneg %p62
      %p69 = scmp.eq.s32.totalorder %s27, 1
      %p70 = por %p68, %p69
      %p71 = scmp.ne.s32.totalorder %s63, %s66
      %p72 = scmp.eq.s32.totalorder %s27, 0
      %p73 = por %p71, %p72
      %p74 = scmp.ne.s32.totalorder %s63, %s66
      %p75 = scmp.eq.s32.totalorder %s32, 1
      %p76 = por %p74, %p75
      %p77 = scmp.ne.s32.totalorder %s66, %s67
      %p78 = scmp.eq.s32.totalorder %s32, 0
      %p79 = por %p77, %p78
      %p80 = scmp.ne.s32.totalorder %s66, %s67
      %p81 = scmp.eq.s32.totalorder %s33, 1
      %p82 = por %p80, %p81
      %p84 = scmp.ne.s32.totalorder %s67, %s83
      %p85 = scmp.eq.s32.totalorder %s33, 0
      %p86 = por %p84, %p85
      %s87 = ssub.s32 %s27, %s34
      %p88 = scmp.eq.s32.totalorder %s87, 0
      %s90 = sadd.s32 %s89, 1
      %s91 = scalar_select %p88, %s89, %s90
      %p94 = pneg %p88
      %p95 = scmp.eq.s32.totalorder %s27, 1
      %p96 = por %p94, %p95
      %p97 = scmp.ne.s32.totalorder %s89, %s92
      %p98 = scmp.eq.s32.totalorder %s27, 0
      %p99 = por %p97, %p98
      %p100 = scmp.ne.s32.totalorder %s89, %s92
      %p101 = scmp.eq.s32.totalorder %s32, 1
      %p102 = por %p100, %p101
      %p103 = scmp.ne.s32.totalorder %s92, %s93
      %p104 = scmp.eq.s32.totalorder %s32, 0
      %p105 = por %p103, %p104
      %p106 = scmp.ne.s32.totalorder %s92, %s93
      %p107 = scmp.eq.s32.totalorder %s33, 1
      %p108 = por %p106, %p107
      %p110 = scmp.ne.s32.totalorder %s93, %s109
      %p111 = scmp.eq.s32.totalorder %s33, 0
      %p112 = por %p110, %p111
      %s113 = ssub.s32 %s27, %s34
      %p114 = scmp.eq.s32.totalorder %s113, 0
      %s116 = sadd.s32 %s115, 1
      %s117 = scalar_select %p114, %s115, %s116
      %p120 = pneg %p114
      %p121 = scmp.eq.s32.totalorder %s27, 1
      %p122 = por %p120, %p121
      %p123 = scmp.ne.s32.totalorder %s115, %s118
      %p124 = scmp.eq.s32.totalorder %s27, 0
      %p125 = por %p123, %p124
      %p126 = scmp.ne.s32.totalorder %s115, %s118
      %p127 = scmp.eq.s32.totalorder %s32, 1
      %p128 = por %p126, %p127
      %p129 = scmp.ne.s32.totalorder %s118, %s119
      %p130 = scmp.eq.s32.totalorder %s32, 0
      %p131 = por %p129, %p130
      %p132 = scmp.ne.s32.totalorder %s118, %s119
      %p133 = scmp.eq.s32.totalorder %s33, 1
      %p134 = por %p132, %p133
      %p136 = scmp.ne.s32.totalorder %s119, %s135
      %p137 = scmp.eq.s32.totalorder %s33, 0
      %p138 = por %p136, %p137
      %s139 = ssub.s32 %s27, %s34
      %p140 = scmp.eq.s32.totalorder %s139, 0
      %s142 = sadd.s32 %s141, 1
      %s143 = scalar_select %p140, %s141, %s142
      %p146 = pneg %p140
      %p147 = scmp.eq.s32.totalorder %s27, 1
      %p148 = por %p146, %p147
      %p149 = scmp.ne.s32.totalorder %s141, %s144
      %p150 = scmp.eq.s32.totalorder %s27, 0
      %p151 = por %p149, %p150
      %p152 = scmp.ne.s32.totalorder %s141, %s144
      %p153 = scmp.eq.s32.totalorder %s32, 1
      %p154 = por %p152, %p153
      %p155 = scmp.ne.s32.totalorder %s144, %s145
      %p156 = scmp.eq.s32.totalorder %s32, 0
      %p157 = por %p155, %p156
      %p158 = scmp.ne.s32.totalorder %s144, %s145
      %p159 = scmp.eq.s32.totalorder %s33, 1
      %p160 = por %p158, %p159
      %p162 = scmp.ne.s32.totalorder %s145, %s161
      %p163 = scmp.eq.s32.totalorder %s33, 0
      %p164 = por %p162, %p163
      %s165 = ssub.s32 %s27, %s34
      %p166 = scmp.eq.s32.totalorder %s165, 0
      %s168 = sadd.s32 %s167, 1
      %s169 = scalar_select %p166, %s167, %s168
      %p172 = pneg %p166
      %p173 = scmp.eq.s32.totalorder %s27, 1
      %p174 = por %p172, %p173
      %p175 = scmp.ne.s32.totalorder %s167, %s170
      %p176 = scmp.eq.s32.totalorder %s27, 0
      %p177 = por %p175, %p176
      %p178 = scmp.ne.s32.totalorder %s167, %s170
      %p179 = scmp.eq.s32.totalorder %s32, 1
      %p180 = por %p178, %p179
      %p181 = scmp.ne.s32.totalorder %s170, %s171
      %p182 = scmp.eq.s32.totalorder %s32, 0
      %p183 = por %p181, %p182
      %p184 = scmp.ne.s32.totalorder %s170, %s171
      %p185 = scmp.eq.s32.totalorder %s33, 1
      %p186 = por %p184, %p185
      %p188 = scmp.ne.s32.totalorder %s171, %s187
      %p189 = scmp.eq.s32.totalorder %s33, 0
      %p190 = por %p188, %p189
      %p191 = scmp.le.s32.totalorder 1, %s27
      %p192 = scmp.lt.s32.totalorder %s27, 3
      %p193 = pnand %p191, %p192
      %p194 = pneg %p193
      // Predicated region
      $region9: #{tpu_custom_call.1} parent=5 // pred_check
        _
      $region10: #{tpu_custom_call.1} parent=5 // pred_check_branch
        %196 = sbr.rel (%p193) target = $region12
      $region11: #{tpu_custom_call.1} parent=5 // pred_region
        %s197 = ssub.s32 %s27, 1
      $region12: #{tpu_custom_call.1} parent=5 // pred_fallthru
        _
      %p198 = scmp.lt.s32.totalorder %s27, 2
      // Predicated region
      $region13: #{tpu_custom_call.1} parent=5 // pred_check
        %p199 = pneg %p198
      $region14: #{tpu_custom_call.1} parent=5 // pred_check_branch
        %201 = sbr.rel (%p199) target = $region16
      $region15: #{tpu_custom_call.1} parent=5 // pred_region
        // Predicated region
        $region17: #{tpu_custom_call.1} parent=15 // pred_check
          %p202 = pneg %p47
        $region18: #{tpu_custom_call.1} parent=15 // pred_check_branch
          %204 = sbr.rel (%p202) target = $region20
        $region19: #{tpu_custom_call.1} parent=15 // pred_region
          %s205 = sand.u32 %s37, 1
          %s206 = scalar_lea.sflag [#allocation3], %s205
          %s207 = sand.u32 %s37, 1
          %s208 = smul.addr %s207, 192
          %s209 = scalar_lea.vmem [#allocation2], %s208
          %s211 = ssub.s32 3072, 3072
          %212 = vsyncadd %s206, %s211
          %s213 = smul.addr %s27, 128
          %s214 = scalar_lea.hbm %s0, %s213
          %s215 = sshll.u32 %s209, 4
          %s216 = int_to_ptr.vmem [resolvable:$true] %s215
          %221 = dma.hbm_to_vmem [thread:$0]  %s214, 3072, %s216, %s206, 256, 128, 8
        $region20: #{tpu_custom_call.1} parent=15 // pred_fallthru
          _
        // Predicated region
        $region21: #{tpu_custom_call.1} parent=15 // pred_check
          %p222 = pneg %p73
        $region22: #{tpu_custom_call.1} parent=15 // pred_check_branch
          %224 = sbr.rel (%p222) target = $region24
        $region23: #{tpu_custom_call.1} parent=15 // pred_region
          %s225 = sand.u32 %s27, 1
          %s226 = scalar_lea.sflag [#allocation6], %s225
          %s227 = sand.u32 %s63, 1
          %s228 = smul.addr %s227, 192
          %s229 = scalar_lea.vmem [#allocation5], %s228
          %s231 = ssub.s32 3072, 3072
          %232 = vsyncadd %s226, %s231
          %s233 = smul.addr %s27, 128
          %s234 = scalar_lea.hbm %s1, %s233
          %s235 = sshll.u32 %s229, 4
          %s236 = int_to_ptr.vmem [resolvable:$true] %s235
          %241 = dma.hbm_to_vmem [thread:$0]  %s234, 3072, %s236, %s226, 256, 128, 8
        $region24: #{tpu_custom_call.1} parent=15 // pred_fallthru
          _
        // Predicated region
        $region25: #{tpu_custom_call.1} parent=15 // pred_check
          %p242 = pneg %p99
        $region26: #{tpu_custom_call.1} parent=15 // pred_check_branch
          %244 = sbr.rel (%p242) target = $region28
        $region27: #{tpu_custom_call.1} parent=15 // pred_region
          %s245 = sand.u32 %s27, 1
          %s246 = scalar_lea.sflag [#allocation6], %s245
          %s247 = sand.u32 %s89, 1
          %s248 = smul.addr %s247, 72
          %s249 = scalar_lea.vmem [#allocation7], %s248
          %s251 = ssub.s32 1152, 1152
          %252 = vsyncadd %s246, %s251
          %s253 = smul.addr %s27, 128
          %s254 = scalar_lea.hbm %s2, %s253
          %s255 = sshll.u32 %s249, 4
          %s256 = int_to_ptr.vmem [resolvable:$true] %s255
          %261 = dma.hbm_to_vmem [thread:$0]  %s254, 1152, %s256, %s246, 256, 128, 8
        $region28: #{tpu_custom_call.1} parent=15 // pred_fallthru
          _
        // Predicated region
        $region29: #{tpu_custom_call.1} parent=15 // pred_check
          %p262 = pneg %p125
        $region30: #{tpu_custom_call.1} parent=15 // pred_check_branch
          %264 = sbr.rel (%p262) target = $region32
        $region31: #{tpu_custom_call.1} parent=15 // pred_region
          %s265 = sand.u32 %s115, 1
          %s266 = scalar_lea.sflag [#allocation9], %s265
          %s267 = sand.u32 %s115, 1
          %s268 = smul.addr %s267, 72
          %s269 = scalar_lea.vmem [#allocation8], %s268
          %s271 = ssub.s32 1152, 1152
          %272 = vsyncadd %s266, %s271
          %s273 = smul.addr %s27, 128
          %s274 = scalar_lea.hbm %s3, %s273
          %s275 = sshll.u32 %s269, 4
          %s276 = int_to_ptr.vmem [resolvable:$true] %s275
          %281 = dma.hbm_to_vmem [thread:$0]  %s274, 1152, %s276, %s266, 256, 128, 8
        $region32: #{tpu_custom_call.1} parent=15 // pred_fallthru
          _
      $region16: #{tpu_custom_call.1} parent=5 // pred_fallthru
        _
      %p282 = scmp.le.s32.totalorder 1, %s27
      %p283 = scmp.lt.s32.totalorder %s27, 3
      %p284 = pnand %p282, %p283
      %p285 = pneg %p284
      // Predicated region
      $region33: #{tpu_custom_call.1} parent=5 // pred_check
        _
      $region34: #{tpu_custom_call.1} parent=5 // pred_check_branch
        %287 = sbr.rel (%p284) target = $region36
      $region35: #{tpu_custom_call.1} parent=5 // pred_region
        %s288 = ssub.s32 %s27, 1
        %s289 = sand.u32 %s40, 1
        %s290 = scalar_lea.sflag [#allocation3], %s289
        %s291 = sand.u32 %s40, 1
        %s292 = smul.addr %s291, 192
        %s293 = scalar_lea.vmem [#allocation2], %s292
        // Predicated region
        $region37: #{tpu_custom_call.1} parent=35 // pred_check
          %p294 = pneg %p53
        $region38: #{tpu_custom_call.1} parent=35 // pred_check_branch
          %296 = sbr.rel (%p294) target = $region40
        $region39: #{tpu_custom_call.1} parent=35 // pred_region
          %297 = dma.done %s290, 3072
        $region40: #{tpu_custom_call.1} parent=35 // pred_fallthru
          _
        %s298 = sand.u32 %s32, 1
        %s299 = scalar_lea.sflag [#allocation6], %s298
        %s300 = sand.u32 %s66, 1
        %s301 = smul.addr %s300, 192
        %s302 = scalar_lea.vmem [#allocation5], %s301
        // Predicated region
        $region41: #{tpu_custom_call.1} parent=35 // pred_check
          %p303 = pneg %p79
        $region42: #{tpu_custom_call.1} parent=35 // pred_check_branch
          %305 = sbr.rel (%p303) target = $region44
        $region43: #{tpu_custom_call.1} parent=35 // pred_region
          %306 = dma.done %s299, 3072
        $region44: #{tpu_custom_call.1} parent=35 // pred_fallthru
          _
        %s307 = sand.u32 %s32, 1
        %s308 = scalar_lea.sflag [#allocation6], %s307
        %s309 = sand.u32 %s92, 1
        %s310 = smul.addr %s309, 72
        %s311 = scalar_lea.vmem [#allocation7], %s310
        // Predicated region
        $region45: #{tpu_custom_call.1} parent=35 // pred_check
          %p312 = pneg %p105
        $region46: #{tpu_custom_call.1} parent=35 // pred_check_branch
          %314 = sbr.rel (%p312) target = $region48
        $region47: #{tpu_custom_call.1} parent=35 // pred_region
          %315 = dma.done %s308, 1152
        $region48: #{tpu_custom_call.1} parent=35 // pred_fallthru
          _
        %s316 = sand.u32 %s118, 1
        %s317 = scalar_lea.sflag [#allocation9], %s316
        %s318 = sand.u32 %s118, 1
        %s319 = smul.addr %s318, 72
        %s320 = scalar_lea.vmem [#allocation8], %s319
        // Predicated region
        $region49: #{tpu_custom_call.1} parent=35 // pred_check
          %p321 = pneg %p131
        $region50: #{tpu_custom_call.1} parent=35 // pred_check_branch
          %323 = sbr.rel (%p321) target = $region52
        $region51: #{tpu_custom_call.1} parent=35 // pred_region
          %324 = dma.done %s317, 1152
        $region52: #{tpu_custom_call.1} parent=35 // pred_fallthru
          _
        %s325 = sand.u32 %s40, 1
        %s326 = scalar_lea.sflag [#allocation3], %s325
        %s327 = sand.u32 %s40, 1
        %s328 = smul.addr %s327, 192
        %s329 = scalar_lea.vmem [#allocation2], %s328
        %p330 = pneg %p53
        %p331 = pneg %p50
        %s332 = sand.u32 %s32, 1
        %s333 = scalar_lea.sflag [#allocation6], %s332
        %s334 = sand.u32 %s66, 1
        %s335 = smul.addr %s334, 192
        %s336 = scalar_lea.vmem [#allocation5], %s335
        %p337 = pneg %p79
        %p338 = pneg %p76
        %s339 = sand.u32 %s32, 1
        %s340 = scalar_lea.sflag [#allocation6], %s339
        %s341 = sand.u32 %s92, 1
        %s342 = smul.addr %s341, 72
        %s343 = scalar_lea.vmem [#allocation7], %s342
        %p344 = pneg %p105
        %p345 = pneg %p102
        %s346 = sand.u32 %s118, 1
        %s347 = scalar_lea.sflag [#allocation9], %s346
        %s348 = sand.u32 %s118, 1
        %s349 = smul.addr %s348, 72
        %s350 = scalar_lea.vmem [#allocation8], %s349
        %p351 = pneg %p131
        %p352 = pneg %p128
        %p353 = pneg %p157
        %p354 = pneg %p154
        %s355 = sand.u32 %s144, 1
        %s356 = scalar_lea.sflag [#allocation4], %s355
        %s357 = sand.u32 %s144, 1
        %s358 = smul.addr %s357, 24
        %s359 = scalar_lea.vmem [#allocation10], %s358
        %p360 = pneg %p183
        %p361 = pneg %p180
        %s362 = sand.u32 %s170, 1
        %s363 = scalar_lea.sflag [#allocation12], %s362
        %s364 = sand.u32 %s170, 1
        %s365 = smul.addr %s364, 24
        %s366 = scalar_lea.vmem [#allocation11], %s365
        %v367 = vld [vmem:[%s293] sm:$0xff]
        %v368 = vld [vmem:[%s302] sm:$0xff]
        %v369 = vld [vmem:[%s311] sm:$0x1]
        %v370 = vld [vmem:[%s320] sm:$0x1]
        %v371 = vlaneseq
        %v372 = vshrl.u32 %v371, 7
        %v373 = vsub.s32 0, %v372
        %v374 = vrot.slane %v369, %v373
        %v375 = vmul.f32 %v367, %v374
        %v376 = vlaneseq
        %v377 = vshrl.u32 %v376, 7
        %v378 = vsub.s32 0, %v377
        %v379 = vrot.slane %v370, %v378
        %v380 = vmul.f32 %v368, %v379
        %v381 = vsub.f32 %v375, %v380
        %v382 = vadd.f32 %v381, 0.0
        %v383 = vmul.f32 %v367, %v379
        %v384 = vmul.f32 %v368, %v374
        %v385 = vadd.f32 %v383, %v384
        %v386 = vadd.f32 %v385, 0.0
        %v387 = vld [vmem:[%s293 + $0x30] sm:$0xff]
        %v388 = vld [vmem:[%s302 + $0x30] sm:$0xff]
        %v389 = vld [vmem:[%s311 + $0x3] sm:$0x1]
        %v390 = vld [vmem:[%s320 + $0x3] sm:$0x1]
        %v391 = vlaneseq
        %v392 = vshrl.u32 %v391, 7
        %v393 = vsub.s32 0, %v392
        %v394 = vrot.slane %v389, %v393
        %v395 = vmul.f32 %v387, %v394
        %v396 = vlaneseq
        %v397 = vshrl.u32 %v396, 7
        %v398 = vsub.s32 0, %v397
        %v399 = vrot.slane %v390, %v398
        %v400 = vmul.f32 %v388, %v399
        %v401 = vsub.f32 %v395, %v400
        %v402 = vadd.f32 %v382, %v401
        %v403 = vmul.f32 %v387, %v399
        %v404 = vmul.f32 %v388, %v394
        %v405 = vadd.f32 %v403, %v404
        %v406 = vadd.f32 %v386, %v405
        %v407 = vld [vmem:[%s293 + $0x60] sm:$0xff]
        %v408 = vld [vmem:[%s302 + $0x60] sm:$0xff]
        %v409 = vld [vmem:[%s311 + $0x6] sm:$0x1]
        %v410 = vld [vmem:[%s320 + $0x6] sm:$0x1]
        %v411 = vlaneseq
        %v412 = vshrl.u32 %v411, 7
        %v413 = vsub.s32 0, %v412
        %v414 = vrot.slane %v409, %v413
        %v415 = vmul.f32 %v407, %v414
        %v416 = vlaneseq
        %v417 = vshrl.u32 %v416, 7
        %v418 = vsub.s32 0, %v417
        %v419 = vrot.slane %v410, %v418
        %v420 = vmul.f32 %v408, %v419
        %v421 = vsub.f32 %v415, %v420
        %v422 = vadd.f32 %v402, %v421
        %v423 = vmul.f32 %v407, %v419
        %v424 = vmul.f32 %v408, %v414
        %v425 = vadd.f32 %v423, %v424
        %v426 = vadd.f32 %v406, %v425
        %v427 = vld [vmem:[%s293 + $0x90] sm:$0xff]
        %v428 = vld [vmem:[%s302 + $0x90] sm:$0xff]
        %v429 = vld [vmem:[%s311 + $0x9] sm:$0x1]
        %v430 = vld [vmem:[%s320 + $0x9] sm:$0x1]
        %v431 = vlaneseq
        %v432 = vshrl.u32 %v431, 7
        %v433 = vsub.s32 0, %v432
        %v434 = vrot.slane %v429, %v433
        %v435 = vmul.f32 %v427, %v434
        %v436 = vlaneseq
        %v437 = vshrl.u32 %v436, 7
        %v438 = vsub.s32 0, %v437
        %v439 = vrot.slane %v430, %v438
        %v440 = vmul.f32 %v428, %v439
        %v441 = vsub.f32 %v435, %v440
        %v442 = vadd.f32 %v422, %v441
        %v443 = vmul.f32 %v427, %v439
        %v444 = vmul.f32 %v428, %v434
        %v445 = vadd.f32 %v443, %v444
        %v446 = vadd.f32 %v426, %v445
        %v447 = vld [vmem:[%s293 + $0x8] sm:$0xff]
        %v448 = vld [vmem:[%s302 + $0x8] sm:$0xff]
        %v449 = vld [vmem:[%s311 + $0xc] sm:$0x1]
        %v450 = vld [vmem:[%s320 + $0xc] sm:$0x1]
        %v451 = vlaneseq
        %v452 = vshrl.u32 %v451, 7
        %v453 = vsub.s32 0, %v452
        %v454 = vrot.slane %v449, %v453
        %v455 = vmul.f32 %v447, %v454
        %v456 = vlaneseq
        %v457 = vshrl.u32 %v456, 7
        %v458 = vsub.s32 0, %v457
        %v459 = vrot.slane %v450, %v458
        %v460 = vmul.f32 %v448, %v459
        %v461 = vsub.f32 %v455, %v460
        %v462 = vadd.f32 %v442, %v461
        %v463 = vmul.f32 %v447, %v459
        %v464 = vmul.f32 %v448, %v454
        %v465 = vadd.f32 %v463, %v464
        %v466 = vadd.f32 %v446, %v465
        %v467 = vld [vmem:[%s293 + $0x38] sm:$0xff]
        %v468 = vld [vmem:[%s302 + $0x38] sm:$0xff]
        %v469 = vld [vmem:[%s311 + $0xf] sm:$0x1]
        %v470 = vld [vmem:[%s320 + $0xf] sm:$0x1]
        %v471 = vlaneseq
        %v472 = vshrl.u32 %v471, 7
        %v473 = vsub.s32 0, %v472
        %v474 = vrot.slane %v469, %v473
        %v475 = vmul.f32 %v467, %v474
        %v476 = vlaneseq
        %v477 = vshrl.u32 %v476, 7
        %v478 = vsub.s32 0, %v477
        %v479 = vrot.slane %v470, %v478
        %v480 = vmul.f32 %v468, %v479
        %v481 = vsub.f32 %v475, %v480
        %v482 = vadd.f32 %v462, %v481
        %v483 = vmul.f32 %v467, %v479
        %v484 = vmul.f32 %v468, %v474
        %v485 = vadd.f32 %v483, %v484
        %v486 = vadd.f32 %v466, %v485
        %v487 = vld [vmem:[%s293 + $0x68] sm:$0xff]
        %v488 = vld [vmem:[%s302 + $0x68] sm:$0xff]
        %v489 = vld [vmem:[%s311 + $0x12] sm:$0x1]
        %v490 = vld [vmem:[%s320 + $0x12] sm:$0x1]
        %v491 = vlaneseq
        %v492 = vshrl.u32 %v491, 7
        %v493 = vsub.s32 0, %v492
        %v494 = vrot.slane %v489, %v493
        %v495 = vmul.f32 %v487, %v494
        %v496 = vlaneseq
        %v497 = vshrl.u32 %v496, 7
        %v498 = vsub.s32 0, %v497
        %v499 = vrot.slane %v490, %v498
        %v500 = vmul.f32 %v488, %v499
        %v501 = vsub.f32 %v495, %v500
        %v502 = vadd.f32 %v482, %v501
        %v503 = vmul.f32 %v487, %v499
        %v504 = vmul.f32 %v488, %v494
        %v505 = vadd.f32 %v503, %v504
        %v506 = vadd.f32 %v486, %v505
        %v507 = vld [vmem:[%s293 + $0x98] sm:$0xff]
        %v508 = vld [vmem:[%s302 + $0x98] sm:$0xff]
        %v509 = vld [vmem:[%s311 + $0x15] sm:$0x1]
        %v510 = vld [vmem:[%s320 + $0x15] sm:$0x1]
        %v511 = vlaneseq
        %v512 = vshrl.u32 %v511, 7
        %v513 = vsub.s32 0, %v512
        %v514 = vrot.slane %v509, %v513
        %v515 = vmul.f32 %v507, %v514
        %v516 = vlaneseq
        %v517 = vshrl.u32 %v516, 7
        %v518 = vsub.s32 0, %v517
        %v519 = vrot.slane %v510, %v518
        %v520 = vmul.f32 %v508, %v519
        %v521 = vsub.f32 %v515, %v520
        %v522 = vadd.f32 %v502, %v521
        %v523 = vmul.f32 %v507, %v519
        %v524 = vmul.f32 %v508, %v514
        %v525 = vadd.f32 %v523, %v524
        %v526 = vadd.f32 %v506, %v525
        %v527 = vld [vmem:[%s293 + $0x10] sm:$0xff]
        %v528 = vld [vmem:[%s302 + $0x10] sm:$0xff]
        %v529 = vld [vmem:[%s311 + $0x18] sm:$0x1]
        %v530 = vld [vmem:[%s320 + $0x18] sm:$0x1]
        %v531 = vlaneseq
        %v532 = vshrl.u32 %v531, 7
        %v533 = vsub.s32 0, %v532
        %v534 = vrot.slane %v529, %v533
        %v535 = vmul.f32 %v527, %v534
        %v536 = vlaneseq
        %v537 = vshrl.u32 %v536, 7
        %v538 = vsub.s32 0, %v537
        %v539 = vrot.slane %v530, %v538
        %v540 = vmul.f32 %v528, %v539
        %v541 = vsub.f32 %v535, %v540
        %v542 = vadd.f32 %v522, %v541
        %v543 = vmul.f32 %v527, %v539
        %v544 = vmul.f32 %v528, %v534
        %v545 = vadd.f32 %v543, %v544
        %v546 = vadd.f32 %v526, %v545
        %v547 = vld [vmem:[%s293 + $0x40] sm:$0xff]
        %v548 = vld [vmem:[%s302 + $0x40] sm:$0xff]
        %v549 = vld [vmem:[%s311 + $0x1b] sm:$0x1]
        %v550 = vld [vmem:[%s320 + $0x1b] sm:$0x1]
        %v551 = vlaneseq
        %v552 = vshrl.u32 %v551, 7
        %v553 = vsub.s32 0, %v552
        %v554 = vrot.slane %v549, %v553
        %v555 = vmul.f32 %v547, %v554
        %v556 = vlaneseq
        %v557 = vshrl.u32 %v556, 7
        %v558 = vsub.s32 0, %v557
        %v559 = vrot.slane %v550, %v558
        %v560 = vmul.f32 %v548, %v559
        %v561 = vsub.f32 %v555, %v560
        %v562 = vadd.f32 %v542, %v561
        %v563 = vmul.f32 %v547, %v559
        %v564 = vmul.f32 %v548, %v554
        %v565 = vadd.f32 %v563, %v564
        %v566 = vadd.f32 %v546, %v565
        %v567 = vld [vmem:[%s293 + $0x70] sm:$0xff]
        %v568 = vld [vmem:[%s302 + $0x70] sm:$0xff]
        %v569 = vld [vmem:[%s311 + $0x1e] sm:$0x1]
        %v570 = vld [vmem:[%s320 + $0x1e] sm:$0x1]
        %v571 = vlaneseq
        %v572 = vshrl.u32 %v571, 7
        %v573 = vsub.s32 0, %v572
        %v574 = vrot.slane %v569, %v573
        %v575 = vmul.f32 %v567, %v574
        %v576 = vlaneseq
        %v577 = vshrl.u32 %v576, 7
        %v578 = vsub.s32 0, %v577
        %v579 = vrot.slane %v570, %v578
        %v580 = vmul.f32 %v568, %v579
        %v581 = vsub.f32 %v575, %v580
        %v582 = vadd.f32 %v562, %v581
        %v583 = vmul.f32 %v567, %v579
        %v584 = vmul.f32 %v568, %v574
        %v585 = vadd.f32 %v583, %v584
        %v586 = vadd.f32 %v566, %v585
        %v587 = vld [vmem:[%s293 + $0xa0] sm:$0xff]
        %v588 = vld [vmem:[%s302 + $0xa0] sm:$0xff]
        %v589 = vld [vmem:[%s311 + $0x21] sm:$0x1]
        %v590 = vld [vmem:[%s320 + $0x21] sm:$0x1]
        %v591 = vlaneseq
        %v592 = vshrl.u32 %v591, 7
        %v593 = vsub.s32 0, %v592
        %v594 = vrot.slane %v589, %v593
        %v595 = vmul.f32 %v587, %v594
        %v596 = vlaneseq
        %v597 = vshrl.u32 %v596, 7
        %v598 = vsub.s32 0, %v597
        %v599 = vrot.slane %v590, %v598
        %v600 = vmul.f32 %v588, %v599
        %v601 = vsub.f32 %v595, %v600
        %v602 = vadd.f32 %v582, %v601
        %v603 = vmul.f32 %v587, %v599
        %v604 = vmul.f32 %v588, %v594
        %v605 = vadd.f32 %v603, %v604
        %v606 = vadd.f32 %v586, %v605
        %v607 = vld [vmem:[%s293 + $0x18] sm:$0xff]
        %v608 = vld [vmem:[%s302 + $0x18] sm:$0xff]
        %v609 = vld [vmem:[%s311 + $0x24] sm:$0x1]
        %v610 = vld [vmem:[%s320 + $0x24] sm:$0x1]
        %v611 = vlaneseq
        %v612 = vshrl.u32 %v611, 7
        %v613 = vsub.s32 0, %v612
        %v614 = vrot.slane %v609, %v613
        %v615 = vmul.f32 %v607, %v614
        %v616 = vlaneseq
        %v617 = vshrl.u32 %v616, 7
        %v618 = vsub.s32 0, %v617
        %v619 = vrot.slane %v610, %v618
        %v620 = vmul.f32 %v608, %v619
        %v621 = vsub.f32 %v615, %v620
        %v622 = vadd.f32 %v602, %v621
        %v623 = vmul.f32 %v607, %v619
        %v624 = vmul.f32 %v608, %v614
        %v625 = vadd.f32 %v623, %v624
        %v626 = vadd.f32 %v606, %v625
        %v627 = vld [vmem:[%s293 + $0x48] sm:$0xff]
        %v628 = vld [vmem:[%s302 + $0x48] sm:$0xff]
        %v629 = vld [vmem:[%s311 + $0x27] sm:$0x1]
        %v630 = vld [vmem:[%s320 + $0x27] sm:$0x1]
        %v631 = vlaneseq
        %v632 = vshrl.u32 %v631, 7
        %v633 = vsub.s32 0, %v632
        %v634 = vrot.slane %v629, %v633
        %v635 = vmul.f32 %v627, %v634
        %v636 = vlaneseq
        %v637 = vshrl.u32 %v636, 7
        %v638 = vsub.s32 0, %v637
        %v639 = vrot.slane %v630, %v638
        %v640 = vmul.f32 %v628, %v639
        %v641 = vsub.f32 %v635, %v640
        %v642 = vadd.f32 %v622, %v641
        %v643 = vmul.f32 %v627, %v639
        %v644 = vmul.f32 %v628, %v634
        %v645 = vadd.f32 %v643, %v644
        %v646 = vadd.f32 %v626, %v645
        %v647 = vld [vmem:[%s293 + $0x78] sm:$0xff]
        %v648 = vld [vmem:[%s302 + $0x78] sm:$0xff]
        %v649 = vld [vmem:[%s311 + $0x2a] sm:$0x1]
        %v650 = vld [vmem:[%s320 + $0x2a] sm:$0x1]
        %v651 = vlaneseq
        %v652 = vshrl.u32 %v651, 7
        %v653 = vsub.s32 0, %v652
        %v654 = vrot.slane %v649, %v653
        %v655 = vmul.f32 %v647, %v654
        %v656 = vlaneseq
        %v657 = vshrl.u32 %v656, 7
        %v658 = vsub.s32 0, %v657
        %v659 = vrot.slane %v650, %v658
        %v660 = vmul.f32 %v648, %v659
        %v661 = vsub.f32 %v655, %v660
        %v662 = vadd.f32 %v642, %v661
        %v663 = vmul.f32 %v647, %v659
        %v664 = vmul.f32 %v648, %v654
        %v665 = vadd.f32 %v663, %v664
        %v666 = vadd.f32 %v646, %v665
        %v667 = vld [vmem:[%s293 + $0xa8] sm:$0xff]
        %v668 = vld [vmem:[%s302 + $0xa8] sm:$0xff]
        %v669 = vld [vmem:[%s311 + $0x2d] sm:$0x1]
        %v670 = vld [vmem:[%s320 + $0x2d] sm:$0x1]
        %v671 = vlaneseq
        %v672 = vshrl.u32 %v671, 7
        %v673 = vsub.s32 0, %v672
        %v674 = vrot.slane %v669, %v673
        %v675 = vmul.f32 %v667, %v674
        %v676 = vlaneseq
        %v677 = vshrl.u32 %v676, 7
        %v678 = vsub.s32 0, %v677
        %v679 = vrot.slane %v670, %v678
        %v680 = vmul.f32 %v668, %v679
        %v681 = vsub.f32 %v675, %v680
        %v682 = vadd.f32 %v662, %v681
        %v683 = vmul.f32 %v667, %v679
        %v684 = vmul.f32 %v668, %v674
        %v685 = vadd.f32 %v683, %v684
        %v686 = vadd.f32 %v666, %v685
        %v687 = vld [vmem:[%s293 + $0x20] sm:$0xff]
        %v688 = vld [vmem:[%s302 + $0x20] sm:$0xff]
        %v689 = vld [vmem:[%s311 + $0x30] sm:$0x1]
        %v690 = vld [vmem:[%s320 + $0x30] sm:$0x1]
        %v691 = vlaneseq
        %v692 = vshrl.u32 %v691, 7
        %v693 = vsub.s32 0, %v692
        %v694 = vrot.slane %v689, %v693
        %v695 = vmul.f32 %v687, %v694
        %v696 = vlaneseq
        %v697 = vshrl.u32 %v696, 7
        %v698 = vsub.s32 0, %v697
        %v699 = vrot.slane %v690, %v698
        %v700 = vmul.f32 %v688, %v699
        %v701 = vsub.f32 %v695, %v700
        %v702 = vadd.f32 %v682, %v701
        %v703 = vmul.f32 %v687, %v699
        %v704 = vmul.f32 %v688, %v694
        %v705 = vadd.f32 %v703, %v704
        %v706 = vadd.f32 %v686, %v705
        %v707 = vld [vmem:[%s293 + $0x50] sm:$0xff]
        %v708 = vld [vmem:[%s302 + $0x50] sm:$0xff]
        %v709 = vld [vmem:[%s311 + $0x33] sm:$0x1]
        %v710 = vld [vmem:[%s320 + $0x33] sm:$0x1]
        %v711 = vlaneseq
        %v712 = vshrl.u32 %v711, 7
        %v713 = vsub.s32 0, %v712
        %v714 = vrot.slane %v709, %v713
        %v715 = vmul.f32 %v707, %v714
        %v716 = vlaneseq
        %v717 = vshrl.u32 %v716, 7
        %v718 = vsub.s32 0, %v717
        %v719 = vrot.slane %v710, %v718
        %v720 = vmul.f32 %v708, %v719
        %v721 = vsub.f32 %v715, %v720
        %v722 = vadd.f32 %v702, %v721
        %v723 = vmul.f32 %v707, %v719
        %v724 = vmul.f32 %v708, %v714
        %v725 = vadd.f32 %v723, %v724
        %v726 = vadd.f32 %v706, %v725
        %v727 = vld [vmem:[%s293 + $0x80] sm:$0xff]
        %v728 = vld [vmem:[%s302 + $0x80] sm:$0xff]
        %v729 = vld [vmem:[%s311 + $0x36] sm:$0x1]
        %v730 = vld [vmem:[%s320 + $0x36] sm:$0x1]
        %v731 = vlaneseq
        %v732 = vshrl.u32 %v731, 7
        %v733 = vsub.s32 0, %v732
        %v734 = vrot.slane %v729, %v733
        %v735 = vmul.f32 %v727, %v734
        %v736 = vlaneseq
        %v737 = vshrl.u32 %v736, 7
        %v738 = vsub.s32 0, %v737
        %v739 = vrot.slane %v730, %v738
        %v740 = vmul.f32 %v728, %v739
        %v741 = vsub.f32 %v735, %v740
        %v742 = vadd.f32 %v722, %v741
        %v743 = vmul.f32 %v727, %v739
        %v744 = vmul.f32 %v728, %v734
        %v745 = vadd.f32 %v743, %v744
        %v746 = vadd.f32 %v726, %v745
        %v747 = vld [vmem:[%s293 + $0xb0] sm:$0xff]
        %v748 = vld [vmem:[%s302 + $0xb0] sm:$0xff]
        %v749 = vld [vmem:[%s311 + $0x39] sm:$0x1]
        %v750 = vld [vmem:[%s320 + $0x39] sm:$0x1]
        %v751 = vlaneseq
        %v752 = vshrl.u32 %v751, 7
        %v753 = vsub.s32 0, %v752
        %v754 = vrot.slane %v749, %v753
        %v755 = vmul.f32 %v747, %v754
        %v756 = vlaneseq
        %v757 = vshrl.u32 %v756, 7
        %v758 = vsub.s32 0, %v757
        %v759 = vrot.slane %v750, %v758
        %v760 = vmul.f32 %v748, %v759
        %v761 = vsub.f32 %v755, %v760
        %v762 = vadd.f32 %v742, %v761
        %v763 = vmul.f32 %v747, %v759
        %v764 = vmul.f32 %v748, %v754
        %v765 = vadd.f32 %v763, %v764
        %v766 = vadd.f32 %v746, %v765
        %v767 = vld [vmem:[%s293 + $0x28] sm:$0xff]
        %v768 = vld [vmem:[%s302 + $0x28] sm:$0xff]
        %v769 = vld [vmem:[%s311 + $0x3c] sm:$0x1]
        %v770 = vld [vmem:[%s320 + $0x3c] sm:$0x1]
        %v771 = vlaneseq
        %v772 = vshrl.u32 %v771, 7
        %v773 = vsub.s32 0, %v772
        %v774 = vrot.slane %v769, %v773
        %v775 = vmul.f32 %v767, %v774
        %v776 = vlaneseq
        %v777 = vshrl.u32 %v776, 7
        %v778 = vsub.s32 0, %v777
        %v779 = vrot.slane %v770, %v778
        %v780 = vmul.f32 %v768, %v779
        %v781 = vsub.f32 %v775, %v780
        %v782 = vadd.f32 %v762, %v781
        %v783 = vmul.f32 %v767, %v779
        %v784 = vmul.f32 %v768, %v774
        %v785 = vadd.f32 %v783, %v784
        %v786 = vadd.f32 %v766, %v785
        %v787 = vld [vmem:[%s293 + $0x58] sm:$0xff]
        %v788 = vld [vmem:[%s302 + $0x58] sm:$0xff]
        %v789 = vld [vmem:[%s311 + $0x3f] sm:$0x1]
        %v790 = vld [vmem:[%s320 + $0x3f] sm:$0x1]
        %v791 = vlaneseq
        %v792 = vshrl.u32 %v791, 7
        %v793 = vsub.s32 0, %v792
        %v794 = vrot.slane %v789, %v793
        %v795 = vmul.f32 %v787, %v794
        %v796 = vlaneseq
        %v797 = vshrl.u32 %v796, 7
        %v798 = vsub.s32 0, %v797
        %v799 = vrot.slane %v790, %v798
        %v800 = vmul.f32 %v788, %v799
        %v801 = vsub.f32 %v795, %v800
        %v802 = vadd.f32 %v782, %v801
        %v803 = vmul.f32 %v787, %v799
        %v804 = vmul.f32 %v788, %v794
        %v805 = vadd.f32 %v803, %v804
        %v806 = vadd.f32 %v786, %v805
        %v807 = vld [vmem:[%s293 + $0x88] sm:$0xff]
        %v808 = vld [vmem:[%s302 + $0x88] sm:$0xff]
        %v809 = vld [vmem:[%s311 + $0x42] sm:$0x1]
        %v810 = vld [vmem:[%s320 + $0x42] sm:$0x1]
        %v811 = vlaneseq
        %v812 = vshrl.u32 %v811, 7
        %v813 = vsub.s32 0, %v812
        %v814 = vrot.slane %v809, %v813
        %v815 = vmul.f32 %v807, %v814
        %v816 = vlaneseq
        %v817 = vshrl.u32 %v816, 7
        %v818 = vsub.s32 0, %v817
        %v819 = vrot.slane %v810, %v818
        %v820 = vmul.f32 %v808, %v819
        %v821 = vsub.f32 %v815, %v820
        %v822 = vadd.f32 %v802, %v821
        %v823 = vmul.f32 %v807, %v819
        %v824 = vmul.f32 %v808, %v814
        %v825 = vadd.f32 %v823, %v824
        %v826 = vadd.f32 %v806, %v825
        %v827 = vld [vmem:[%s293 + $0xb8] sm:$0xff]
        %v828 = vld [vmem:[%s302 + $0xb8] sm:$0xff]
        %v829 = vld [vmem:[%s311 + $0x45] sm:$0x1]
        %v830 = vld [vmem:[%s320 + $0x45] sm:$0x1]
        %v831 = vlaneseq
        %v832 = vshrl.u32 %v831, 7
        %v833 = vsub.s32 0, %v832
        %v834 = vrot.slane %v829, %v833
        %v835 = vmul.f32 %v827, %v834
        %v836 = vlaneseq
        %v837 = vshrl.u32 %v836, 7
        %v838 = vsub.s32 0, %v837
        %v839 = vrot.slane %v830, %v838
        %v840 = vmul.f32 %v828, %v839
        %v841 = vsub.f32 %v835, %v840
        %v842 = vadd.f32 %v822, %v841
        %v843 = vmul.f32 %v827, %v839
        %v844 = vmul.f32 %v828, %v834
        %v845 = vadd.f32 %v843, %v844
        %v846 = vadd.f32 %v826, %v845
        %847 = vst [vmem:[%s359] sm:$0xff] %v842
        %848 = vst [vmem:[%s366] sm:$0xff] %v846
        %v849 = vld [vmem:[%s293] sm:$0xff]
        %v850 = vld [vmem:[%s302] sm:$0xff]
        %v851 = vld [vmem:[%s311 + $0x1] sm:$0x1]
        %v852 = vld [vmem:[%s320 + $0x1] sm:$0x1]
        %v853 = vlaneseq
        %v854 = vshrl.u32 %v853, 7
        %v855 = vsub.s32 0, %v854
        %v856 = vrot.slane %v851, %v855
        %v857 = vmul.f32 %v849, %v856
        %v858 = vlaneseq
        %v859 = vshrl.u32 %v858, 7
        %v860 = vsub.s32 0, %v859
        %v861 = vrot.slane %v852, %v860
        %v862 = vmul.f32 %v850, %v861
        %v863 = vsub.f32 %v857, %v862
        %v864 = vadd.f32 %v863, 0.0
        %v865 = vmul.f32 %v849, %v861
        %v866 = vmul.f32 %v850, %v856
        %v867 = vadd.f32 %v865, %v866
        %v868 = vadd.f32 %v867, 0.0
        %v869 = vld [vmem:[%s293 + $0x30] sm:$0xff]
        %v870 = vld [vmem:[%s302 + $0x30] sm:$0xff]
        %v871 = vld [vmem:[%s311 + $0x4] sm:$0x1]
        %v872 = vld [vmem:[%s320 + $0x4] sm:$0x1]
        %v873 = vlaneseq
        %v874 = vshrl.u32 %v873, 7
        %v875 = vsub.s32 0, %v874
        %v876 = vrot.slane %v871, %v875
        %v877 = vmul.f32 %v869, %v876
        %v878 = vlaneseq
        %v879 = vshrl.u32 %v878, 7
        %v880 = vsub.s32 0, %v879
        %v881 = vrot.slane %v872, %v880
        %v882 = vmul.f32 %v870, %v881
        %v883 = vsub.f32 %v877, %v882
        %v884 = vadd.f32 %v864, %v883
        %v885 = vmul.f32 %v869, %v881
        %v886 = vmul.f32 %v870, %v876
        %v887 = vadd.f32 %v885, %v886
        %v888 = vadd.f32 %v868, %v887
        %v889 = vld [vmem:[%s293 + $0x60] sm:$0xff]
        %v890 = vld [vmem:[%s302 + $0x60] sm:$0xff]
        %v891 = vld [vmem:[%s311 + $0x7] sm:$0x1]
        %v892 = vld [vmem:[%s320 + $0x7] sm:$0x1]
        %v893 = vlaneseq
        %v894 = vshrl.u32 %v893, 7
        %v895 = vsub.s32 0, %v894
        %v896 = vrot.slane %v891, %v895
        %v897 = vmul.f32 %v889, %v896
        %v898 = vlaneseq
        %v899 = vshrl.u32 %v898, 7
        %v900 = vsub.s32 0, %v899
        %v901 = vrot.slane %v892, %v900
        %v902 = vmul.f32 %v890, %v901
        %v903 = vsub.f32 %v897, %v902
        %v904 = vadd.f32 %v884, %v903
        %v905 = vmul.f32 %v889, %v901
        %v906 = vmul.f32 %v890, %v896
        %v907 = vadd.f32 %v905, %v906
        %v908 = vadd.f32 %v888, %v907
        %v909 = vld [vmem:[%s293 + $0x90] sm:$0xff]
        %v910 = vld [vmem:[%s302 + $0x90] sm:$0xff]
        %v911 = vld [vmem:[%s311 + $0xa] sm:$0x1]
        %v912 = vld [vmem:[%s320 + $0xa] sm:$0x1]
        %v913 = vlaneseq
        %v914 = vshrl.u32 %v913, 7
        %v915 = vsub.s32 0, %v914
        %v916 = vrot.slane %v911, %v915
        %v917 = vmul.f32 %v909, %v916
        %v918 = vlaneseq
        %v919 = vshrl.u32 %v918, 7
        %v920 = vsub.s32 0, %v919
        %v921 = vrot.slane %v912, %v920
        %v922 = vmul.f32 %v910, %v921
        %v923 = vsub.f32 %v917, %v922
        %v924 = vadd.f32 %v904, %v923
        %v925 = vmul.f32 %v909, %v921
        %v926 = vmul.f32 %v910, %v916
        %v927 = vadd.f32 %v925, %v926
        %v928 = vadd.f32 %v908, %v927
        %v929 = vld [vmem:[%s293 + $0x8] sm:$0xff]
        %v930 = vld [vmem:[%s302 + $0x8] sm:$0xff]
        %v931 = vld [vmem:[%s311 + $0xd] sm:$0x1]
        %v932 = vld [vmem:[%s320 + $0xd] sm:$0x1]
        %v933 = vlaneseq
        %v934 = vshrl.u32 %v933, 7
        %v935 = vsub.s32 0, %v934
        %v936 = vrot.slane %v931, %v935
        %v937 = vmul.f32 %v929, %v936
        %v938 = vlaneseq
        %v939 = vshrl.u32 %v938, 7
        %v940 = vsub.s32 0, %v939
        %v941 = vrot.slane %v932, %v940
        %v942 = vmul.f32 %v930, %v941
        %v943 = vsub.f32 %v937, %v942
        %v944 = vadd.f32 %v924, %v943
        %v945 = vmul.f32 %v929, %v941
        %v946 = vmul.f32 %v930, %v936
        %v947 = vadd.f32 %v945, %v946
        %v948 = vadd.f32 %v928, %v947
        %v949 = vld [vmem:[%s293 + $0x38] sm:$0xff]
        %v950 = vld [vmem:[%s302 + $0x38] sm:$0xff]
        %v951 = vld [vmem:[%s311 + $0x10] sm:$0x1]
        %v952 = vld [vmem:[%s320 + $0x10] sm:$0x1]
        %v953 = vlaneseq
        %v954 = vshrl.u32 %v953, 7
        %v955 = vsub.s32 0, %v954
        %v956 = vrot.slane %v951, %v955
        %v957 = vmul.f32 %v949, %v956
        %v958 = vlaneseq
        %v959 = vshrl.u32 %v958, 7
        %v960 = vsub.s32 0, %v959
        %v961 = vrot.slane %v952, %v960
        %v962 = vmul.f32 %v950, %v961
        %v963 = vsub.f32 %v957, %v962
        %v964 = vadd.f32 %v944, %v963
        %v965 = vmul.f32 %v949, %v961
        %v966 = vmul.f32 %v950, %v956
        %v967 = vadd.f32 %v965, %v966
        %v968 = vadd.f32 %v948, %v967
        %v969 = vld [vmem:[%s293 + $0x68] sm:$0xff]
        %v970 = vld [vmem:[%s302 + $0x68] sm:$0xff]
        %v971 = vld [vmem:[%s311 + $0x13] sm:$0x1]
        %v972 = vld [vmem:[%s320 + $0x13] sm:$0x1]
        %v973 = vlaneseq
        %v974 = vshrl.u32 %v973, 7
        %v975 = vsub.s32 0, %v974
        %v976 = vrot.slane %v971, %v975
        %v977 = vmul.f32 %v969, %v976
        %v978 = vlaneseq
        %v979 = vshrl.u32 %v978, 7
        %v980 = vsub.s32 0, %v979
        %v981 = vrot.slane %v972, %v980
        %v982 = vmul.f32 %v970, %v981
        %v983 = vsub.f32 %v977, %v982
        %v984 = vadd.f32 %v964, %v983
        %v985 = vmul.f32 %v969, %v981
        %v986 = vmul.f32 %v970, %v976
        %v987 = vadd.f32 %v985, %v986
        %v988 = vadd.f32 %v968, %v987
        %v989 = vld [vmem:[%s293 + $0x98] sm:$0xff]
        %v990 = vld [vmem:[%s302 + $0x98] sm:$0xff]
        %v991 = vld [vmem:[%s311 + $0x16] sm:$0x1]
        %v992 = vld [vmem:[%s320 + $0x16] sm:$0x1]
        %v993 = vlaneseq
        %v994 = vshrl.u32 %v993, 7
        %v995 = vsub.s32 0, %v994
        %v996 = vrot.slane %v991, %v995
        %v997 = vmul.f32 %v989, %v996
        %v998 = vlaneseq
        %v999 = vshrl.u32 %v998, 7
        %v1000 = vsub.s32 0, %v999
        %v1001 = vrot.slane %v992, %v1000
        %v1002 = vmul.f32 %v990, %v1001
        %v1003 = vsub.f32 %v997, %v1002
        %v1004 = vadd.f32 %v984, %v1003
        %v1005 = vmul.f32 %v989, %v1001
        %v1006 = vmul.f32 %v990, %v996
        %v1007 = vadd.f32 %v1005, %v1006
        %v1008 = vadd.f32 %v988, %v1007
        %v1009 = vld [vmem:[%s293 + $0x10] sm:$0xff]
        %v1010 = vld [vmem:[%s302 + $0x10] sm:$0xff]
        %v1011 = vld [vmem:[%s311 + $0x19] sm:$0x1]
        %v1012 = vld [vmem:[%s320 + $0x19] sm:$0x1]
        %v1013 = vlaneseq
        %v1014 = vshrl.u32 %v1013, 7
        %v1015 = vsub.s32 0, %v1014
        %v1016 = vrot.slane %v1011, %v1015
        %v1017 = vmul.f32 %v1009, %v1016
        %v1018 = vlaneseq
        %v1019 = vshrl.u32 %v1018, 7
        %v1020 = vsub.s32 0, %v1019
        %v1021 = vrot.slane %v1012, %v1020
        %v1022 = vmul.f32 %v1010, %v1021
        %v1023 = vsub.f32 %v1017, %v1022
        %v1024 = vadd.f32 %v1004, %v1023
        %v1025 = vmul.f32 %v1009, %v1021
        %v1026 = vmul.f32 %v1010, %v1016
        %v1027 = vadd.f32 %v1025, %v1026
        %v1028 = vadd.f32 %v1008, %v1027
        %v1029 = vld [vmem:[%s293 + $0x40] sm:$0xff]
        %v1030 = vld [vmem:[%s302 + $0x40] sm:$0xff]
        %v1031 = vld [vmem:[%s311 + $0x1c] sm:$0x1]
        %v1032 = vld [vmem:[%s320 + $0x1c] sm:$0x1]
        %v1033 = vlaneseq
        %v1034 = vshrl.u32 %v1033, 7
        %v1035 = vsub.s32 0, %v1034
        %v1036 = vrot.slane %v1031, %v1035
        %v1037 = vmul.f32 %v1029, %v1036
        %v1038 = vlaneseq
        %v1039 = vshrl.u32 %v1038, 7
        %v1040 = vsub.s32 0, %v1039
        %v1041 = vrot.slane %v1032, %v1040
        %v1042 = vmul.f32 %v1030, %v1041
        %v1043 = vsub.f32 %v1037, %v1042
        %v1044 = vadd.f32 %v1024, %v1043
        %v1045 = vmul.f32 %v1029, %v1041
        %v1046 = vmul.f32 %v1030, %v1036
        %v1047 = vadd.f32 %v1045, %v1046
        %v1048 = vadd.f32 %v1028, %v1047
        %v1049 = vld [vmem:[%s293 + $0x70] sm:$0xff]
        %v1050 = vld [vmem:[%s302 + $0x70] sm:$0xff]
        %v1051 = vld [vmem:[%s311 + $0x1f] sm:$0x1]
        %v1052 = vld [vmem:[%s320 + $0x1f] sm:$0x1]
        %v1053 = vlaneseq
        %v1054 = vshrl.u32 %v1053, 7
        %v1055 = vsub.s32 0, %v1054
        %v1056 = vrot.slane %v1051, %v1055
        %v1057 = vmul.f32 %v1049, %v1056
        %v1058 = vlaneseq
        %v1059 = vshrl.u32 %v1058, 7
        %v1060 = vsub.s32 0, %v1059
        %v1061 = vrot.slane %v1052, %v1060
        %v1062 = vmul.f32 %v1050, %v1061
        %v1063 = vsub.f32 %v1057, %v1062
        %v1064 = vadd.f32 %v1044, %v1063
        %v1065 = vmul.f32 %v1049, %v1061
        %v1066 = vmul.f32 %v1050, %v1056
        %v1067 = vadd.f32 %v1065, %v1066
        %v1068 = vadd.f32 %v1048, %v1067
        %v1069 = vld [vmem:[%s293 + $0xa0] sm:$0xff]
        %v1070 = vld [vmem:[%s302 + $0xa0] sm:$0xff]
        %v1071 = vld [vmem:[%s311 + $0x22] sm:$0x1]
        %v1072 = vld [vmem:[%s320 + $0x22] sm:$0x1]
        %v1073 = vlaneseq
        %v1074 = vshrl.u32 %v1073, 7
        %v1075 = vsub.s32 0, %v1074
        %v1076 = vrot.slane %v1071, %v1075
        %v1077 = vmul.f32 %v1069, %v1076
        %v1078 = vlaneseq
        %v1079 = vshrl.u32 %v1078, 7
        %v1080 = vsub.s32 0, %v1079
        %v1081 = vrot.slane %v1072, %v1080
        %v1082 = vmul.f32 %v1070, %v1081
        %v1083 = vsub.f32 %v1077, %v1082
        %v1084 = vadd.f32 %v1064, %v1083
        %v1085 = vmul.f32 %v1069, %v1081
        %v1086 = vmul.f32 %v1070, %v1076
        %v1087 = vadd.f32 %v1085, %v1086
        %v1088 = vadd.f32 %v1068, %v1087
        %v1089 = vld [vmem:[%s293 + $0x18] sm:$0xff]
        %v1090 = vld [vmem:[%s302 + $0x18] sm:$0xff]
        %v1091 = vld [vmem:[%s311 + $0x25] sm:$0x1]
        %v1092 = vld [vmem:[%s320 + $0x25] sm:$0x1]
        %v1093 = vlaneseq
        %v1094 = vshrl.u32 %v1093, 7
        %v1095 = vsub.s32 0, %v1094
        %v1096 = vrot.slane %v1091, %v1095
        %v1097 = vmul.f32 %v1089, %v1096
        %v1098 = vlaneseq
        %v1099 = vshrl.u32 %v1098, 7
        %v1100 = vsub.s32 0, %v1099
        %v1101 = vrot.slane %v1092, %v1100
        %v1102 = vmul.f32 %v1090, %v1101
        %v1103 = vsub.f32 %v1097, %v1102
        %v1104 = vadd.f32 %v1084, %v1103
        %v1105 = vmul.f32 %v1089, %v1101
        %v1106 = vmul.f32 %v1090, %v1096
        %v1107 = vadd.f32 %v1105, %v1106
        %v1108 = vadd.f32 %v1088, %v1107
        %v1109 = vld [vmem:[%s293 + $0x48] sm:$0xff]
        %v1110 = vld [vmem:[%s302 + $0x48] sm:$0xff]
        %v1111 = vld [vmem:[%s311 + $0x28] sm:$0x1]
        %v1112 = vld [vmem:[%s320 + $0x28] sm:$0x1]
        %v1113 = vlaneseq
        %v1114 = vshrl.u32 %v1113, 7
        %v1115 = vsub.s32 0, %v1114
        %v1116 = vrot.slane %v1111, %v1115
        %v1117 = vmul.f32 %v1109, %v1116
        %v1118 = vlaneseq
        %v1119 = vshrl.u32 %v1118, 7
        %v1120 = vsub.s32 0, %v1119
        %v1121 = vrot.slane %v1112, %v1120
        %v1122 = vmul.f32 %v1110, %v1121
        %v1123 = vsub.f32 %v1117, %v1122
        %v1124 = vadd.f32 %v1104, %v1123
        %v1125 = vmul.f32 %v1109, %v1121
        %v1126 = vmul.f32 %v1110, %v1116
        %v1127 = vadd.f32 %v1125, %v1126
        %v1128 = vadd.f32 %v1108, %v1127
        %v1129 = vld [vmem:[%s293 + $0x78] sm:$0xff]
        %v1130 = vld [vmem:[%s302 + $0x78] sm:$0xff]
        %v1131 = vld [vmem:[%s311 + $0x2b] sm:$0x1]
        %v1132 = vld [vmem:[%s320 + $0x2b] sm:$0x1]
        %v1133 = vlaneseq
        %v1134 = vshrl.u32 %v1133, 7
        %v1135 = vsub.s32 0, %v1134
        %v1136 = vrot.slane %v1131, %v1135
        %v1137 = vmul.f32 %v1129, %v1136
        %v1138 = vlaneseq
        %v1139 = vshrl.u32 %v1138, 7
        %v1140 = vsub.s32 0, %v1139
        %v1141 = vrot.slane %v1132, %v1140
        %v1142 = vmul.f32 %v1130, %v1141
        %v1143 = vsub.f32 %v1137, %v1142
        %v1144 = vadd.f32 %v1124, %v1143
        %v1145 = vmul.f32 %v1129, %v1141
        %v1146 = vmul.f32 %v1130, %v1136
        %v1147 = vadd.f32 %v1145, %v1146
        %v1148 = vadd.f32 %v1128, %v1147
        %v1149 = vld [vmem:[%s293 + $0xa8] sm:$0xff]
        %v1150 = vld [vmem:[%s302 + $0xa8] sm:$0xff]
        %v1151 = vld [vmem:[%s311 + $0x2e] sm:$0x1]
        %v1152 = vld [vmem:[%s320 + $0x2e] sm:$0x1]
        %v1153 = vlaneseq
        %v1154 = vshrl.u32 %v1153, 7
        %v1155 = vsub.s32 0, %v1154
        %v1156 = vrot.slane %v1151, %v1155
        %v1157 = vmul.f32 %v1149, %v1156
        %v1158 = vlaneseq
        %v1159 = vshrl.u32 %v1158, 7
        %v1160 = vsub.s32 0, %v1159
        %v1161 = vrot.slane %v1152, %v1160
        %v1162 = vmul.f32 %v1150, %v1161
        %v1163 = vsub.f32 %v1157, %v1162
        %v1164 = vadd.f32 %v1144, %v1163
        %v1165 = vmul.f32 %v1149, %v1161
        %v1166 = vmul.f32 %v1150, %v1156
        %v1167 = vadd.f32 %v1165, %v1166
        %v1168 = vadd.f32 %v1148, %v1167
        %v1169 = vld [vmem:[%s293 + $0x20] sm:$0xff]
        %v1170 = vld [vmem:[%s302 + $0x20] sm:$0xff]
        %v1171 = vld [vmem:[%s311 + $0x31] sm:$0x1]
        %v1172 = vld [vmem:[%s320 + $0x31] sm:$0x1]
        %v1173 = vlaneseq
        %v1174 = vshrl.u32 %v1173, 7
        %v1175 = vsub.s32 0, %v1174
        %v1176 = vrot.slane %v1171, %v1175
        %v1177 = vmul.f32 %v1169, %v1176
        %v1178 = vlaneseq
        %v1179 = vshrl.u32 %v1178, 7
        %v1180 = vsub.s32 0, %v1179
        %v1181 = vrot.slane %v1172, %v1180
        %v1182 = vmul.f32 %v1170, %v1181
        %v1183 = vsub.f32 %v1177, %v1182
        %v1184 = vadd.f32 %v1164, %v1183
        %v1185 = vmul.f32 %v1169, %v1181
        %v1186 = vmul.f32 %v1170, %v1176
        %v1187 = vadd.f32 %v1185, %v1186
        %v1188 = vadd.f32 %v1168, %v1187
        %v1189 = vld [vmem:[%s293 + $0x50] sm:$0xff]
        %v1190 = vld [vmem:[%s302 + $0x50] sm:$0xff]
        %v1191 = vld [vmem:[%s311 + $0x34] sm:$0x1]
        %v1192 = vld [vmem:[%s320 + $0x34] sm:$0x1]
        %v1193 = vlaneseq
        %v1194 = vshrl.u32 %v1193, 7
        %v1195 = vsub.s32 0, %v1194
        %v1196 = vrot.slane %v1191, %v1195
        %v1197 = vmul.f32 %v1189, %v1196
        %v1198 = vlaneseq
        %v1199 = vshrl.u32 %v1198, 7
        %v1200 = vsub.s32 0, %v1199
        %v1201 = vrot.slane %v1192, %v1200
        %v1202 = vmul.f32 %v1190, %v1201
        %v1203 = vsub.f32 %v1197, %v1202
        %v1204 = vadd.f32 %v1184, %v1203
        %v1205 = vmul.f32 %v1189, %v1201
        %v1206 = vmul.f32 %v1190, %v1196
        %v1207 = vadd.f32 %v1205, %v1206
        %v1208 = vadd.f32 %v1188, %v1207
        %v1209 = vld [vmem:[%s293 + $0x80] sm:$0xff]
        %v1210 = vld [vmem:[%s302 + $0x80] sm:$0xff]
        %v1211 = vld [vmem:[%s311 + $0x37] sm:$0x1]
        %v1212 = vld [vmem:[%s320 + $0x37] sm:$0x1]
        %v1213 = vlaneseq
        %v1214 = vshrl.u32 %v1213, 7
        %v1215 = vsub.s32 0, %v1214
        %v1216 = vrot.slane %v1211, %v1215
        %v1217 = vmul.f32 %v1209, %v1216
        %v1218 = vlaneseq
        %v1219 = vshrl.u32 %v1218, 7
        %v1220 = vsub.s32 0, %v1219
        %v1221 = vrot.slane %v1212, %v1220
        %v1222 = vmul.f32 %v1210, %v1221
        %v1223 = vsub.f32 %v1217, %v1222
        %v1224 = vadd.f32 %v1204, %v1223
        %v1225 = vmul.f32 %v1209, %v1221
        %v1226 = vmul.f32 %v1210, %v1216
        %v1227 = vadd.f32 %v1225, %v1226
        %v1228 = vadd.f32 %v1208, %v1227
        %v1229 = vld [vmem:[%s293 + $0xb0] sm:$0xff]
        %v1230 = vld [vmem:[%s302 + $0xb0] sm:$0xff]
        %v1231 = vld [vmem:[%s311 + $0x3a] sm:$0x1]
        %v1232 = vld [vmem:[%s320 + $0x3a] sm:$0x1]
        %v1233 = vlaneseq
        %v1234 = vshrl.u32 %v1233, 7
        %v1235 = vsub.s32 0, %v1234
        %v1236 = vrot.slane %v1231, %v1235
        %v1237 = vmul.f32 %v1229, %v1236
        %v1238 = vlaneseq
        %v1239 = vshrl.u32 %v1238, 7
        %v1240 = vsub.s32 0, %v1239
        %v1241 = vrot.slane %v1232, %v1240
        %v1242 = vmul.f32 %v1230, %v1241
        %v1243 = vsub.f32 %v1237, %v1242
        %v1244 = vadd.f32 %v1224, %v1243
        %v1245 = vmul.f32 %v1229, %v1241
        %v1246 = vmul.f32 %v1230, %v1236
        %v1247 = vadd.f32 %v1245, %v1246
        %v1248 = vadd.f32 %v1228, %v1247
        %v1249 = vld [vmem:[%s293 + $0x28] sm:$0xff]
        %v1250 = vld [vmem:[%s302 + $0x28] sm:$0xff]
        %v1251 = vld [vmem:[%s311 + $0x3d] sm:$0x1]
        %v1252 = vld [vmem:[%s320 + $0x3d] sm:$0x1]
        %v1253 = vlaneseq
        %v1254 = vshrl.u32 %v1253, 7
        %v1255 = vsub.s32 0, %v1254
        %v1256 = vrot.slane %v1251, %v1255
        %v1257 = vmul.f32 %v1249, %v1256
        %v1258 = vlaneseq
        %v1259 = vshrl.u32 %v1258, 7
        %v1260 = vsub.s32 0, %v1259
        %v1261 = vrot.slane %v1252, %v1260
        %v1262 = vmul.f32 %v1250, %v1261
        %v1263 = vsub.f32 %v1257, %v1262
        %v1264 = vadd.f32 %v1244, %v1263
        %v1265 = vmul.f32 %v1249, %v1261
        %v1266 = vmul.f32 %v1250, %v1256
        %v1267 = vadd.f32 %v1265, %v1266
        %v1268 = vadd.f32 %v1248, %v1267
        %v1269 = vld [vmem:[%s293 + $0x58] sm:$0xff]
        %v1270 = vld [vmem:[%s302 + $0x58] sm:$0xff]
        %v1271 = vld [vmem:[%s311 + $0x40] sm:$0x1]
        %v1272 = vld [vmem:[%s320 + $0x40] sm:$0x1]
        %v1273 = vlaneseq
        %v1274 = vshrl.u32 %v1273, 7
        %v1275 = vsub.s32 0, %v1274
        %v1276 = vrot.slane %v1271, %v1275
        %v1277 = vmul.f32 %v1269, %v1276
        %v1278 = vlaneseq
        %v1279 = vshrl.u32 %v1278, 7
        %v1280 = vsub.s32 0, %v1279
        %v1281 = vrot.slane %v1272, %v1280
        %v1282 = vmul.f32 %v1270, %v1281
        %v1283 = vsub.f32 %v1277, %v1282
        %v1284 = vadd.f32 %v1264, %v1283
        %v1285 = vmul.f32 %v1269, %v1281
        %v1286 = vmul.f32 %v1270, %v1276
        %v1287 = vadd.f32 %v1285, %v1286
        %v1288 = vadd.f32 %v1268, %v1287
        %v1289 = vld [vmem:[%s293 + $0x88] sm:$0xff]
        %v1290 = vld [vmem:[%s302 + $0x88] sm:$0xff]
        %v1291 = vld [vmem:[%s311 + $0x43] sm:$0x1]
        %v1292 = vld [vmem:[%s320 + $0x43] sm:$0x1]
        %v1293 = vlaneseq
        %v1294 = vshrl.u32 %v1293, 7
        %v1295 = vsub.s32 0, %v1294
        %v1296 = vrot.slane %v1291, %v1295
        %v1297 = vmul.f32 %v1289, %v1296
        %v1298 = vlaneseq
        %v1299 = vshrl.u32 %v1298, 7
        %v1300 = vsub.s32 0, %v1299
        %v1301 = vrot.slane %v1292, %v1300
        %v1302 = vmul.f32 %v1290, %v1301
        %v1303 = vsub.f32 %v1297, %v1302
        %v1304 = vadd.f32 %v1284, %v1303
        %v1305 = vmul.f32 %v1289, %v1301
        %v1306 = vmul.f32 %v1290, %v1296
        %v1307 = vadd.f32 %v1305, %v1306
        %v1308 = vadd.f32 %v1288, %v1307
        %v1309 = vld [vmem:[%s293 + $0xb8] sm:$0xff]
        %v1310 = vld [vmem:[%s302 + $0xb8] sm:$0xff]
        %v1311 = vld [vmem:[%s311 + $0x46] sm:$0x1]
        %v1312 = vld [vmem:[%s320 + $0x46] sm:$0x1]
        %v1313 = vlaneseq
        %v1314 = vshrl.u32 %v1313, 7
        %v1315 = vsub.s32 0, %v1314
        %v1316 = vrot.slane %v1311, %v1315
        %v1317 = vmul.f32 %v1309, %v1316
        %v1318 = vlaneseq
        %v1319 = vshrl.u32 %v1318, 7
        %v1320 = vsub.s32 0, %v1319
        %v1321 = vrot.slane %v1312, %v1320
        %v1322 = vmul.f32 %v1310, %v1321
        %v1323 = vsub.f32 %v1317, %v1322
        %v1324 = vadd.f32 %v1304, %v1323
        %v1325 = vmul.f32 %v1309, %v1321
        %v1326 = vmul.f32 %v1310, %v1316
        %v1327 = vadd.f32 %v1325, %v1326
        %v1328 = vadd.f32 %v1308, %v1327
        %1329 = vst [vmem:[%s359 + $0x8] sm:$0xff] %v1324
        %1330 = vst [vmem:[%s366 + $0x8] sm:$0xff] %v1328
        %v1331 = vld [vmem:[%s293] sm:$0xff]
        %v1332 = vld [vmem:[%s302] sm:$0xff]
        %v1333 = vld [vmem:[%s311 + $0x2] sm:$0x1]
        %v1334 = vld [vmem:[%s320 + $0x2] sm:$0x1]
        %v1335 = vlaneseq
        %v1336 = vshrl.u32 %v1335, 7
        %v1337 = vsub.s32 0, %v1336
        %v1338 = vrot.slane %v1333, %v1337
        %v1339 = vmul.f32 %v1331, %v1338
        %v1340 = vlaneseq
        %v1341 = vshrl.u32 %v1340, 7
        %v1342 = vsub.s32 0, %v1341
        %v1343 = vrot.slane %v1334, %v1342
        %v1344 = vmul.f32 %v1332, %v1343
        %v1345 = vsub.f32 %v1339, %v1344
        %v1346 = vadd.f32 %v1345, 0.0
        %v1347 = vmul.f32 %v1331, %v1343
        %v1348 = vmul.f32 %v1332, %v1338
        %v1349 = vadd.f32 %v1347, %v1348
        %v1350 = vadd.f32 %v1349, 0.0
        %v1351 = vld [vmem:[%s293 + $0x30] sm:$0xff]
        %v1352 = vld [vmem:[%s302 + $0x30] sm:$0xff]
        %v1353 = vld [vmem:[%s311 + $0x5] sm:$0x1]
        %v1354 = vld [vmem:[%s320 + $0x5] sm:$0x1]
        %v1355 = vlaneseq
        %v1356 = vshrl.u32 %v1355, 7
        %v1357 = vsub.s32 0, %v1356
        %v1358 = vrot.slane %v1353, %v1357
        %v1359 = vmul.f32 %v1351, %v1358
        %v1360 = vlaneseq
        %v1361 = vshrl.u32 %v1360, 7
        %v1362 = vsub.s32 0, %v1361
        %v1363 = vrot.slane %v1354, %v1362
        %v1364 = vmul.f32 %v1352, %v1363
        %v1365 = vsub.f32 %v1359, %v1364
        %v1366 = vadd.f32 %v1346, %v1365
        %v1367 = vmul.f32 %v1351, %v1363
        %v1368 = vmul.f32 %v1352, %v1358
        %v1369 = vadd.f32 %v1367, %v1368
        %v1370 = vadd.f32 %v1350, %v1369
        %v1371 = vld [vmem:[%s293 + $0x60] sm:$0xff]
        %v1372 = vld [vmem:[%s302 + $0x60] sm:$0xff]
        %v1373 = vld [vmem:[%s311 + $0x8] sm:$0x1]
        %v1374 = vld [vmem:[%s320 + $0x8] sm:$0x1]
        %v1375 = vlaneseq
        %v1376 = vshrl.u32 %v1375, 7
        %v1377 = vsub.s32 0, %v1376
        %v1378 = vrot.slane %v1373, %v1377
        %v1379 = vmul.f32 %v1371, %v1378
        %v1380 = vlaneseq
        %v1381 = vshrl.u32 %v1380, 7
        %v1382 = vsub.s32 0, %v1381
        %v1383 = vrot.slane %v1374, %v1382
        %v1384 = vmul.f32 %v1372, %v1383
        %v1385 = vsub.f32 %v1379, %v1384
        %v1386 = vadd.f32 %v1366, %v1385
        %v1387 = vmul.f32 %v1371, %v1383
        %v1388 = vmul.f32 %v1372, %v1378
        %v1389 = vadd.f32 %v1387, %v1388
        %v1390 = vadd.f32 %v1370, %v1389
        %v1391 = vld [vmem:[%s293 + $0x90] sm:$0xff]
        %v1392 = vld [vmem:[%s302 + $0x90] sm:$0xff]
        %v1393 = vld [vmem:[%s311 + $0xb] sm:$0x1]
        %v1394 = vld [vmem:[%s320 + $0xb] sm:$0x1]
        %v1395 = vlaneseq
        %v1396 = vshrl.u32 %v1395, 7
        %v1397 = vsub.s32 0, %v1396
        %v1398 = vrot.slane %v1393, %v1397
        %v1399 = vmul.f32 %v1391, %v1398
        %v1400 = vlaneseq
        %v1401 = vshrl.u32 %v1400, 7
        %v1402 = vsub.s32 0, %v1401
        %v1403 = vrot.slane %v1394, %v1402
        %v1404 = vmul.f32 %v1392, %v1403
        %v1405 = vsub.f32 %v1399, %v1404
        %v1406 = vadd.f32 %v1386, %v1405
        %v1407 = vmul.f32 %v1391, %v1403
        %v1408 = vmul.f32 %v1392, %v1398
        %v1409 = vadd.f32 %v1407, %v1408
        %v1410 = vadd.f32 %v1390, %v1409
        %v1411 = vld [vmem:[%s293 + $0x8] sm:$0xff]
        %v1412 = vld [vmem:[%s302 + $0x8] sm:$0xff]
        %v1413 = vld [vmem:[%s311 + $0xe] sm:$0x1]
        %v1414 = vld [vmem:[%s320 + $0xe] sm:$0x1]
        %v1415 = vlaneseq
        %v1416 = vshrl.u32 %v1415, 7
        %v1417 = vsub.s32 0, %v1416
        %v1418 = vrot.slane %v1413, %v1417
        %v1419 = vmul.f32 %v1411, %v1418
        %v1420 = vlaneseq
        %v1421 = vshrl.u32 %v1420, 7
        %v1422 = vsub.s32 0, %v1421
        %v1423 = vrot.slane %v1414, %v1422
        %v1424 = vmul.f32 %v1412, %v1423
        %v1425 = vsub.f32 %v1419, %v1424
        %v1426 = vadd.f32 %v1406, %v1425
        %v1427 = vmul.f32 %v1411, %v1423
        %v1428 = vmul.f32 %v1412, %v1418
        %v1429 = vadd.f32 %v1427, %v1428
        %v1430 = vadd.f32 %v1410, %v1429
        %v1431 = vld [vmem:[%s293 + $0x38] sm:$0xff]
        %v1432 = vld [vmem:[%s302 + $0x38] sm:$0xff]
        %v1433 = vld [vmem:[%s311 + $0x11] sm:$0x1]
        %v1434 = vld [vmem:[%s320 + $0x11] sm:$0x1]
        %v1435 = vlaneseq
        %v1436 = vshrl.u32 %v1435, 7
        %v1437 = vsub.s32 0, %v1436
        %v1438 = vrot.slane %v1433, %v1437
        %v1439 = vmul.f32 %v1431, %v1438
        %v1440 = vlaneseq
        %v1441 = vshrl.u32 %v1440, 7
        %v1442 = vsub.s32 0, %v1441
        %v1443 = vrot.slane %v1434, %v1442
        %v1444 = vmul.f32 %v1432, %v1443
        %v1445 = vsub.f32 %v1439, %v1444
        %v1446 = vadd.f32 %v1426, %v1445
        %v1447 = vmul.f32 %v1431, %v1443
        %v1448 = vmul.f32 %v1432, %v1438
        %v1449 = vadd.f32 %v1447, %v1448
        %v1450 = vadd.f32 %v1430, %v1449
        %v1451 = vld [vmem:[%s293 + $0x68] sm:$0xff]
        %v1452 = vld [vmem:[%s302 + $0x68] sm:$0xff]
        %v1453 = vld [vmem:[%s311 + $0x14] sm:$0x1]
        %v1454 = vld [vmem:[%s320 + $0x14] sm:$0x1]
        %v1455 = vlaneseq
        %v1456 = vshrl.u32 %v1455, 7
        %v1457 = vsub.s32 0, %v1456
        %v1458 = vrot.slane %v1453, %v1457
        %v1459 = vmul.f32 %v1451, %v1458
        %v1460 = vlaneseq
        %v1461 = vshrl.u32 %v1460, 7
        %v1462 = vsub.s32 0, %v1461
        %v1463 = vrot.slane %v1454, %v1462
        %v1464 = vmul.f32 %v1452, %v1463
        %v1465 = vsub.f32 %v1459, %v1464
        %v1466 = vadd.f32 %v1446, %v1465
        %v1467 = vmul.f32 %v1451, %v1463
        %v1468 = vmul.f32 %v1452, %v1458
        %v1469 = vadd.f32 %v1467, %v1468
        %v1470 = vadd.f32 %v1450, %v1469
        %v1471 = vld [vmem:[%s293 + $0x98] sm:$0xff]
        %v1472 = vld [vmem:[%s302 + $0x98] sm:$0xff]
        %v1473 = vld [vmem:[%s311 + $0x17] sm:$0x1]
        %v1474 = vld [vmem:[%s320 + $0x17] sm:$0x1]
        %v1475 = vlaneseq
        %v1476 = vshrl.u32 %v1475, 7
        %v1477 = vsub.s32 0, %v1476
        %v1478 = vrot.slane %v1473, %v1477
        %v1479 = vmul.f32 %v1471, %v1478
        %v1480 = vlaneseq
        %v1481 = vshrl.u32 %v1480, 7
        %v1482 = vsub.s32 0, %v1481
        %v1483 = vrot.slane %v1474, %v1482
        %v1484 = vmul.f32 %v1472, %v1483
        %v1485 = vsub.f32 %v1479, %v1484
        %v1486 = vadd.f32 %v1466, %v1485
        %v1487 = vmul.f32 %v1471, %v1483
        %v1488 = vmul.f32 %v1472, %v1478
        %v1489 = vadd.f32 %v1487, %v1488
        %v1490 = vadd.f32 %v1470, %v1489
        %v1491 = vld [vmem:[%s293 + $0x10] sm:$0xff]
        %v1492 = vld [vmem:[%s302 + $0x10] sm:$0xff]
        %v1493 = vld [vmem:[%s311 + $0x1a] sm:$0x1]
        %v1494 = vld [vmem:[%s320 + $0x1a] sm:$0x1]
        %v1495 = vlaneseq
        %v1496 = vshrl.u32 %v1495, 7
        %v1497 = vsub.s32 0, %v1496
        %v1498 = vrot.slane %v1493, %v1497
        %v1499 = vmul.f32 %v1491, %v1498
        %v1500 = vlaneseq
        %v1501 = vshrl.u32 %v1500, 7
        %v1502 = vsub.s32 0, %v1501
        %v1503 = vrot.slane %v1494, %v1502
        %v1504 = vmul.f32 %v1492, %v1503
        %v1505 = vsub.f32 %v1499, %v1504
        %v1506 = vadd.f32 %v1486, %v1505
        %v1507 = vmul.f32 %v1491, %v1503
        %v1508 = vmul.f32 %v1492, %v1498
        %v1509 = vadd.f32 %v1507, %v1508
        %v1510 = vadd.f32 %v1490, %v1509
        %v1511 = vld [vmem:[%s293 + $0x40] sm:$0xff]
        %v1512 = vld [vmem:[%s302 + $0x40] sm:$0xff]
        %v1513 = vld [vmem:[%s311 + $0x1d] sm:$0x1]
        %v1514 = vld [vmem:[%s320 + $0x1d] sm:$0x1]
        %v1515 = vlaneseq
        %v1516 = vshrl.u32 %v1515, 7
        %v1517 = vsub.s32 0, %v1516
        %v1518 = vrot.slane %v1513, %v1517
        %v1519 = vmul.f32 %v1511, %v1518
        %v1520 = vlaneseq
        %v1521 = vshrl.u32 %v1520, 7
        %v1522 = vsub.s32 0, %v1521
        %v1523 = vrot.slane %v1514, %v1522
        %v1524 = vmul.f32 %v1512, %v1523
        %v1525 = vsub.f32 %v1519, %v1524
        %v1526 = vadd.f32 %v1506, %v1525
        %v1527 = vmul.f32 %v1511, %v1523
        %v1528 = vmul.f32 %v1512, %v1518
        %v1529 = vadd.f32 %v1527, %v1528
        %v1530 = vadd.f32 %v1510, %v1529
        %v1531 = vld [vmem:[%s293 + $0x70] sm:$0xff]
        %v1532 = vld [vmem:[%s302 + $0x70] sm:$0xff]
        %v1533 = vld [vmem:[%s311 + $0x20] sm:$0x1]
        %v1534 = vld [vmem:[%s320 + $0x20] sm:$0x1]
        %v1535 = vlaneseq
        %v1536 = vshrl.u32 %v1535, 7
        %v1537 = vsub.s32 0, %v1536
        %v1538 = vrot.slane %v1533, %v1537
        %v1539 = vmul.f32 %v1531, %v1538
        %v1540 = vlaneseq
        %v1541 = vshrl.u32 %v1540, 7
        %v1542 = vsub.s32 0, %v1541
        %v1543 = vrot.slane %v1534, %v1542
        %v1544 = vmul.f32 %v1532, %v1543
        %v1545 = vsub.f32 %v1539, %v1544
        %v1546 = vadd.f32 %v1526, %v1545
        %v1547 = vmul.f32 %v1531, %v1543
        %v1548 = vmul.f32 %v1532, %v1538
        %v1549 = vadd.f32 %v1547, %v1548
        %v1550 = vadd.f32 %v1530, %v1549
        %v1551 = vld [vmem:[%s293 + $0xa0] sm:$0xff]
        %v1552 = vld [vmem:[%s302 + $0xa0] sm:$0xff]
        %v1553 = vld [vmem:[%s311 + $0x23] sm:$0x1]
        %v1554 = vld [vmem:[%s320 + $0x23] sm:$0x1]
        %v1555 = vlaneseq
        %v1556 = vshrl.u32 %v1555, 7
        %v1557 = vsub.s32 0, %v1556
        %v1558 = vrot.slane %v1553, %v1557
        %v1559 = vmul.f32 %v1551, %v1558
        %v1560 = vlaneseq
        %v1561 = vshrl.u32 %v1560, 7
        %v1562 = vsub.s32 0, %v1561
        %v1563 = vrot.slane %v1554, %v1562
        %v1564 = vmul.f32 %v1552, %v1563
        %v1565 = vsub.f32 %v1559, %v1564
        %v1566 = vadd.f32 %v1546, %v1565
        %v1567 = vmul.f32 %v1551, %v1563
        %v1568 = vmul.f32 %v1552, %v1558
        %v1569 = vadd.f32 %v1567, %v1568
        %v1570 = vadd.f32 %v1550, %v1569
        %v1571 = vld [vmem:[%s293 + $0x18] sm:$0xff]
        %v1572 = vld [vmem:[%s302 + $0x18] sm:$0xff]
        %v1573 = vld [vmem:[%s311 + $0x26] sm:$0x1]
        %v1574 = vld [vmem:[%s320 + $0x26] sm:$0x1]
        %v1575 = vlaneseq
        %v1576 = vshrl.u32 %v1575, 7
        %v1577 = vsub.s32 0, %v1576
        %v1578 = vrot.slane %v1573, %v1577
        %v1579 = vmul.f32 %v1571, %v1578
        %v1580 = vlaneseq
        %v1581 = vshrl.u32 %v1580, 7
        %v1582 = vsub.s32 0, %v1581
        %v1583 = vrot.slane %v1574, %v1582
        %v1584 = vmul.f32 %v1572, %v1583
        %v1585 = vsub.f32 %v1579, %v1584
        %v1586 = vadd.f32 %v1566, %v1585
        %v1587 = vmul.f32 %v1571, %v1583
        %v1588 = vmul.f32 %v1572, %v1578
        %v1589 = vadd.f32 %v1587, %v1588
        %v1590 = vadd.f32 %v1570, %v1589
        %v1591 = vld [vmem:[%s293 + $0x48] sm:$0xff]
        %v1592 = vld [vmem:[%s302 + $0x48] sm:$0xff]
        %v1593 = vld [vmem:[%s311 + $0x29] sm:$0x1]
        %v1594 = vld [vmem:[%s320 + $0x29] sm:$0x1]
        %v1595 = vlaneseq
        %v1596 = vshrl.u32 %v1595, 7
        %v1597 = vsub.s32 0, %v1596
        %v1598 = vrot.slane %v1593, %v1597
        %v1599 = vmul.f32 %v1591, %v1598
        %v1600 = vlaneseq
        %v1601 = vshrl.u32 %v1600, 7
        %v1602 = vsub.s32 0, %v1601
        %v1603 = vrot.slane %v1594, %v1602
        %v1604 = vmul.f32 %v1592, %v1603
        %v1605 = vsub.f32 %v1599, %v1604
        %v1606 = vadd.f32 %v1586, %v1605
        %v1607 = vmul.f32 %v1591, %v1603
        %v1608 = vmul.f32 %v1592, %v1598
        %v1609 = vadd.f32 %v1607, %v1608
        %v1610 = vadd.f32 %v1590, %v1609
        %v1611 = vld [vmem:[%s293 + $0x78] sm:$0xff]
        %v1612 = vld [vmem:[%s302 + $0x78] sm:$0xff]
        %v1613 = vld [vmem:[%s311 + $0x2c] sm:$0x1]
        %v1614 = vld [vmem:[%s320 + $0x2c] sm:$0x1]
        %v1615 = vlaneseq
        %v1616 = vshrl.u32 %v1615, 7
        %v1617 = vsub.s32 0, %v1616
        %v1618 = vrot.slane %v1613, %v1617
        %v1619 = vmul.f32 %v1611, %v1618
        %v1620 = vlaneseq
        %v1621 = vshrl.u32 %v1620, 7
        %v1622 = vsub.s32 0, %v1621
        %v1623 = vrot.slane %v1614, %v1622
        %v1624 = vmul.f32 %v1612, %v1623
        %v1625 = vsub.f32 %v1619, %v1624
        %v1626 = vadd.f32 %v1606, %v1625
        %v1627 = vmul.f32 %v1611, %v1623
        %v1628 = vmul.f32 %v1612, %v1618
        %v1629 = vadd.f32 %v1627, %v1628
        %v1630 = vadd.f32 %v1610, %v1629
        %v1631 = vld [vmem:[%s293 + $0xa8] sm:$0xff]
        %v1632 = vld [vmem:[%s302 + $0xa8] sm:$0xff]
        %v1633 = vld [vmem:[%s311 + $0x2f] sm:$0x1]
        %v1634 = vld [vmem:[%s320 + $0x2f] sm:$0x1]
        %v1635 = vlaneseq
        %v1636 = vshrl.u32 %v1635, 7
        %v1637 = vsub.s32 0, %v1636
        %v1638 = vrot.slane %v1633, %v1637
        %v1639 = vmul.f32 %v1631, %v1638
        %v1640 = vlaneseq
        %v1641 = vshrl.u32 %v1640, 7
        %v1642 = vsub.s32 0, %v1641
        %v1643 = vrot.slane %v1634, %v1642
        %v1644 = vmul.f32 %v1632, %v1643
        %v1645 = vsub.f32 %v1639, %v1644
        %v1646 = vadd.f32 %v1626, %v1645
        %v1647 = vmul.f32 %v1631, %v1643
        %v1648 = vmul.f32 %v1632, %v1638
        %v1649 = vadd.f32 %v1647, %v1648
        %v1650 = vadd.f32 %v1630, %v1649
        %v1651 = vld [vmem:[%s293 + $0x20] sm:$0xff]
        %v1652 = vld [vmem:[%s302 + $0x20] sm:$0xff]
        %v1653 = vld [vmem:[%s311 + $0x32] sm:$0x1]
        %v1654 = vld [vmem:[%s320 + $0x32] sm:$0x1]
        %v1655 = vlaneseq
        %v1656 = vshrl.u32 %v1655, 7
        %v1657 = vsub.s32 0, %v1656
        %v1658 = vrot.slane %v1653, %v1657
        %v1659 = vmul.f32 %v1651, %v1658
        %v1660 = vlaneseq
        %v1661 = vshrl.u32 %v1660, 7
        %v1662 = vsub.s32 0, %v1661
        %v1663 = vrot.slane %v1654, %v1662
        %v1664 = vmul.f32 %v1652, %v1663
        %v1665 = vsub.f32 %v1659, %v1664
        %v1666 = vadd.f32 %v1646, %v1665
        %v1667 = vmul.f32 %v1651, %v1663
        %v1668 = vmul.f32 %v1652, %v1658
        %v1669 = vadd.f32 %v1667, %v1668
        %v1670 = vadd.f32 %v1650, %v1669
        %v1671 = vld [vmem:[%s293 + $0x50] sm:$0xff]
        %v1672 = vld [vmem:[%s302 + $0x50] sm:$0xff]
        %v1673 = vld [vmem:[%s311 + $0x35] sm:$0x1]
        %v1674 = vld [vmem:[%s320 + $0x35] sm:$0x1]
        %v1675 = vlaneseq
        %v1676 = vshrl.u32 %v1675, 7
        %v1677 = vsub.s32 0, %v1676
        %v1678 = vrot.slane %v1673, %v1677
        %v1679 = vmul.f32 %v1671, %v1678
        %v1680 = vlaneseq
        %v1681 = vshrl.u32 %v1680, 7
        %v1682 = vsub.s32 0, %v1681
        %v1683 = vrot.slane %v1674, %v1682
        %v1684 = vmul.f32 %v1672, %v1683
        %v1685 = vsub.f32 %v1679, %v1684
        %v1686 = vadd.f32 %v1666, %v1685
        %v1687 = vmul.f32 %v1671, %v1683
        %v1688 = vmul.f32 %v1672, %v1678
        %v1689 = vadd.f32 %v1687, %v1688
        %v1690 = vadd.f32 %v1670, %v1689
        %v1691 = vld [vmem:[%s293 + $0x80] sm:$0xff]
        %v1692 = vld [vmem:[%s302 + $0x80] sm:$0xff]
        %v1693 = vld [vmem:[%s311 + $0x38] sm:$0x1]
        %v1694 = vld [vmem:[%s320 + $0x38] sm:$0x1]
        %v1695 = vlaneseq
        %v1696 = vshrl.u32 %v1695, 7
        %v1697 = vsub.s32 0, %v1696
        %v1698 = vrot.slane %v1693, %v1697
        %v1699 = vmul.f32 %v1691, %v1698
        %v1700 = vlaneseq
        %v1701 = vshrl.u32 %v1700, 7
        %v1702 = vsub.s32 0, %v1701
        %v1703 = vrot.slane %v1694, %v1702
        %v1704 = vmul.f32 %v1692, %v1703
        %v1705 = vsub.f32 %v1699, %v1704
        %v1706 = vadd.f32 %v1686, %v1705
        %v1707 = vmul.f32 %v1691, %v1703
        %v1708 = vmul.f32 %v1692, %v1698
        %v1709 = vadd.f32 %v1707, %v1708
        %v1710 = vadd.f32 %v1690, %v1709
        %v1711 = vld [vmem:[%s293 + $0xb0] sm:$0xff]
        %v1712 = vld [vmem:[%s302 + $0xb0] sm:$0xff]
        %v1713 = vld [vmem:[%s311 + $0x3b] sm:$0x1]
        %v1714 = vld [vmem:[%s320 + $0x3b] sm:$0x1]
        %v1715 = vlaneseq
        %v1716 = vshrl.u32 %v1715, 7
        %v1717 = vsub.s32 0, %v1716
        %v1718 = vrot.slane %v1713, %v1717
        %v1719 = vmul.f32 %v1711, %v1718
        %v1720 = vlaneseq
        %v1721 = vshrl.u32 %v1720, 7
        %v1722 = vsub.s32 0, %v1721
        %v1723 = vrot.slane %v1714, %v1722
        %v1724 = vmul.f32 %v1712, %v1723
        %v1725 = vsub.f32 %v1719, %v1724
        %v1726 = vadd.f32 %v1706, %v1725
        %v1727 = vmul.f32 %v1711, %v1723
        %v1728 = vmul.f32 %v1712, %v1718
        %v1729 = vadd.f32 %v1727, %v1728
        %v1730 = vadd.f32 %v1710, %v1729
        %v1731 = vld [vmem:[%s293 + $0x28] sm:$0xff]
        %v1732 = vld [vmem:[%s302 + $0x28] sm:$0xff]
        %v1733 = vld [vmem:[%s311 + $0x3e] sm:$0x1]
        %v1734 = vld [vmem:[%s320 + $0x3e] sm:$0x1]
        %v1735 = vlaneseq
        %v1736 = vshrl.u32 %v1735, 7
        %v1737 = vsub.s32 0, %v1736
        %v1738 = vrot.slane %v1733, %v1737
        %v1739 = vmul.f32 %v1731, %v1738
        %v1740 = vlaneseq
        %v1741 = vshrl.u32 %v1740, 7
        %v1742 = vsub.s32 0, %v1741
        %v1743 = vrot.slane %v1734, %v1742
        %v1744 = vmul.f32 %v1732, %v1743
        %v1745 = vsub.f32 %v1739, %v1744
        %v1746 = vadd.f32 %v1726, %v1745
        %v1747 = vmul.f32 %v1731, %v1743
        %v1748 = vmul.f32 %v1732, %v1738
        %v1749 = vadd.f32 %v1747, %v1748
        %v1750 = vadd.f32 %v1730, %v1749
        %v1751 = vld [vmem:[%s293 + $0x58] sm:$0xff]
        %v1752 = vld [vmem:[%s302 + $0x58] sm:$0xff]
        %v1753 = vld [vmem:[%s311 + $0x41] sm:$0x1]
        %v1754 = vld [vmem:[%s320 + $0x41] sm:$0x1]
        %v1755 = vlaneseq
        %v1756 = vshrl.u32 %v1755, 7
        %v1757 = vsub.s32 0, %v1756
        %v1758 = vrot.slane %v1753, %v1757
        %v1759 = vmul.f32 %v1751, %v1758
        %v1760 = vlaneseq
        %v1761 = vshrl.u32 %v1760, 7
        %v1762 = vsub.s32 0, %v1761
        %v1763 = vrot.slane %v1754, %v1762
        %v1764 = vmul.f32 %v1752, %v1763
        %v1765 = vsub.f32 %v1759, %v1764
        %v1766 = vadd.f32 %v1746, %v1765
        %v1767 = vmul.f32 %v1751, %v1763
        %v1768 = vmul.f32 %v1752, %v1758
        %v1769 = vadd.f32 %v1767, %v1768
        %v1770 = vadd.f32 %v1750, %v1769
        %v1771 = vld [vmem:[%s293 + $0x88] sm:$0xff]
        %v1772 = vld [vmem:[%s302 + $0x88] sm:$0xff]
        %v1773 = vld [vmem:[%s311 + $0x44] sm:$0x1]
        %v1774 = vld [vmem:[%s320 + $0x44] sm:$0x1]
        %v1775 = vlaneseq
        %v1776 = vshrl.u32 %v1775, 7
        %v1777 = vsub.s32 0, %v1776
        %v1778 = vrot.slane %v1773, %v1777
        %v1779 = vmul.f32 %v1771, %v1778
        %v1780 = vlaneseq
        %v1781 = vshrl.u32 %v1780, 7
        %v1782 = vsub.s32 0, %v1781
        %v1783 = vrot.slane %v1774, %v1782
        %v1784 = vmul.f32 %v1772, %v1783
        %v1785 = vsub.f32 %v1779, %v1784
        %v1786 = vadd.f32 %v1766, %v1785
        %v1787 = vmul.f32 %v1771, %v1783
        %v1788 = vmul.f32 %v1772, %v1778
        %v1789 = vadd.f32 %v1787, %v1788
        %v1790 = vadd.f32 %v1770, %v1789
        %v1791 = vld [vmem:[%s293 + $0xb8] sm:$0xff]
        %v1792 = vld [vmem:[%s302 + $0xb8] sm:$0xff]
        %v1793 = vld [vmem:[%s311 + $0x47] sm:$0x1]
        %v1794 = vld [vmem:[%s320 + $0x47] sm:$0x1]
        %v1795 = vlaneseq
        %v1796 = vshrl.u32 %v1795, 7
        %v1797 = vsub.s32 0, %v1796
        %v1798 = vrot.slane %v1793, %v1797
        %v1799 = vmul.f32 %v1791, %v1798
        %v1800 = vlaneseq
        %v1801 = vshrl.u32 %v1800, 7
        %v1802 = vsub.s32 0, %v1801
        %v1803 = vrot.slane %v1794, %v1802
        %v1804 = vmul.f32 %v1792, %v1803
        %v1805 = vsub.f32 %v1799, %v1804
        %v1806 = vadd.f32 %v1786, %v1805
        %v1807 = vmul.f32 %v1791, %v1803
        %v1808 = vmul.f32 %v1792, %v1798
        %v1809 = vadd.f32 %v1807, %v1808
        %v1810 = vadd.f32 %v1790, %v1809
        %1811 = vst [vmem:[%s359 + $0x10] sm:$0xff] %v1806
        %1812 = vst [vmem:[%s366 + $0x10] sm:$0xff] %v1810
        %s1813 = sand.u32 %s144, 1
        %s1814 = scalar_lea.sflag [#allocation4], %s1813
        %s1815 = sand.u32 %s144, 1
        %s1816 = smul.addr %s1815, 24
        %s1817 = scalar_lea.vmem [#allocation10], %s1816
        %s1818 = sand.u32 %s170, 1
        %s1819 = scalar_lea.sflag [#allocation12], %s1818
        %s1820 = sand.u32 %s170, 1
        %s1821 = smul.addr %s1820, 24
        %s1822 = scalar_lea.vmem [#allocation11], %s1821
        // Predicated region
        $region53: #{tpu_custom_call.1} parent=35 // pred_check
          %p1823 = pneg %p154
        $region54: #{tpu_custom_call.1} parent=35 // pred_check_branch
          %1825 = sbr.rel (%p1823) target = $region56
        $region55: #{tpu_custom_call.1} parent=35 // pred_region
          %s1827 = ssub.s32 384, 384
          %1828 = vsyncadd %s1814, %s1827
          %s1829 = smul.addr %s32, 128
          %s1830 = scalar_lea.hbm %s4, %s1829
          %s1831 = sshll.u32 %s1817, 4
          %s1832 = int_to_ptr.vmem [resolvable:$true] %s1831
          %1837 = dma.vmem_to_hbm [thread:$0]  %s1832, 384, %s1830, %s1814, 128, 256, 8
        $region56: #{tpu_custom_call.1} parent=35 // pred_fallthru
          _
        // Predicated region
        $region57: #{tpu_custom_call.1} parent=35 // pred_check
          %p1838 = pneg %p180
        $region58: #{tpu_custom_call.1} parent=35 // pred_check_branch
          %1840 = sbr.rel (%p1838) target = $region60
        $region59: #{tpu_custom_call.1} parent=35 // pred_region
          %s1842 = ssub.s32 384, 384
          %1843 = vsyncadd %s1819, %s1842
          %s1844 = smul.addr %s32, 128
          %s1845 = scalar_lea.hbm %s5, %s1844
          %s1846 = sshll.u32 %s1822, 4
          %s1847 = int_to_ptr.vmem [resolvable:$true] %s1846
          %1852 = dma.vmem_to_hbm [thread:$0]  %s1847, 384, %s1845, %s1819, 128, 256, 8
        $region60: #{tpu_custom_call.1} parent=35 // pred_fallthru
          _
      $region36: #{tpu_custom_call.1} parent=5 // pred_fallthru
        _
      %p1853 = scmp.le.s32.totalorder 2, %s27
      // Predicated region
      $region61: #{tpu_custom_call.1} parent=5 // pred_check
        %p1854 = pneg %p1853
      $region62: #{tpu_custom_call.1} parent=5 // pred_check_branch
        %1856 = sbr.rel (%p1854) target = $region64
      $region63: #{tpu_custom_call.1} parent=5 // pred_region
        %s1857 = ssub.s32 %s27, 2
        // Predicated region
        $region65: #{tpu_custom_call.1} parent=63 // pred_check
          %p1858 = pneg %p160
        $region66: #{tpu_custom_call.1} parent=63 // pred_check_branch
          %1860 = sbr.rel (%p1858) target = $region68
        $region67: #{tpu_custom_call.1} parent=63 // pred_region
          %s1861 = sand.u32 %s145, 1
          %s1862 = scalar_lea.sflag [#allocation4], %s1861
          %s1863 = sand.u32 %s145, 1
          %s1864 = smul.addr %s1863, 24
          %s1865 = scalar_lea.vmem [#allocation10], %s1864
          %1866 = dma.done %s1862, 384
        $region68: #{tpu_custom_call.1} parent=63 // pred_fallthru
          _
        // Predicated region
        $region69: #{tpu_custom_call.1} parent=63 // pred_check
          %p1867 = pneg %p186
        $region70: #{tpu_custom_call.1} parent=63 // pred_check_branch
          %1869 = sbr.rel (%p1867) target = $region72
        $region71: #{tpu_custom_call.1} parent=63 // pred_region
          %s1870 = sand.u32 %s171, 1
          %s1871 = scalar_lea.sflag [#allocation12], %s1870
          %s1872 = sand.u32 %s171, 1
          %s1873 = smul.addr %s1872, 24
          %s1874 = scalar_lea.vmem [#allocation11], %s1873
          %1875 = dma.done %s1871, 384
        $region72: #{tpu_custom_call.1} parent=63 // pred_fallthru
          _
      $region64: #{tpu_custom_call.1} parent=5 // pred_fallthru
        _
    $region6: #{tpu_custom_call.1} parent=1 // loop_footer
      %s31 = sadd.s32 1, %s27
    $region7: #{tpu_custom_call.1} parent=1 // loop_footer_branch
      %26 = sbr.rel target = $region3
    $region8: #{tpu_custom_call.1} parent=1 // loop_exit
      _
    %1876 = vsyncpa [#allocation3], 1
    %s1877 = scalar_lea.sflag [#allocation3], 1
    %1878 = vsyncpa %s1877, 1
    %1879 = vsyncpa [#allocation6], 1
    %s1880 = scalar_lea.sflag [#allocation6], 1
    %1881 = vsyncpa %s1880, 1
    %1882 = vsyncpa [#allocation9], 1
    %s1883 = scalar_lea.sflag [#allocation9], 1
    %1884 = vsyncpa %s1883, 1
    %1885 = vsyncpa [#allocation4], 1
    %s1886 = scalar_lea.sflag [#allocation4], 1
    %1887 = vsyncpa %s1886, 1
    %1888 = vsyncpa [#allocation12], 1
    %s1889 = scalar_lea.sflag [#allocation12], 1
    %1890 = vsyncpa %s1889, 1

</llo_original>
